<compile_context>
chip_gen: v7x
topology: tpu7x:2x2x1
jax: 0.10.0
libtpu: 0.0.40
codegen_flags: <defaults>
</compile_context>

<pallas_src>
import math
from functools import partial

import jax
import jax.numpy as jnp
from jax.experimental import pallas as pl
from jax.experimental.pallas import tpu as pltpu

_EPS = 1e-5                      # torch.nn.LayerNorm default eps
LANE = 128                       # TPU lane width; feature dims padded to this
TM_MAX = 256                     # dst-node tile rows (256 keeps >=2 tiles for megacore sooner)
TK_MAX = 512                     # reduction tile over src nodes / edges
VMEM_LIMIT = 32 * 1024 * 1024    # scoped-VMEM limit; safe on v5e/v6e/v7x (64 MiB phys on v7x)


def _round_up(x, m):
    return (x + m - 1) // m * m


def _tile(n, cap):
    """Power-of-two tile in {128, 256, 512} adapted to the problem size."""
    t = LANE
    while t < cap and t < n:
        t *= 2
    return t


def _pad2(a, rows, cols):
    return jnp.pad(a, ((0, rows - a.shape[0]), (0, cols - a.shape[1])))


def _layernorm_masked(x, gamma, beta, width):
    # Padded lanes of x are exactly zero, so sums over all lanes equal sums
    # over the true feature width; divide by the true width for correct stats.
    inv_w = 1.0 / width
    s = jnp.sum(x, axis=-1, keepdims=True)
    ss = jnp.sum(x * x, axis=-1, keepdims=True)
    mu = s * inv_w
    var = ss * inv_w - mu * mu
    return (x - mu) * jax.lax.rsqrt(var + _EPS) * gamma + beta


# ----------------------------------------------------------------------------
# Encode kernels: node_emb = h @ Wn ; edge_emb = LN(edge_attr @ We)
# ----------------------------------------------------------------------------
def node_encode_kernel(h_ref, wn_ref, out_ref):
    out_ref[...] = jnp.dot(h_ref[...], wn_ref[...],
                           preferred_element_type=jnp.float32).astype(out_ref.dtype)


def node_encode(h_pad, wn_pad, *, tr):
    n_pad, fp = h_pad.shape
    hp = wn_pad.shape[1]
    return pl.pallas_call(
        node_encode_kernel,
        out_shape=jax.ShapeDtypeStruct((n_pad, hp), jnp.bfloat16),
        grid=(n_pad // tr,),
        in_specs=[pl.BlockSpec((tr, fp), lambda i: (i, 0)),
                  pl.BlockSpec((fp, hp), lambda i: (0, 0))],
        out_specs=pl.BlockSpec((tr, hp), lambda i: (i, 0)),
        compiler_params=pltpu.CompilerParams(
            dimension_semantics=("parallel",), vmem_limit_bytes=VMEM_LIMIT),
    )(h_pad, wn_pad)


def edge_encode_kernel(ea_ref, we_ref, eg_ref, eb_ref, out_ref, *, h_true):
    raw = jnp.dot(ea_ref[...], we_ref[...], preferred_element_type=jnp.float32)
    out_ref[...] = _layernorm_masked(raw, eg_ref[...], eb_ref[...],
                                     h_true).astype(out_ref.dtype)


def edge_encode(ea_pad, we_pad, eg_pad, eb_pad, *, hidden, tr):
    e_pad, cp = ea_pad.shape
    hp = we_pad.shape[1]
    kernel = partial(edge_encode_kernel, h_true=float(hidden))
    return pl.pallas_call(
        kernel,
        out_shape=jax.ShapeDtypeStruct((e_pad, hp), jnp.bfloat16),
        grid=(e_pad // tr,),
        in_specs=[pl.BlockSpec((tr, cp), lambda i: (i, 0)),
                  pl.BlockSpec((cp, hp), lambda i: (0, 0)),
                  pl.BlockSpec((1, hp), lambda i: (0, 0)),
                  pl.BlockSpec((1, hp), lambda i: (0, 0))],
        out_specs=pl.BlockSpec((tr, hp), lambda i: (i, 0)),
        compiler_params=pltpu.CompilerParams(
            dimension_semantics=("parallel",), vmem_limit_bytes=VMEM_LIMIT),
    )(ea_pad, we_pad, eg_pad, eb_pad)


# ----------------------------------------------------------------------------
# Fused GCNEConv layer (concat=False) + trailing tanh, phase-gated reduction:
#   phase A (k <  kA): acc += A_hat[dst, src_tile] @ node_emb[src_tile]
#   phase B (k >= kA): acc += S    [dst, edge_tile] @ edge_emb[edge_tile]
#   epilogue:          tanh( LN( acc + w_self*edge_norm_beta + bias ) )
# ----------------------------------------------------------------------------
def gcne_layer_kernel(a_ref, s_ref, nz_ref, ez_ref, wself_ref, eb_ref,
                      bias_ref, og_ref, ob_ref, out_ref, acc_ref,
                      *, k_a, h_true):
    k = pl.program_id(1)

    @pl.when(k == 0)
    def _():
        acc_ref[...] = jnp.zeros_like(acc_ref)

    @pl.when(k < k_a)
    def _():
        acc_ref[...] += jnp.dot(a_ref[...], nz_ref[...],
                                preferred_element_type=jnp.float32)

    @pl.when(k >= k_a)
    def _():
        acc_ref[...] += jnp.dot(s_ref[...], ez_ref[...],
                                preferred_element_type=jnp.float32)

    @pl.when(k == pl.num_programs(1) - 1)
    def _():
        # self-loop edge message is w_self * LN(0 @ We) = w_self * beta
        agg = acc_ref[...] + wself_ref[...] * eb_ref[...] + bias_ref[...]
        out = _layernorm_masked(agg, og_ref[...], ob_ref[...], h_true)
        out_ref[...] = jnp.tanh(out).astype(out_ref.dtype)


def gcne_layer(a_hat, s_mat, node_emb, edge_emb, w_self, layer_p, *, hidden,
               tm, tkn, tke):
    n_pad = a_hat.shape[0]
    e_pad = s_mat.shape[1]
    hp = node_emb.shape[1]
    k_a = a_hat.shape[1] // tkn
    k_e = e_pad // tke
    kernel = partial(gcne_layer_kernel, k_a=k_a, h_true=float(hidden))
    return pl.pallas_call(
        kernel,
        out_shape=jax.ShapeDtypeStruct((n_pad, hp), jnp.bfloat16),
        grid=(n_pad // tm, k_a + k_e),
        in_specs=[
            # A_hat tile: index clamped to kA-1 in phase B -> no extra DMA.
            pl.BlockSpec((tm, tkn), lambda i, k: (i, jnp.minimum(k, k_a - 1))),
            # S tile: index clamped to 0 in phase A.
            pl.BlockSpec((tm, tke), lambda i, k: (i, jnp.maximum(k - k_a, 0))),
            # node_emb tile (phase A operand, clamped in phase B).
            pl.BlockSpec((tkn, hp), lambda i, k: (jnp.minimum(k, k_a - 1), 0)),
            # edge_emb tile (phase B operand, clamped in phase A).
            pl.BlockSpec((tke, hp), lambda i, k: (jnp.maximum(k - k_a, 0), 0)),
            pl.BlockSpec((tm, 1), lambda i, k: (i, 0)),    # w_self column
            pl.BlockSpec((1, hp), lambda i, k: (0, 0)),    # edge_norm beta
            pl.BlockSpec((1, hp), lambda i, k: (0, 0)),    # bias
            pl.BlockSpec((1, hp), lambda i, k: (0, 0)),    # output_norm gamma
            pl.BlockSpec((1, hp), lambda i, k: (0, 0)),    # output_norm beta
        ],
        out_specs=pl.BlockSpec((tm, hp), lambda i, k: (i, 0)),
        scratch_shapes=[pltpu.VMEM((tm, hp), jnp.float32)],
        compiler_params=pltpu.CompilerParams(
            dimension_semantics=("parallel", "arbitrary"),
            vmem_limit_bytes=VMEM_LIMIT),
    )(a_hat, s_mat, node_emb, edge_emb, w_self,
      layer_p["eb"], layer_p["bias"], layer_p["og"], layer_p["ob"])


# ----------------------------------------------------------------------------
# Global self-attention pooling over interface nodes + MLP head.
# Membership mask built in-kernel from a (1, Ni) int32 graph-id row (pad = -1).
# ----------------------------------------------------------------------------
def pool_head_kernel(xi_ref, gid_ref, wa_ref, w1_ref, b1_ref, w2_ref, b2_ref,
                     out_ref):
    xi = xi_ref[...].astype(jnp.float32)                       # (Ni, Hp)
    # gate scores, contraction on the feature (last) dim -> (1, Ni)
    scores = jnp.einsum('gh,nh->gn', wa_ref[...], xi,
                        preferred_element_type=jnp.float32)
    g_pad = out_ref.shape[0]
    ni_pad = xi.shape[0]
    gidx = jax.lax.broadcasted_iota(jnp.int32, (g_pad, ni_pad), 0)
    mask = (gid_ref[...] == gidx).astype(jnp.float32)          # (G, Ni) 0/1
    logits = jnp.where(mask > 0, scores, -1e30)                # (G, Ni)
    mx = jnp.max(logits, axis=-1, keepdims=True)
    ex = jnp.exp(logits - mx) * mask
    denom = jnp.sum(ex, axis=-1, keepdims=True)
    # EUP reciprocal; +eps guards graphs with zero interface nodes (0/0).
    att = ex * pl.reciprocal(denom + 1e-20, approx=True)
    pooled = jnp.dot(att, xi, preferred_element_type=jnp.float32)     # (G, Hp)
    # lin1 -> tanh -> (dropout is identity in eval) -> lin2 -> sigmoid
    h1 = jnp.tanh(jnp.dot(pooled, w1_ref[...],
                          preferred_element_type=jnp.float32) + b1_ref[...])
    logit = jnp.dot(h1, w2_ref[...],
                    preferred_element_type=jnp.float32) + b2_ref[...]
    out_ref[...] = jax.nn.sigmoid(logit)
    # TODO(synk): at production Ni, tile the interface-node axis with an
    # online-softmax (flash-style) accumulator instead of one ungridded call.


def pool_head(xi_pad, gid_row, head_p, g_pad):
    vmem = pl.BlockSpec(memory_space=pltpu.MemorySpace.VMEM)
    return pl.pallas_call(
        pool_head_kernel,
        out_shape=jax.ShapeDtypeStruct((g_pad, 1), jnp.float32),
        in_specs=[vmem] * 7,
        out_specs=vmem,
        compiler_params=pltpu.CompilerParams(vmem_limit_bytes=VMEM_LIMIT),
    )(xi_pad, gid_row, head_p["wa"], head_p["w1"], head_p["b1"],
      head_p["w2"], head_p["b2"])


# ----------------------------------------------------------------------------
# Glue: gcn_norm + self-loop handling + densification (plain JAX, built ONCE,
# stored in bf16 and reused by every layer; no operator concat).
# ----------------------------------------------------------------------------
def build_graph_operators(edge_index, num_nodes, n_pad, e_pad):
    row, col = edge_index[0], edge_index[1]
    num_edges = row.shape[0]
    w = jnp.ones((num_edges,), jnp.float32)
    # add_remaining_self_loops (graph is generated loop-free -> all N appended,
    # fill value 1.0); deg computed at col including self-loop weights.
    deg = jnp.zeros((num_nodes,), jnp.float32).at[col].add(w) + 1.0
    dinv = jnp.where(deg > 0, jax.lax.rsqrt(deg), 0.0)
    w_norm = dinv[row] * w * dinv[col]          # real edges
    w_self = dinv * dinv                        # self loops
    # A_hat[dst, src] with self-loop weights on the diagonal.
    a_hat = jnp.zeros((n_pad, n_pad), jnp.float32).at[col, row].add(w_norm)
    idx = jnp.arange(num_nodes)
    a_hat = a_hat.at[idx, idx].add(w_self)
    # S[dst, e] over REAL edges only (no zero self-loop columns).
    s = jnp.zeros((n_pad, e_pad), jnp.float32).at[col, jnp.arange(num_edges)].set(w_norm)
    w_self_col = jnp.zeros((n_pad, 1), jnp.float32).at[:num_nodes, 0].set(w_self)
    return a_hat.astype(jnp.bfloat16), s.astype(jnp.bfloat16), w_self_col


@partial(jax.jit, static_argnums=(6, 7))
def forward(pparams, x, edge_index, edge_attr, interface_pos, batch,
            graph_num, hidden):
    n, fin = x.shape
    e, ec = edge_attr.shape
    hp = _round_up(hidden, LANE)
    fp = _round_up(fin, LANE)
    cp = _round_up(ec, LANE)

    tm = _tile(n, TM_MAX)        # dst tile (also node-encode row tile)
    tkn = _tile(n, TK_MAX)       # src-node reduction tile (multiple of tm)
    tke = _tile(e, TK_MAX)       # edge reduction tile (also edge-encode row tile)
    n_pad = _round_up(n, max(tm, tkn))
    e_pad = _round_up(e, tke)

    a_hat, s_mat, w_self = build_graph_operators(edge_index, n, n_pad, e_pad)

    ea_pad = jnp.zeros((e_pad, cp), jnp.bfloat16).at[:e, :ec].set(
        edge_attr.astype(jnp.bfloat16))
    h = jnp.zeros((n_pad, fp), jnp.bfloat16).at[:n, :fin].set(
        x.astype(jnp.bfloat16))

    for lp in pparams["convs"]:
        node_emb = node_encode(h, lp["wn"], tr=tm)                       # (n_pad, hp)
        edge_emb = edge_encode(ea_pad, lp["we"], lp["eg"], lp["eb"],
                               hidden=hidden, tr=tke)                    # (e_pad, hp)
        h = gcne_layer(a_hat, s_mat, node_emb, edge_emb, w_self, lp,
                       hidden=hidden, tm=tm, tkn=tkn, tke=tke)           # (n_pad, hp)

    # global self-attention over interface nodes
    ni = interface_pos.shape[0]
    ni_pad = _round_up(ni, LANE)
    g_pad = _round_up(graph_num, 8)
    xi = h[interface_pos]                                                # (ni, hp)
    xi_pad = jnp.zeros((ni_pad, hp), h.dtype).at[:ni].set(xi)
    gb = batch[interface_pos].astype(jnp.int32)
    gid_row = jnp.full((1, ni_pad), -1, jnp.int32).at[0, :ni].set(gb)

    y = pool_head(xi_pad, gid_row, pparams["head"], g_pad)               # (g_pad, 1)
    return y[:graph_num]


# ----------------------------------------------------------------------------
# Pure-JAX f32 reference (same math, unpadded) for a correctness check.
# ----------------------------------------------------------------------------
def reference_forward(params, x, edge_index, edge_attr, interface_pos, batch,
                      graph_num):
    n = x.shape[0]
    row, col = edge_index[0], edge_index[1]
    w = jnp.ones((row.shape[0],), jnp.float32)
    deg = jnp.zeros((n,), jnp.float32).at[col].add(w) + 1.0
    dinv = jax.lax.rsqrt(deg)
    w_norm = dinv[row] * dinv[col]
    w_self = dinv * dinv

    def ln(v, g, b):
        mu = jnp.mean(v, -1, keepdims=True)
        var = jnp.mean((v - mu) ** 2, -1, keepdims=True)
        return (v - mu) * jax.lax.rsqrt(var + _EPS) * g + b

    h = x
    for p in params["convs"]:
        node_emb = h @ p["wn"]
        edge_emb = ln(edge_attr @ p["we"], p["eg"], p["eb"])
        msg = w_norm[:, None] * (node_emb[row] + edge_emb)
        agg = jnp.zeros((n, node_emb.shape[1]), jnp.float32).at[col].add(msg)
        agg = agg + w_self[:, None] * (node_emb + p["eb"])
        h = jnp.tanh(ln(agg + p["bias"], p["og"], p["ob"]))

    xi = h[interface_pos]
    gb = batch[interface_pos]
    hp = params["head"]
    scores = (xi @ hp["wa"].T)[:, 0]
    member = gb[None, :] == jnp.arange(graph_num)[:, None]
    logits = jnp.where(member, scores[None, :], -jnp.inf)
    att = jax.nn.softmax(logits, axis=-1)
    pooled = att @ xi
    h1 = jnp.tanh(pooled @ hp["w1"] + hp["b1"])
    return jax.nn.sigmoid(h1 @ hp["w2"] + hp["b2"])


# ----------------------------------------------------------------------------
# Parameters: true shapes for the reference, padded/bf16 copies for kernels.
# ----------------------------------------------------------------------------
def make_params(key, num_node_features, num_edge_attr, hidden, num_layers):
    convs = []
    fin = num_node_features
    for _ in range(num_layers):
        key, k1, k2, k3, k4, k5, k6, k7 = jax.random.split(key, 8)
        convs.append({
            "wn": 0.1 * jax.random.normal(k1, (fin, hidden), jnp.float32),
            "we": 0.1 * jax.random.normal(k2, (num_edge_attr, hidden), jnp.float32),
            "eg": 1.0 + 0.1 * jax.random.normal(k3, (1, hidden), jnp.float32),
            "eb": 0.1 * jax.random.normal(k4, (1, hidden), jnp.float32),
            "bias": 0.1 * jax.random.normal(k5, (1, hidden), jnp.float32),
            "og": 1.0 + 0.1 * jax.random.normal(k6, (1, hidden), jnp.float32),
            "ob": 0.1 * jax.random.normal(k7, (1, hidden), jnp.float32),
        })
        fin = hidden
    h2 = int(hidden * 0.5)
    key, ka, k3, k4, k5, k6 = jax.random.split(key, 6)
    head = {
        "wa": 0.1 * jax.random.normal(ka, (1, hidden), jnp.float32),
        "w1": 0.1 * jax.random.normal(k3, (hidden, h2), jnp.float32),
        "b1": 0.1 * jax.random.normal(k4, (1, h2), jnp.float32),
        "w2": 0.1 * jax.random.normal(k5, (h2, 1), jnp.float32),
        "b2": 0.1 * jax.random.normal(k6, (1, 1), jnp.float32),
    }
    return {"convs": convs, "head": head}


def pad_params(params, hidden):
    hp = _round_up(hidden, LANE)
    convs = []
    for p in params["convs"]:
        fin = p["wn"].shape[0]
        ec = p["we"].shape[0]
        fp = _round_up(fin, LANE)
        cp = _round_up(ec, LANE)
        convs.append({
            "wn": _pad2(p["wn"], fp, hp).astype(jnp.bfloat16),
            "we": _pad2(p["we"], cp, hp).astype(jnp.bfloat16),
            "eg": _pad2(p["eg"], 1, hp),
            "eb": _pad2(p["eb"], 1, hp),
            "bias": _pad2(p["bias"], 1, hp),
            "og": _pad2(p["og"], 1, hp),
            "ob": _pad2(p["ob"], 1, hp),
        })
    hpp = params["head"]
    h2 = hpp["w1"].shape[1]
    h2p = _round_up(h2, LANE)
    head = {
        "wa": _pad2(hpp["wa"], 1, hp),
        "w1": _pad2(hpp["w1"], hp, h2p),
        "b1": _pad2(hpp["b1"], 1, h2p),
        "w2": _pad2(hpp["w2"], h2p, 1),
        "b2": hpp["b2"],
    }
    return {"convs": convs, "head": head}


if __name__ == "__main__":
    # small shapes consistent with the module
    num_node_features = 16
    num_edge_attr = 8
    hidden = 32
    num_layers = 2
    graph_num = 2
    nodes_per_graph = 16
    N = graph_num * nodes_per_graph
    E = 64

    key = jax.random.PRNGKey(0)
    kx, ke, kr, ko, kp = jax.random.split(key, 5)

    x = jax.random.normal(kx, (N, num_node_features), jnp.float32)
    edge_attr = jax.random.normal(ke, (E, num_edge_attr), jnp.float32)

    # loop-free edges, kept within each graph
    src = jax.random.randint(kr, (E,), 0, N)
    off = jax.random.randint(ko, (E,), 1, nodes_per_graph)
    dst = ((src % nodes_per_graph + off) % nodes_per_graph
           + (src // nodes_per_graph) * nodes_per_graph)
    edge_index = jnp.stack([src, dst], axis=0).astype(jnp.int32)

    batch = jnp.repeat(jnp.arange(graph_num, dtype=jnp.int32), nodes_per_graph)
    interface_pos = jnp.concatenate(
        [jnp.arange(0, 8, dtype=jnp.int32), jnp.arange(16, 24, dtype=jnp.int32)])

    params = make_params(kp, num_node_features, num_edge_attr, hidden, num_layers)
    pparams = pad_params(params, hidden)

    y = forward(pparams, x, edge_index, edge_attr, interface_pos, batch,
                graph_num, hidden)
    y = jax.block_until_ready(y)

    y_ref = reference_forward(params, x, edge_index, edge_attr, interface_pos,
                              batch, graph_num)

    assert y.shape == (graph_num, 1)
    assert bool(jnp.all(jnp.isfinite(y)))
    assert bool(jnp.all((y >= 0.0) & (y <= 1.0)))
    max_diff = float(jnp.max(jnp.abs(y - y_ref)))
    assert max_diff < 0.1, f"kernel vs reference mismatch: {max_diff}"
    print("KERNEL_OK")
</pallas_src>

<mosaic_0001>
module attributes {stable_mosaic.version = 11 : i64} {
  func.func private @main(%arg0: i32) attributes {dimension_semantics = [#tpu.dimension_semantics<core_parallel>], iteration_bounds = array<i64: 2>, tpu.core_type = #tpu.core_type<sc_scalar_subcore>, window_params = []} {
    return
  }
}

module attributes {stable_mosaic.version = 11 : i64} {
  func.func private @main(%arg0: i32) attributes {dimension_semantics = [#tpu.dimension_semantics<core_parallel>], iteration_bounds = array<i64: 2>, tpu.core_type = #tpu.core_type<sc_scalar_subcore>, window_params = []} {
    return
  }
}

module attributes {stable_mosaic.version = 11 : i64} {
  func.func @node_encode_kernel(%arg0: i32, %arg1: memref<128x128xbf16, #tpu.memory_space<vmem>>, %arg2: memref<128x128xbf16, #tpu.memory_space<vmem>>, %arg3: memref<128x128xbf16, #tpu.memory_space<vmem>>) attributes {dimension_semantics = [#tpu.dimension_semantics<parallel>], iteration_bounds = array<i64: 1>, scalar_prefetch = 0 : i64, scratch_operands = 0 : i64, tpu.core_type = #tpu.core_type<tc>, window_params = [{transform_indices = @transform_0, window_bounds = array<i64: 128, 128>}, {pipeline_mode = #tpu.pipeline_mode<synchronous>, transform_indices = @transform_1, window_bounds = array<i64: 128, 128>}, {transform_indices = @transform_2, window_bounds = array<i64: 128, 128>}]} {
    %c0 = arith.constant 0 : index
    %c0_0 = arith.constant 0 : index
    %0 = vector.load %arg1[%c0, %c0_0] : memref<128x128xbf16, #tpu.memory_space<vmem>>, vector<128x128xbf16>
    %c0_1 = arith.constant 0 : index
    %c0_2 = arith.constant 0 : index
    %1 = vector.load %arg2[%c0_1, %c0_2] : memref<128x128xbf16, #tpu.memory_space<vmem>>, vector<128x128xbf16>
    %cst = arith.constant dense<0.000000e+00> : vector<128x128xf32>
    %2 = tpu.matmul %0, %1, %cst {dimension_numbers = #tpu.dot_dimension_numbers<[1], [0], [0], [1], [0, 0, 1, 1], [], []>} : vector<128x128xbf16>, vector<128x128xbf16>, vector<128x128xf32> -> vector<128x128xf32>
    %3 = arith.truncf %2 : vector<128x128xf32> to vector<128x128xbf16>
    %c0_3 = arith.constant 0 : index
    %c0_4 = arith.constant 0 : index
    %4 = vector.load %arg3[%c0_3, %c0_4] : memref<128x128xbf16, #tpu.memory_space<vmem>>, vector<128x128xbf16>
    tpu.vector_store %arg3[%c0_3, %c0_4], %3 {strides = array<i32>} : memref<128x128xbf16, #tpu.memory_space<vmem>>, vector<128x128xbf16>,
    return
  }
  func.func @transform_0(%arg0: i32) -> (i32, i32) {
    %c0_i32 = arith.constant 0 : i32
    %c0_i32_0 = arith.constant 0 : i32
    return %arg0, %c0_i32 : i32, i32
  }
  func.func @transform_1(%arg0: i32) -> (i32, i32) {
    %c0_i32 = arith.constant 0 : i32
    %c0_i32_0 = arith.constant 0 : i32
    %c0_i32_1 = arith.constant 0 : i32
    return %c0_i32, %c0_i32_0 : i32, i32
  }
  func.func @transform_2(%arg0: i32) -> (i32, i32) {
    %c0_i32 = arith.constant 0 : i32
    %c0_i32_0 = arith.constant 0 : i32
    return %arg0, %c0_i32 : i32, i32
  }
}

module attributes {stable_mosaic.version = 11 : i64} {
  func.func @edge_encode_kernel(%arg0: i32, %arg1: memref<128x128xbf16, #tpu.memory_space<vmem>>, %arg2: memref<128x128xbf16, #tpu.memory_space<vmem>>, %arg3: memref<1x128xf32, #tpu.memory_space<vmem>>, %arg4: memref<1x128xf32, #tpu.memory_space<vmem>>, %arg5: memref<128x128xbf16, #tpu.memory_space<vmem>>) attributes {dimension_semantics = [#tpu.dimension_semantics<parallel>], iteration_bounds = array<i64: 1>, scalar_prefetch = 0 : i64, scratch_operands = 0 : i64, tpu.core_type = #tpu.core_type<tc>, window_params = [{transform_indices = @transform_0, window_bounds = array<i64: 128, 128>}, {pipeline_mode = #tpu.pipeline_mode<synchronous>, transform_indices = @transform_1, window_bounds = array<i64: 128, 128>}, {pipeline_mode = #tpu.pipeline_mode<synchronous>, transform_indices = @transform_2, window_bounds = array<i64: 1, 128>}, {pipeline_mode = #tpu.pipeline_mode<synchronous>, transform_indices = @transform_3, window_bounds = array<i64: 1, 128>}, {transform_indices = @transform_4, window_bounds = array<i64: 128, 128>}]} {
    %c0 = arith.constant 0 : index
    %c0_0 = arith.constant 0 : index
    %0 = vector.load %arg1[%c0, %c0_0] : memref<128x128xbf16, #tpu.memory_space<vmem>>, vector<128x128xbf16>
    %c0_1 = arith.constant 0 : index
    %c0_2 = arith.constant 0 : index
    %1 = vector.load %arg2[%c0_1, %c0_2] : memref<128x128xbf16, #tpu.memory_space<vmem>>, vector<128x128xbf16>
    %cst = arith.constant dense<0.000000e+00> : vector<128x128xf32>
    %2 = tpu.matmul %0, %1, %cst {dimension_numbers = #tpu.dot_dimension_numbers<[1], [0], [0], [1], [0, 0, 1, 1], [], []>} : vector<128x128xbf16>, vector<128x128xbf16>, vector<128x128xf32> -> vector<128x128xf32>
    %c0_3 = arith.constant 0 : index
    %c0_4 = arith.constant 0 : index
    %3 = vector.load %arg3[%c0_3, %c0_4] : memref<1x128xf32, #tpu.memory_space<vmem>>, vector<1x128xf32>
    %c0_5 = arith.constant 0 : index
    %c0_6 = arith.constant 0 : index
    %4 = vector.load %arg4[%c0_5, %c0_6] : memref<1x128xf32, #tpu.memory_space<vmem>>, vector<1x128xf32>
    %cst_7 = arith.constant dense<0.000000e+00> : vector<128xf32>
    %5 = vector.multi_reduction <add>, %2, %cst_7 [1] : vector<128x128xf32> to vector<128xf32>
    %6 = vector.shape_cast %5 : vector<128xf32> to vector<128x1xf32>
    %7 = arith.mulf %2, %2 : vector<128x128xf32>
    %cst_8 = arith.constant dense<0.000000e+00> : vector<128xf32>
    %8 = vector.multi_reduction <add>, %7, %cst_8 [1] : vector<128x128xf32> to vector<128xf32>
    %9 = vector.shape_cast %8 : vector<128xf32> to vector<128x1xf32>
    %cst_9 = arith.constant 3.125000e-02 : f32
    %10 = vector.broadcast %cst_9 : f32 to vector<128x1xf32>
    %11 = arith.mulf %6, %10 : vector<128x1xf32>
    %cst_10 = arith.constant 3.125000e-02 : f32
    %12 = vector.broadcast %cst_10 : f32 to vector<128x1xf32>
    %13 = arith.mulf %9, %12 : vector<128x1xf32>
    %14 = arith.mulf %11, %11 : vector<128x1xf32>
    %15 = arith.subf %13, %14 : vector<128x1xf32>
    %16 = vector.broadcast %11 : vector<128x1xf32> to vector<128x128xf32>
    %17 = arith.subf %2, %16 : vector<128x128xf32>
    %cst_11 = arith.constant 9.99999974E-6 : f32
    %18 = vector.broadcast %cst_11 : f32 to vector<128x1xf32>
    %19 = arith.addf %15, %18 : vector<128x1xf32>
    %20 = math.rsqrt %19 : vector<128x1xf32>
    %21 = vector.broadcast %20 : vector<128x1xf32> to vector<128x128xf32>
    %22 = arith.mulf %17, %21 : vector<128x128xf32>
    %23 = vector.broadcast %3 : vector<1x128xf32> to vector<128x128xf32>
    %24 = arith.mulf %22, %23 : vector<128x128xf32>
    %25 = vector.broadcast %4 : vector<1x128xf32> to vector<128x128xf32>
    %26 = arith.addf %24, %25 : vector<128x128xf32>
    %27 = arith.truncf %26 : vector<128x128xf32> to vector<128x128xbf16>
    %c0_12 = arith.constant 0 : index
    %c0_13 = arith.constant 0 : index
    %28 = vector.load %arg5[%c0_12, %c0_13] : memref<128x128xbf16, #tpu.memory_space<vmem>>, vector<128x128xbf16>
    tpu.vector_store %arg5[%c0_12, %c0_13], %27 {strides = array<i32>} : memref<128x128xbf16, #tpu.memory_space<vmem>>, vector<128x128xbf16>,
    return
  }
  func.func @transform_0(%arg0: i32) -> (i32, i32) {
    %c0_i32 = arith.constant 0 : i32
    %c0_i32_0 = arith.constant 0 : i32
    return %arg0, %c0_i32 : i32, i32
  }
  func.func @transform_1(%arg0: i32) -> (i32, i32) {
    %c0_i32 = arith.constant 0 : i32
    %c0_i32_0 = arith.constant 0 : i32
    %c0_i32_1 = arith.constant 0 : i32
    return %c0_i32, %c0_i32_0 : i32, i32
  }
  func.func @transform_2(%arg0: i32) -> (i32, i32) {
    %c0_i32 = arith.constant 0 : i32
    %c0_i32_0 = arith.constant 0 : i32
    %c0_i32_1 = arith.constant 0 : i32
    return %c0_i32, %c0_i32_0 : i32, i32
  }
  func.func @transform_3(%arg0: i32) -> (i32, i32) {
    %c0_i32 = arith.constant 0 : i32
    %c0_i32_0 = arith.constant 0 : i32
    %c0_i32_1 = arith.constant 0 : i32
    return %c0_i32, %c0_i32_0 : i32, i32
  }
  func.func @transform_4(%arg0: i32) -> (i32, i32) {
    %c0_i32 = arith.constant 0 : i32
    %c0_i32_0 = arith.constant 0 : i32
    return %arg0, %c0_i32 : i32, i32
  }
}

module attributes {stable_mosaic.version = 11 : i64} {
  func.func @gcne_layer_kernel(%arg0: i32, %arg1: i32, %arg2: memref<128x128xbf16, #tpu.memory_space<vmem>>, %arg3: memref<128x128xbf16, #tpu.memory_space<vmem>>, %arg4: memref<128x128xbf16, #tpu.memory_space<vmem>>, %arg5: memref<128x128xbf16, #tpu.memory_space<vmem>>, %arg6: memref<128x1xf32, #tpu.memory_space<vmem>>, %arg7: memref<1x128xf32, #tpu.memory_space<vmem>>, %arg8: memref<1x128xf32, #tpu.memory_space<vmem>>, %arg9: memref<1x128xf32, #tpu.memory_space<vmem>>, %arg10: memref<1x128xf32, #tpu.memory_space<vmem>>, %arg11: memref<128x128xbf16, #tpu.memory_space<vmem>>, %arg12: memref<128x128xf32, #tpu.memory_space<vmem>>) attributes {dimension_semantics = [#tpu.dimension_semantics<parallel>, #tpu.dimension_semantics<arbitrary>], iteration_bounds = array<i64: 1, 2>, scalar_prefetch = 0 : i64, scratch_operands = 1 : i64, tpu.core_type = #tpu.core_type<tc>, window_params = [{transform_indices = @transform_0, window_bounds = array<i64: 128, 128>}, {transform_indices = @transform_1, window_bounds = array<i64: 128, 128>}, {transform_indices = @transform_2, window_bounds = array<i64: 128, 128>}, {transform_indices = @transform_3, window_bounds = array<i64: 128, 128>}, {transform_indices = @transform_4, window_bounds = array<i64: 128, 1>}, {pipeline_mode = #tpu.pipeline_mode<synchronous>, transform_indices = @transform_5, window_bounds = array<i64: 1, 128>}, {pipeline_mode = #tpu.pipeline_mode<synchronous>, transform_indices = @transform_6, window_bounds = array<i64: 1, 128>}, {pipeline_mode = #tpu.pipeline_mode<synchronous>, transform_indices = @transform_7, window_bounds = array<i64: 1, 128>}, {pipeline_mode = #tpu.pipeline_mode<synchronous>, transform_indices = @transform_8, window_bounds = array<i64: 1, 128>}, {transform_indices = @transform_9, window_bounds = array<i64: 128, 128>}]} {
    %c0_i32 = arith.constant 0 : i32
    %0 = arith.cmpi eq, %arg1, %c0_i32 : i32
    %1 = arith.extui %0 : i1 to i32
    %c0_i32_0 = arith.constant 0 : i32
    %2 = arith.cmpi ne, %1, %c0_i32_0 : i32
    scf.if %2 {
      %cst = arith.constant 0.000000e+00 : f32
      %12 = vector.broadcast %cst : f32 to vector<128x128xf32>
      %c0 = arith.constant 0 : index
      %c0_6 = arith.constant 0 : index
      %13 = vector.load %arg12[%c0, %c0_6] : memref<128x128xf32, #tpu.memory_space<vmem>>, vector<128x128xf32>
      tpu.vector_store %arg12[%c0, %c0_6], %12 {strides = array<i32>} : memref<128x128xf32, #tpu.memory_space<vmem>>, vector<128x128xf32>,
    } else {
    }
    %c1_i32 = arith.constant 1 : i32
    %3 = arith.cmpi slt, %arg1, %c1_i32 : i32
    %4 = arith.extui %3 : i1 to i32
    %c0_i32_1 = arith.constant 0 : i32
    %5 = arith.cmpi ne, %4, %c0_i32_1 : i32
    scf.if %5 {
      %c0 = arith.constant 0 : index
      %c0_6 = arith.constant 0 : index
      %12 = vector.load %arg12[%c0, %c0_6] : memref<128x128xf32, #tpu.memory_space<vmem>>, vector<128x128xf32>
      %c0_7 = arith.constant 0 : index
      %c0_8 = arith.constant 0 : index
      %13 = vector.load %arg2[%c0_7, %c0_8] : memref<128x128xbf16, #tpu.memory_space<vmem>>, vector<128x128xbf16>
      %c0_9 = arith.constant 0 : index
      %c0_10 = arith.constant 0 : index
      %14 = vector.load %arg4[%c0_9, %c0_10] : memref<128x128xbf16, #tpu.memory_space<vmem>>, vector<128x128xbf16>
      %cst = arith.constant dense<0.000000e+00> : vector<128x128xf32>
      %15 = tpu.matmul %13, %14, %cst {dimension_numbers = #tpu.dot_dimension_numbers<[1], [0], [0], [1], [0, 0, 1, 1], [], []>} : vector<128x128xbf16>, vector<128x128xbf16>, vector<128x128xf32> -> vector<128x128xf32>
      %16 = arith.addf %12, %15 : vector<128x128xf32>
      %c0_11 = arith.constant 0 : index
      %c0_12 = arith.constant 0 : index
      %17 = vector.load %arg12[%c0_11, %c0_12] : memref<128x128xf32, #tpu.memory_space<vmem>>, vector<128x128xf32>
      tpu.vector_store %arg12[%c0_11, %c0_12], %16 {strides = array<i32>} : memref<128x128xf32, #tpu.memory_space<vmem>>, vector<128x128xf32>,
    } else {
    }
    %c1_i32_2 = arith.constant 1 : i32
    %6 = arith.cmpi sge, %arg1, %c1_i32_2 : i32
    %7 = arith.extui %6 : i1 to i32
    %c0_i32_3 = arith.constant 0 : i32
    %8 = arith.cmpi ne, %7, %c0_i32_3 : i32
    scf.if %8 {
      %c0 = arith.constant 0 : index
      %c0_6 = arith.constant 0 : index
      %12 = vector.load %arg12[%c0, %c0_6] : memref<128x128xf32, #tpu.memory_space<vmem>>, vector<128x128xf32>
      %c0_7 = arith.constant 0 : index
      %c0_8 = arith.constant 0 : index
      %13 = vector.load %arg3[%c0_7, %c0_8] : memref<128x128xbf16, #tpu.memory_space<vmem>>, vector<128x128xbf16>
      %c0_9 = arith.constant 0 : index
      %c0_10 = arith.constant 0 : index
      %14 = vector.load %arg5[%c0_9, %c0_10] : memref<128x128xbf16, #tpu.memory_space<vmem>>, vector<128x128xbf16>
      %cst = arith.constant dense<0.000000e+00> : vector<128x128xf32>
      %15 = tpu.matmul %13, %14, %cst {dimension_numbers = #tpu.dot_dimension_numbers<[1], [0], [0], [1], [0, 0, 1, 1], [], []>} : vector<128x128xbf16>, vector<128x128xbf16>, vector<128x128xf32> -> vector<128x128xf32>
      %16 = arith.addf %12, %15 : vector<128x128xf32>
      %c0_11 = arith.constant 0 : index
      %c0_12 = arith.constant 0 : index
      %17 = vector.load %arg12[%c0_11, %c0_12] : memref<128x128xf32, #tpu.memory_space<vmem>>, vector<128x128xf32>
      tpu.vector_store %arg12[%c0_11, %c0_12], %16 {strides = array<i32>} : memref<128x128xf32, #tpu.memory_space<vmem>>, vector<128x128xf32>,
    } else {
    }
    %c1_i32_4 = arith.constant 1 : i32
    %9 = arith.cmpi eq, %arg1, %c1_i32_4 : i32
    %10 = arith.extui %9 : i1 to i32
    %c0_i32_5 = arith.constant 0 : i32
    %11 = arith.cmpi ne, %10, %c0_i32_5 : i32
    scf.if %11 {
      %c0 = arith.constant 0 : index
      %c0_6 = arith.constant 0 : index
      %12 = vector.load %arg12[%c0, %c0_6] : memref<128x128xf32, #tpu.memory_space<vmem>>, vector<128x128xf32>
      %c0_7 = arith.constant 0 : index
      %c0_8 = arith.constant 0 : index
      %13 = vector.load %arg6[%c0_7, %c0_8] : memref<128x1xf32, #tpu.memory_space<vmem>>, vector<128x1xf32>
      %c0_9 = arith.constant 0 : index
      %c0_10 = arith.constant 0 : index
      %14 = vector.load %arg7[%c0_9, %c0_10] : memref<1x128xf32, #tpu.memory_space<vmem>>, vector<1x128xf32>
      %15 = vector.broadcast %13 : vector<128x1xf32> to vector<128x128xf32>
      %16 = vector.broadcast %14 : vector<1x128xf32> to vector<128x128xf32>
      %17 = arith.mulf %15, %16 : vector<128x128xf32>
      %18 = arith.addf %12, %17 : vector<128x128xf32>
      %c0_11 = arith.constant 0 : index
      %c0_12 = arith.constant 0 : index
      %19 = vector.load %arg8[%c0_11, %c0_12] : memref<1x128xf32, #tpu.memory_space<vmem>>, vector<1x128xf32>
      %20 = vector.broadcast %19 : vector<1x128xf32> to vector<128x128xf32>
      %21 = arith.addf %18, %20 : vector<128x128xf32>
      %c0_13 = arith.constant 0 : index
      %c0_14 = arith.constant 0 : index
      %22 = vector.load %arg9[%c0_13, %c0_14] : memref<1x128xf32, #tpu.memory_space<vmem>>, vector<1x128xf32>
      %c0_15 = arith.constant 0 : index
      %c0_16 = arith.constant 0 : index
      %23 = vector.load %arg10[%c0_15, %c0_16] : memref<1x128xf32, #tpu.memory_space<vmem>>, vector<1x128xf32>
      %cst = arith.constant dense<0.000000e+00> : vector<128xf32>
      %24 = vector.multi_reduction <add>, %21, %cst [1] : vector<128x128xf32> to vector<128xf32>
      %25 = vector.shape_cast %24 : vector<128xf32> to vector<128x1xf32>
      %26 = arith.mulf %21, %21 : vector<128x128xf32>
      %cst_17 = arith.constant dense<0.000000e+00> : vector<128xf32>
      %27 = vector.multi_reduction <add>, %26, %cst_17 [1] : vector<128x128xf32> to vector<128xf32>
      %28 = vector.shape_cast %27 : vector<128xf32> to vector<128x1xf32>
      %cst_18 = arith.constant 3.125000e-02 : f32
      %29 = vector.broadcast %cst_18 : f32 to vector<128x1xf32>
      %30 = arith.mulf %25, %29 : vector<128x1xf32>
      %cst_19 = arith.constant 3.125000e-02 : f32
      %31 = vector.broadcast %cst_19 : f32 to vector<128x1xf32>
      %32 = arith.mulf %28, %31 : vector<128x1xf32>
      %33 = arith.mulf %30, %30 : vector<128x1xf32>
      %34 = arith.subf %32, %33 : vector<128x1xf32>
      %35 = vector.broadcast %30 : vector<128x1xf32> to vector<128x128xf32>
      %36 = arith.subf %21, %35 : vector<128x128xf32>
      %cst_20 = arith.constant 9.99999974E-6 : f32
      %37 = vector.broadcast %cst_20 : f32 to vector<128x1xf32>
      %38 = arith.addf %34, %37 : vector<128x1xf32>
      %39 = math.rsqrt %38 : vector<128x1xf32>
      %40 = vector.broadcast %39 : vector<128x1xf32> to vector<128x128xf32>
      %41 = arith.mulf %36, %40 : vector<128x128xf32>
      %42 = vector.broadcast %22 : vector<1x128xf32> to vector<128x128xf32>
      %43 = arith.mulf %41, %42 : vector<128x128xf32>
      %44 = vector.broadcast %23 : vector<1x128xf32> to vector<128x128xf32>
      %45 = arith.addf %43, %44 : vector<128x128xf32>
      %46 = math.tanh %45 : vector<128x128xf32>
      %47 = arith.truncf %46 : vector<128x128xf32> to vector<128x128xbf16>
      %c0_21 = arith.constant 0 : index
      %c0_22 = arith.constant 0 : index
      %48 = vector.load %arg11[%c0_21, %c0_22] : memref<128x128xbf16, #tpu.memory_space<vmem>>, vector<128x128xbf16>
      tpu.vector_store %arg11[%c0_21, %c0_22], %47 {strides = array<i32>} : memref<128x128xbf16, #tpu.memory_space<vmem>>, vector<128x128xbf16>,
    } else {
    }
    return
  }
  func.func @transform_0(%arg0: i32, %arg1: i32) -> (i32, i32) {
    %c0_i32 = arith.constant 0 : i32
    %0 = arith.minsi %arg1, %c0_i32 : i32
    %c0_i32_0 = arith.constant 0 : i32
    return %arg0, %0 : i32, i32
  }
  func.func @transform_1(%arg0: i32, %arg1: i32) -> (i32, i32) {
    %c1_i32 = arith.constant 1 : i32
    %0 = arith.subi %arg1, %c1_i32 : i32
    %c0_i32 = arith.constant 0 : i32
    %1 = arith.maxsi %0, %c0_i32 : i32
    %c0_i32_0 = arith.constant 0 : i32
    return %arg0, %1 : i32, i32
  }
  func.func @transform_2(%arg0: i32, %arg1: i32) -> (i32, i32) {
    %c0_i32 = arith.constant 0 : i32
    %0 = arith.minsi %arg1, %c0_i32 : i32
    %c0_i32_0 = arith.constant 0 : i32
    %c0_i32_1 = arith.constant 0 : i32
    return %0, %c0_i32_0 : i32, i32
  }
  func.func @transform_3(%arg0: i32, %arg1: i32) -> (i32, i32) {
    %c1_i32 = arith.constant 1 : i32
    %0 = arith.subi %arg1, %c1_i32 : i32
    %c0_i32 = arith.constant 0 : i32
    %1 = arith.maxsi %0, %c0_i32 : i32
    %c0_i32_0 = arith.constant 0 : i32
    %c0_i32_1 = arith.constant 0 : i32
    return %1, %c0_i32_0 : i32, i32
  }
  func.func @transform_4(%arg0: i32, %arg1: i32) -> (i32, i32) {
    %c0_i32 = arith.constant 0 : i32
    %c0_i32_0 = arith.constant 0 : i32
    return %arg0, %c0_i32 : i32, i32
  }
  func.func @transform_5(%arg0: i32, %arg1: i32) -> (i32, i32) {
    %c0_i32 = arith.constant 0 : i32
    %c0_i32_0 = arith.constant 0 : i32
    %c0_i32_1 = arith.constant 0 : i32
    return %c0_i32, %c0_i32_0 : i32, i32
  }
  func.func @transform_6(%arg0: i32, %arg1: i32) -> (i32, i32) {
    %c0_i32 = arith.constant 0 : i32
    %c0_i32_0 = arith.constant 0 : i32
    %c0_i32_1 = arith.constant 0 : i32
    return %c0_i32, %c0_i32_0 : i32, i32
  }
  func.func @transform_7(%arg0: i32, %arg1: i32) -> (i32, i32) {
    %c0_i32 = arith.constant 0 : i32
    %c0_i32_0 = arith.constant 0 : i32
    %c0_i32_1 = arith.constant 0 : i32
    return %c0_i32, %c0_i32_0 : i32, i32
  }
  func.func @transform_8(%arg0: i32, %arg1: i32) -> (i32, i32) {
    %c0_i32 = arith.constant 0 : i32
    %c0_i32_0 = arith.constant 0 : i32
    %c0_i32_1 = arith.constant 0 : i32
    return %c0_i32, %c0_i32_0 : i32, i32
  }
  func.func @transform_9(%arg0: i32, %arg1: i32) -> (i32, i32) {
    %c0_i32 = arith.constant 0 : i32
    %c0_i32_0 = arith.constant 0 : i32
    return %arg0, %c0_i32 : i32, i32
  }
}

module attributes {stable_mosaic.version = 11 : i64} {
  func.func @pool_head_kernel(%arg0: memref<128x128xbf16, #tpu.memory_space<vmem>>, %arg1: memref<1x128xi32, #tpu.memory_space<vmem>>, %arg2: memref<1x128xf32, #tpu.memory_space<vmem>>, %arg3: memref<128x128xf32, #tpu.memory_space<vmem>>, %arg4: memref<1x128xf32, #tpu.memory_space<vmem>>, %arg5: memref<128x1xf32, #tpu.memory_space<vmem>>, %arg6: memref<1x1xf32, #tpu.memory_space<vmem>>, %arg7: memref<8x1xf32, #tpu.memory_space<vmem>>) attributes {dimension_semantics = [], scalar_prefetch = 0 : i64, scratch_operands = 0 : i64, tpu.core_type = #tpu.core_type<tc>} {
    %c0 = arith.constant 0 : index
    %c0_0 = arith.constant 0 : index
    %0 = vector.load %arg0[%c0, %c0_0] : memref<128x128xbf16, #tpu.memory_space<vmem>>, vector<128x128xbf16>
    %1 = arith.extf %0 : vector<128x128xbf16> to vector<128x128xf32>
    %c0_1 = arith.constant 0 : index
    %c0_2 = arith.constant 0 : index
    %2 = vector.load %arg2[%c0_1, %c0_2] : memref<1x128xf32, #tpu.memory_space<vmem>>, vector<1x128xf32>
    "tpu.trace_start"() <{level = 10 : i32, message = "gh,nh->gn"}> : () -> ()
    %cst = arith.constant dense<0.000000e+00> : vector<1x128xf32>
    %3 = tpu.matmul %2, %1, %cst {dimension_numbers = #tpu.dot_dimension_numbers<[1], [1], [0], [0], [0, 0, 1, 0], [], []>} : vector<1x128xf32>, vector<128x128xf32>, vector<1x128xf32> -> vector<1x128xf32>
    "tpu.trace_stop"() : () -> ()
    %4 = tpu.iota {dimensions = array<i32: 0>} : vector<8x128xi32>
    %c0_3 = arith.constant 0 : index
    %c0_4 = arith.constant 0 : index
    %5 = vector.load %arg1[%c0_3, %c0_4] : memref<1x128xi32, #tpu.memory_space<vmem>>, vector<1x128xi32>
    %6 = vector.broadcast %5 : vector<1x128xi32> to vector<8x128xi32>
    %7 = arith.cmpi eq, %6, %4 : vector<8x128xi32>
    %8 = arith.extui %7 : vector<8x128xi1> to vector<8x128xi32>
    %9 = arith.sitofp %8 : vector<8x128xi32> to vector<8x128xf32>
    %cst_5 = arith.constant 0.000000e+00 : f32
    %10 = vector.broadcast %cst_5 : f32 to vector<8x128xf32>
    %11 = arith.cmpf ogt, %9, %10 : vector<8x128xf32>
    %cst_6 = arith.constant -1.000000e+30 : f32
    %12 = vector.shape_cast %3 : vector<1x128xf32> to vector<1x128xf32>
    %13 = vector.broadcast %12 : vector<1x128xf32> to vector<8x128xf32>
    %14 = vector.broadcast %cst_6 : f32 to vector<8x128xf32>
    %15 = arith.select %11, %13, %14 : vector<8x128xi1>, vector<8x128xf32>
    %cst_7 = arith.constant dense<0xFF800000> : vector<8xf32>
    %16 = vector.multi_reduction <maximumf>, %15, %cst_7 [1] : vector<8x128xf32> to vector<8xf32>
    %17 = vector.shape_cast %16 : vector<8xf32> to vector<8x1xf32>
    %18 = vector.broadcast %17 : vector<8x1xf32> to vector<8x128xf32>
    %19 = arith.subf %15, %18 : vector<8x128xf32>
    %20 = math.exp %19 : vector<8x128xf32>
    %21 = arith.mulf %20, %9 : vector<8x128xf32>
    %cst_8 = arith.constant dense<0.000000e+00> : vector<8xf32>
    %22 = vector.multi_reduction <add>, %21, %cst_8 [1] : vector<8x128xf32> to vector<8xf32>
    %23 = vector.shape_cast %22 : vector<8xf32> to vector<8x1xf32>
    %cst_9 = arith.constant 9.99999968E-21 : f32
    %24 = vector.broadcast %cst_9 : f32 to vector<8x1xf32>
    %25 = arith.addf %23, %24 : vector<8x1xf32>
    %26 = tpu.reciprocal %25 {approx = true} : vector<8x1xf32> -> vector<8x1xf32>
    %27 = vector.broadcast %26 : vector<8x1xf32> to vector<8x128xf32>
    %28 = arith.mulf %21, %27 : vector<8x128xf32>
    %cst_10 = arith.constant dense<0.000000e+00> : vector<8x128xf32>
    %29 = tpu.matmul %28, %1, %cst_10 {dimension_numbers = #tpu.dot_dimension_numbers<[1], [0], [0], [1], [0, 0, 1, 1], [], []>} : vector<8x128xf32>, vector<128x128xf32>, vector<8x128xf32> -> vector<8x128xf32>
    %c0_11 = arith.constant 0 : index
    %c0_12 = arith.constant 0 : index
    %30 = vector.load %arg3[%c0_11, %c0_12] : memref<128x128xf32, #tpu.memory_space<vmem>>, vector<128x128xf32>
    %cst_13 = arith.constant dense<0.000000e+00> : vector<8x128xf32>
    %31 = tpu.matmul %29, %30, %cst_13 {dimension_numbers = #tpu.dot_dimension_numbers<[1], [0], [0], [1], [0, 0, 1, 1], [], []>} : vector<8x128xf32>, vector<128x128xf32>, vector<8x128xf32> -> vector<8x128xf32>
    %c0_14 = arith.constant 0 : index
    %c0_15 = arith.constant 0 : index
    %32 = vector.load %arg4[%c0_14, %c0_15] : memref<1x128xf32, #tpu.memory_space<vmem>>, vector<1x128xf32>
    %33 = vector.broadcast %32 : vector<1x128xf32> to vector<8x128xf32>
    %34 = arith.addf %31, %33 : vector<8x128xf32>
    %35 = math.tanh %34 : vector<8x128xf32>
    %c0_16 = arith.constant 0 : index
    %c0_17 = arith.constant 0 : index
    %36 = vector.load %arg5[%c0_16, %c0_17] : memref<128x1xf32, #tpu.memory_space<vmem>>, vector<128x1xf32>
    %cst_18 = arith.constant dense<0.000000e+00> : vector<8x1xf32>
    %37 = tpu.matmul %35, %36, %cst_18 {dimension_numbers = #tpu.dot_dimension_numbers<[1], [0], [0], [1], [0, 0, 1, 1], [], []>} : vector<8x128xf32>, vector<128x1xf32>, vector<8x1xf32> -> vector<8x1xf32>
    %c0_19 = arith.constant 0 : index
    %c0_20 = arith.constant 0 : index
    %38 = vector.load %arg6[%c0_19, %c0_20] : memref<1x1xf32, #tpu.memory_space<vmem>>, vector<1x1xf32>
    %39 = vector.broadcast %38 : vector<1x1xf32> to vector<8x1xf32>
    %40 = arith.addf %37, %39 : vector<8x1xf32>
    %41 = arith.negf %40 : vector<8x1xf32>
    %42 = math.exp %41 : vector<8x1xf32>
    %cst_21 = arith.constant 1.000000e+00 : f32
    %43 = vector.broadcast %cst_21 : f32 to vector<8x1xf32>
    %44 = arith.addf %43, %42 : vector<8x1xf32>
    %45 = arith.divf %43, %44 : vector<8x1xf32>
    %c0_22 = arith.constant 0 : index
    %c0_23 = arith.constant 0 : index
    %46 = vector.load %arg7[%c0_22, %c0_23] : memref<8x1xf32, #tpu.memory_space<vmem>>, vector<8x1xf32>
    tpu.vector_store %arg7[%c0_22, %c0_23], %45 {strides = array<i32>} : memref<8x1xf32, #tpu.memory_space<vmem>>, vector<8x1xf32>,
    return
  }
}

</mosaic_0001>

<llo_original>
// kernel: mul.2
$region0: #{mul.2}
  #allocation0 [shape = 's32[1]{0}', space=sflag, size = 0x4, scoped, tag = 'scoped memory for mul.2']
  %s0 = inlined_call_operand.vmem [shape: f32[64], index: 0, kind: input, shape index: {}]
  %s1 = inlined_call_operand.vmem [shape: f32[64], index: 1, kind: input, shape index: {}]
  %s2 = inlined_call_operand.vmem [shape: f32[64], index: 2, kind: output, shape index: {}]
  %v3 = vld [vmem:[%s0] sm:$0x1]
  %v4 = vld [vmem:[%s1] sm:$0x1]
  %5 = xla_tuple %v3, %v4
  %6 = xla_tuple %5
  %v7 = vmul.f32 %v3, %v4
  %8 = xla_tuple %v7
  %9 = vst [vmem:[%s2] sm:$0x1] %v7

// kernel: forward.7
$region0: #{forward.7}
  #allocation0 [shape = 'u32[]', space=smem, size = 0x4, offset = 0x4, fixed_abs, tag = 'smem constant byte address 0x4 - core index']
  #allocation1 [shape = 'u32[144,128]{1,0:T(1,128)}', space=vmem, size = 0x12000, scoped, tag = 'internal scratch']
  %s0 = inlined_call_operand.vmem [shape: bf16[128,128], index: 0, kind: input, shape index: {}]
  %s1 = inlined_call_operand.vmem [shape: bf16[128,128], index: 1, kind: input, shape index: {}]
  %s2 = inlined_call_operand.vmem [shape: bf16[128,128], index: 2, kind: output, shape index: {}]
  %s3 = sld [smem:[#allocation0]]
  $region18: #{forward.7} parent=0
    _
  %s5 = ssub.s32 1, %s3
  %s6 = scalar_select 0, %s5, %s3
  // Predicated region
  $region2: #{forward.7} parent=0 // pred_check
    _
  $region3: #{forward.7} parent=0 // pred_check_branch
    %8 = sbr.rel (0) target = $region5
  $region4: #{forward.7} parent=0 // pred_region
    _
  $region5: #{forward.7} parent=0 // pred_fallthru
    _
  // Predicated region
  $region6: #{forward.7} parent=0 // pred_check
    _
  $region7: #{forward.7} parent=0 // pred_check_branch
    %10 = sbr.rel (0) target = $region9
  $region8: #{forward.7} parent=0 // pred_region
    _
  $region9: #{forward.7} parent=0 // pred_fallthru
    _
  %v12 = vld [vmem:[%s0] sm:$0xf]
  %v13 = vld [vmem:[%s0 + $0x4] sm:$0xf]
  %v14 = vld [vmem:[%s0 + $0x8] sm:$0xf]
  %v15 = vld [vmem:[%s0 + $0xc] sm:$0xf]
  %v16 = vld [vmem:[%s0 + $0x10] sm:$0xf]
  %v17 = vld [vmem:[%s0 + $0x14] sm:$0xf]
  %v18 = vld [vmem:[%s0 + $0x18] sm:$0xf]
  %v19 = vld [vmem:[%s0 + $0x1c] sm:$0xf]
  %v20 = vld [vmem:[%s0 + $0x20] sm:$0xf]
  %v21 = vld [vmem:[%s0 + $0x24] sm:$0xf]
  %v22 = vld [vmem:[%s0 + $0x28] sm:$0xf]
  %v23 = vld [vmem:[%s0 + $0x2c] sm:$0xf]
  %v24 = vld [vmem:[%s0 + $0x30] sm:$0xf]
  %v25 = vld [vmem:[%s0 + $0x34] sm:$0xf]
  %v26 = vld [vmem:[%s0 + $0x38] sm:$0xf]
  %v27 = vld [vmem:[%s0 + $0x3c] sm:$0xf]
  %v28 = vld [vmem:[%s1] sm:$0xf]
  %v29 = vld [vmem:[%s1 + $0x4] sm:$0xf]
  %v30 = vld [vmem:[%s1 + $0x8] sm:$0xf]
  %v31 = vld [vmem:[%s1 + $0xc] sm:$0xf]
  %v32 = vld [vmem:[%s1 + $0x10] sm:$0xf]
  %v33 = vld [vmem:[%s1 + $0x14] sm:$0xf]
  %v34 = vld [vmem:[%s1 + $0x18] sm:$0xf]
  %v35 = vld [vmem:[%s1 + $0x1c] sm:$0xf]
  %v36 = vld [vmem:[%s1 + $0x20] sm:$0xf]
  %v37 = vld [vmem:[%s1 + $0x24] sm:$0xf]
  %v38 = vld [vmem:[%s1 + $0x28] sm:$0xf]
  %v39 = vld [vmem:[%s1 + $0x2c] sm:$0xf]
  %v40 = vld [vmem:[%s1 + $0x30] sm:$0xf]
  %v41 = vld [vmem:[%s1 + $0x34] sm:$0xf]
  %v42 = vld [vmem:[%s1 + $0x38] sm:$0xf]
  %v43 = vld [vmem:[%s1 + $0x3c] sm:$0xf]
  %v60 = vunpack.c.l.b16 %v12
  %v61 = vunpack.c.l.b16 %v13
  %v62 = vunpack.c.l.b16 %v14
  %v63 = vunpack.c.l.b16 %v15
  %v64 = vunpack.c.l.b16 %v16
  %v65 = vunpack.c.l.b16 %v17
  %v66 = vunpack.c.l.b16 %v18
  %v67 = vunpack.c.l.b16 %v19
  %v68 = vunpack.c.l.b16 %v20
  %v69 = vunpack.c.l.b16 %v21
  %v70 = vunpack.c.l.b16 %v22
  %v71 = vunpack.c.l.b16 %v23
  %v72 = vunpack.c.l.b16 %v24
  %v73 = vunpack.c.l.b16 %v25
  %v74 = vunpack.c.l.b16 %v26
  %v75 = vunpack.c.l.b16 %v27
  %v76 = vpack.c.b16 %v61, %v60
  %v77 = vpack.c.b16 %v63, %v62
  %v78 = vpack.c.b16 %v65, %v64
  %v79 = vpack.c.b16 %v67, %v66
  %v80 = vpack.c.b16 %v69, %v68
  %v81 = vpack.c.b16 %v71, %v70
  %v82 = vpack.c.b16 %v73, %v72
  %v83 = vpack.c.b16 %v75, %v74
  %v108 = vunpack.c.l.b16 %v28
  %v109 = vunpack.c.l.b16 %v29
  %v110 = vunpack.c.l.b16 %v30
  %v111 = vunpack.c.l.b16 %v31
  %v112 = vunpack.c.l.b16 %v32
  %v113 = vunpack.c.l.b16 %v33
  %v114 = vunpack.c.l.b16 %v34
  %v115 = vunpack.c.l.b16 %v35
  %v116 = vunpack.c.l.b16 %v36
  %v117 = vunpack.c.l.b16 %v37
  %v118 = vunpack.c.l.b16 %v38
  %v119 = vunpack.c.l.b16 %v39
  %v120 = vunpack.c.l.b16 %v40
  %v121 = vunpack.c.l.b16 %v41
  %v122 = vunpack.c.l.b16 %v42
  %v123 = vunpack.c.l.b16 %v43
  %v124 = vpack.c.b16 %v109, %v108
  %v125 = vpack.c.b16 %v111, %v110
  %v126 = vpack.c.b16 %v113, %v112
  %v127 = vpack.c.b16 %v115, %v114
  %v128 = vpack.c.b16 %v117, %v116
  %v129 = vpack.c.b16 %v119, %v118
  %v130 = vpack.c.b16 %v121, %v120
  %v131 = vpack.c.b16 %v123, %v122
  %140 = vmatprep.subr.bf16.mxu0 0
  %141 = vmatpush1.bf16.msra.mxu0 %v124
  %142 = vmatprep.subr.bf16.mxu0 0
  %143 = vmatpush1.bf16.msra.mxu0 %v125
  %144 = vmatprep.subr.bf16.mxu0 0
  %145 = vmatpush1.bf16.msra.mxu0 %v126
  %146 = vmatprep.subr.bf16.mxu0 0
  %147 = vmatpush1.bf16.msra.mxu0 %v127
  %148 = vmatprep.subr.bf16.mxu0 0
  %149 = vmatpush1.bf16.msra.mxu0 %v128
  %150 = vmatprep.subr.bf16.mxu0 0
  %151 = vmatpush1.bf16.msra.mxu0 %v129
  %152 = vmatprep.subr.bf16.mxu0 0
  %153 = vmatpush1.bf16.msra.mxu0 %v130
  %154 = vmatprep.subr.bf16.mxu0 0
  %155 = vmatpush1.bf16.msra.mxu0 %v131
  %156 = vmatprep.subr.bf16.mxu0 0
  %157 = vmatpush1.bf16.msra.mxu0 0
  %158 = vmatprep.subr.bf16.mxu0 0
  %159 = vmatpush1.bf16.msra.mxu0 0
  %160 = vmatprep.subr.bf16.mxu0 0
  %161 = vmatpush1.bf16.msra.mxu0 0
  %162 = vmatprep.subr.bf16.mxu0 0
  %163 = vmatpush1.bf16.msra.mxu0 0
  %164 = vmatprep.subr.bf16.mxu0 0
  %165 = vmatpush1.bf16.msra.mxu0 0
  %166 = vmatprep.subr.bf16.mxu0 0
  %167 = vmatpush1.bf16.msra.mxu0 0
  %168 = vmatprep.subr.bf16.mxu0 0
  %169 = vmatpush1.bf16.msra.mxu0 0
  %170 = vmatprep.subr.bf16.mxu0 0
  %171 = vmatpush1.bf16.msra.mxu0 0
  %172 = vmatprep.mubr.bf16.mxu0 0
  %173 = vmatmul.mubr.bf16.gmra.mrb[0].mxu0 %v76
  %v174 = vpop.f32.mrb[0].mxu0
  %v175 = vadd.f32 0.0, %v174
  %v176 = vpop.f32.mrb[0].mxu0
  %v177 = vpop.f32.mrb[0].mxu0
  %v178 = vadd.f32 0.0, %v177
  %v179 = vpop.f32.mrb[0].mxu0
  %180 = vmatprep.mubr.bf16.mxu0 0
  %181 = vmatmul.mubr.bf16.gmra.mrb[0].mxu0 %v77
  %v182 = vpop.f32.mrb[0].mxu0
  %v183 = vadd.f32 0.0, %v182
  %v184 = vpop.f32.mrb[0].mxu0
  %v185 = vpop.f32.mrb[0].mxu0
  %v186 = vadd.f32 0.0, %v185
  %v187 = vpop.f32.mrb[0].mxu0
  %188 = vmatprep.mubr.bf16.mxu0 0
  %189 = vmatmul.mubr.bf16.gmra.mrb[0].mxu0 %v78
  %v190 = vpop.f32.mrb[0].mxu0
  %v191 = vadd.f32 0.0, %v190
  %v192 = vpop.f32.mrb[0].mxu0
  %v193 = vpop.f32.mrb[0].mxu0
  %v194 = vadd.f32 0.0, %v193
  %v195 = vpop.f32.mrb[0].mxu0
  %196 = vmatprep.mubr.bf16.mxu0 0
  %197 = vmatmul.mubr.bf16.gmra.mrb[0].mxu0 %v79
  %v198 = vpop.f32.mrb[0].mxu0
  %v199 = vadd.f32 0.0, %v198
  %v200 = vpop.f32.mrb[0].mxu0
  %v201 = vpop.f32.mrb[0].mxu0
  %v202 = vadd.f32 0.0, %v201
  %v203 = vpop.f32.mrb[0].mxu0
  %204 = vmatprep.mubr.bf16.mxu0 0
  %205 = vmatmul.mubr.bf16.gmra.mrb[0].mxu0 %v80
  %v206 = vpop.f32.mrb[0].mxu0
  %v207 = vadd.f32 0.0, %v206
  %v208 = vpop.f32.mrb[0].mxu0
  %v209 = vpop.f32.mrb[0].mxu0
  %v210 = vadd.f32 0.0, %v209
  %v211 = vpop.f32.mrb[0].mxu0
  %212 = vmatprep.mubr.bf16.mxu0 0
  %213 = vmatmul.mubr.bf16.gmra.mrb[0].mxu0 %v81
  %v214 = vpop.f32.mrb[0].mxu0
  %v215 = vadd.f32 0.0, %v214
  %v216 = vpop.f32.mrb[0].mxu0
  %v217 = vpop.f32.mrb[0].mxu0
  %v218 = vadd.f32 0.0, %v217
  %v219 = vpop.f32.mrb[0].mxu0
  %220 = vmatprep.mubr.bf16.mxu0 0
  %221 = vmatmul.mubr.bf16.gmra.mrb[0].mxu0 %v82
  %v222 = vpop.f32.mrb[0].mxu0
  %v223 = vadd.f32 0.0, %v222
  %v224 = vpop.f32.mrb[0].mxu0
  %v225 = vpop.f32.mrb[0].mxu0
  %v226 = vadd.f32 0.0, %v225
  %v227 = vpop.f32.mrb[0].mxu0
  %228 = vmatprep.mubr.bf16.mxu0 0
  %229 = vmatmul.mubr.bf16.gmra.mrb[0].mxu0 %v83
  %v230 = vpop.f32.mrb[0].mxu0
  %v231 = vadd.f32 0.0, %v230
  %v232 = vpop.f32.mrb[0].mxu0
  %v233 = vpop.f32.mrb[0].mxu0
  %v234 = vadd.f32 0.0, %v233
  %v235 = vpop.f32.mrb[0].mxu0
  %236 = vdwg.mxu0
  %v237 = vpack.c.bf16 %v178, %v175
  %v238 = vpack.c.bf16 %v186, %v183
  %v239 = vpack.c.bf16 %v194, %v191
  %v240 = vpack.c.bf16 %v202, %v199
  %v241 = vpack.c.bf16 %v210, %v207
  %v242 = vpack.c.bf16 %v218, %v215
  %v243 = vpack.c.bf16 %v226, %v223
  %v244 = vpack.c.bf16 %v234, %v231
  %v253 = vunpack.c.l.b16 %v237
  %v254 = vunpack.c.h.b16 %v237
  %v255 = vunpack.c.l.b16 %v238
  %v256 = vunpack.c.h.b16 %v238
  %v257 = vunpack.c.l.b16 %v239
  %v258 = vunpack.c.h.b16 %v239
  %v259 = vunpack.c.l.b16 %v240
  %v260 = vunpack.c.h.b16 %v240
  %v261 = vunpack.c.l.b16 %v241
  %v262 = vunpack.c.h.b16 %v241
  %v263 = vunpack.c.l.b16 %v242
  %v264 = vunpack.c.h.b16 %v242
  %v265 = vunpack.c.l.b16 %v243
  %v266 = vunpack.c.h.b16 %v243
  %v267 = vunpack.c.l.b16 %v244
  %v268 = vunpack.c.h.b16 %v244
  %v269 = vpack.c.b16 %v253, %v253
  %v270 = vpack.c.b16 %v254, %v254
  %v271 = vpack.c.b16 %v255, %v255
  %v272 = vpack.c.b16 %v256, %v256
  %v273 = vpack.c.b16 %v257, %v257
  %v274 = vpack.c.b16 %v258, %v258
  %v275 = vpack.c.b16 %v259, %v259
  %v276 = vpack.c.b16 %v260, %v260
  %v277 = vpack.c.b16 %v261, %v261
  %v278 = vpack.c.b16 %v262, %v262
  %v279 = vpack.c.b16 %v263, %v263
  %v280 = vpack.c.b16 %v264, %v264
  %v281 = vpack.c.b16 %v265, %v265
  %v282 = vpack.c.b16 %v266, %v266
  %v283 = vpack.c.b16 %v267, %v267
  %v284 = vpack.c.b16 %v268, %v268
  %301 = vst [vmem:[%s2] sm:$0xf] %v269
  %302 = vst [vmem:[%s2 + $0x4] sm:$0xf] %v270
  %303 = vst [vmem:[%s2 + $0x8] sm:$0xf] %v271
  %304 = vst [vmem:[%s2 + $0xc] sm:$0xf] %v272
  %305 = vst [vmem:[%s2 + $0x10] sm:$0xf] %v273
  %306 = vst [vmem:[%s2 + $0x14] sm:$0xf] %v274
  %307 = vst [vmem:[%s2 + $0x18] sm:$0xf] %v275
  %308 = vst [vmem:[%s2 + $0x1c] sm:$0xf] %v276
  %309 = vst [vmem:[%s2 + $0x20] sm:$0xf] %v277
  %310 = vst [vmem:[%s2 + $0x24] sm:$0xf] %v278
  %311 = vst [vmem:[%s2 + $0x28] sm:$0xf] %v279
  %312 = vst [vmem:[%s2 + $0x2c] sm:$0xf] %v280
  %313 = vst [vmem:[%s2 + $0x30] sm:$0xf] %v281
  %314 = vst [vmem:[%s2 + $0x34] sm:$0xf] %v282
  %315 = vst [vmem:[%s2 + $0x38] sm:$0xf] %v283
  %316 = vst [vmem:[%s2 + $0x3c] sm:$0xf] %v284
  // Predicated region
  $region10: #{forward.7} parent=0 // pred_check
    _
  $region11: #{forward.7} parent=0 // pred_check_branch
    %318 = sbr.rel (0) target = $region13
  $region12: #{forward.7} parent=0 // pred_region
    _
  $region13: #{forward.7} parent=0 // pred_fallthru
    _
  // Predicated region
  $region14: #{forward.7} parent=0 // pred_check
    _
  $region15: #{forward.7} parent=0 // pred_check_branch
    %320 = sbr.rel (0) target = $region17
  $region16: #{forward.7} parent=0 // pred_region
    _
  $region17: #{forward.7} parent=0 // pred_fallthru
    _

// kernel: forward.8
$region0: #{forward.8}
  #allocation0 [shape = 'u32[]', space=smem, size = 0x4, offset = 0x4, fixed_abs, tag = 'smem constant byte address 0x4 - core index']
  #allocation1 [shape = 'u32[144,128]{1,0:T(1,128)}', space=vmem, size = 0x12000, scoped, tag = 'internal scratch']
  %s0 = inlined_call_operand.vmem [shape: bf16[128,128], index: 0, kind: input, shape index: {}]
  %s1 = inlined_call_operand.vmem [shape: bf16[128,128], index: 1, kind: input, shape index: {}]
  %s2 = inlined_call_operand.vmem [shape: f32[1,128], index: 2, kind: input, shape index: {}]
  %s3 = inlined_call_operand.vmem [shape: f32[1,128], index: 3, kind: input, shape index: {}]
  %s4 = inlined_call_operand.vmem [shape: bf16[128,128], index: 4, kind: output, shape index: {}]
  %s5 = sld [smem:[#allocation0]]
  $region26: #{forward.8} parent=0
    _
  %s7 = ssub.s32 1, %s5
  %s8 = scalar_select 0, %s7, %s5
  // Predicated region
  $region2: #{forward.8} parent=0 // pred_check
    _
  $region3: #{forward.8} parent=0 // pred_check_branch
    %10 = sbr.rel (0) target = $region5
  $region4: #{forward.8} parent=0 // pred_region
    _
  $region5: #{forward.8} parent=0 // pred_fallthru
    _
  // Predicated region
  $region6: #{forward.8} parent=0 // pred_check
    _
  $region7: #{forward.8} parent=0 // pred_check_branch
    %12 = sbr.rel (0) target = $region9
  $region8: #{forward.8} parent=0 // pred_region
    _
  $region9: #{forward.8} parent=0 // pred_fallthru
    _
  // Predicated region
  $region10: #{forward.8} parent=0 // pred_check
    _
  $region11: #{forward.8} parent=0 // pred_check_branch
    %14 = sbr.rel (0) target = $region13
  $region12: #{forward.8} parent=0 // pred_region
    _
  $region13: #{forward.8} parent=0 // pred_fallthru
    _
  // Predicated region
  $region14: #{forward.8} parent=0 // pred_check
    _
  $region15: #{forward.8} parent=0 // pred_check_branch
    %16 = sbr.rel (0) target = $region17
  $region16: #{forward.8} parent=0 // pred_region
    _
  $region17: #{forward.8} parent=0 // pred_fallthru
    _
  %v18 = vld [vmem:[%s0] sm:$0xf]
  %v19 = vld [vmem:[%s0 + $0x4] sm:$0xf]
  %v20 = vld [vmem:[%s0 + $0x8] sm:$0xf]
  %v21 = vld [vmem:[%s0 + $0xc] sm:$0xf]
  %v22 = vld [vmem:[%s0 + $0x10] sm:$0xf]
  %v23 = vld [vmem:[%s0 + $0x14] sm:$0xf]
  %v24 = vld [vmem:[%s0 + $0x18] sm:$0xf]
  %v25 = vld [vmem:[%s0 + $0x1c] sm:$0xf]
  %v26 = vld [vmem:[%s0 + $0x20] sm:$0xf]
  %v27 = vld [vmem:[%s0 + $0x24] sm:$0xf]
  %v28 = vld [vmem:[%s0 + $0x28] sm:$0xf]
  %v29 = vld [vmem:[%s0 + $0x2c] sm:$0xf]
  %v30 = vld [vmem:[%s0 + $0x30] sm:$0xf]
  %v31 = vld [vmem:[%s0 + $0x34] sm:$0xf]
  %v32 = vld [vmem:[%s0 + $0x38] sm:$0xf]
  %v33 = vld [vmem:[%s0 + $0x3c] sm:$0xf]
  %v34 = vld [vmem:[%s1] sm:$0xf]
  %v35 = vld [vmem:[%s1 + $0x4] sm:$0xf]
  %v36 = vld [vmem:[%s1 + $0x8] sm:$0xf]
  %v37 = vld [vmem:[%s1 + $0xc] sm:$0xf]
  %v38 = vld [vmem:[%s1 + $0x10] sm:$0xf]
  %v39 = vld [vmem:[%s1 + $0x14] sm:$0xf]
  %v40 = vld [vmem:[%s1 + $0x18] sm:$0xf]
  %v41 = vld [vmem:[%s1 + $0x1c] sm:$0xf]
  %v42 = vld [vmem:[%s1 + $0x20] sm:$0xf]
  %v43 = vld [vmem:[%s1 + $0x24] sm:$0xf]
  %v44 = vld [vmem:[%s1 + $0x28] sm:$0xf]
  %v45 = vld [vmem:[%s1 + $0x2c] sm:$0xf]
  %v46 = vld [vmem:[%s1 + $0x30] sm:$0xf]
  %v47 = vld [vmem:[%s1 + $0x34] sm:$0xf]
  %v48 = vld [vmem:[%s1 + $0x38] sm:$0xf]
  %v49 = vld [vmem:[%s1 + $0x3c] sm:$0xf]
  %v66 = vunpack.c.l.b16 %v18
  %v67 = vunpack.c.l.b16 %v19
  %v68 = vunpack.c.l.b16 %v20
  %v69 = vunpack.c.l.b16 %v21
  %v70 = vunpack.c.l.b16 %v22
  %v71 = vunpack.c.l.b16 %v23
  %v72 = vunpack.c.l.b16 %v24
  %v73 = vunpack.c.l.b16 %v25
  %v74 = vunpack.c.l.b16 %v26
  %v75 = vunpack.c.l.b16 %v27
  %v76 = vunpack.c.l.b16 %v28
  %v77 = vunpack.c.l.b16 %v29
  %v78 = vunpack.c.l.b16 %v30
  %v79 = vunpack.c.l.b16 %v31
  %v80 = vunpack.c.l.b16 %v32
  %v81 = vunpack.c.l.b16 %v33
  %v82 = vpack.c.b16 %v67, %v66
  %v83 = vpack.c.b16 %v69, %v68
  %v84 = vpack.c.b16 %v71, %v70
  %v85 = vpack.c.b16 %v73, %v72
  %v86 = vpack.c.b16 %v75, %v74
  %v87 = vpack.c.b16 %v77, %v76
  %v88 = vpack.c.b16 %v79, %v78
  %v89 = vpack.c.b16 %v81, %v80
  %v114 = vunpack.c.l.b16 %v34
  %v115 = vunpack.c.l.b16 %v35
  %v116 = vunpack.c.l.b16 %v36
  %v117 = vunpack.c.l.b16 %v37
  %v118 = vunpack.c.l.b16 %v38
  %v119 = vunpack.c.l.b16 %v39
  %v120 = vunpack.c.l.b16 %v40
  %v121 = vunpack.c.l.b16 %v41
  %v122 = vunpack.c.l.b16 %v42
  %v123 = vunpack.c.l.b16 %v43
  %v124 = vunpack.c.l.b16 %v44
  %v125 = vunpack.c.l.b16 %v45
  %v126 = vunpack.c.l.b16 %v46
  %v127 = vunpack.c.l.b16 %v47
  %v128 = vunpack.c.l.b16 %v48
  %v129 = vunpack.c.l.b16 %v49
  %v130 = vpack.c.b16 %v115, %v114
  %v131 = vpack.c.b16 %v117, %v116
  %v132 = vpack.c.b16 %v119, %v118
  %v133 = vpack.c.b16 %v121, %v120
  %v134 = vpack.c.b16 %v123, %v122
  %v135 = vpack.c.b16 %v125, %v124
  %v136 = vpack.c.b16 %v127, %v126
  %v137 = vpack.c.b16 %v129, %v128
  %146 = vmatprep.subr.bf16.mxu0 0
  %147 = vmatpush1.bf16.msra.mxu0 %v130
  %148 = vmatprep.subr.bf16.mxu0 0
  %149 = vmatpush1.bf16.msra.mxu0 %v131
  %150 = vmatprep.subr.bf16.mxu0 0
  %151 = vmatpush1.bf16.msra.mxu0 %v132
  %152 = vmatprep.subr.bf16.mxu0 0
  %153 = vmatpush1.bf16.msra.mxu0 %v133
  %154 = vmatprep.subr.bf16.mxu0 0
  %155 = vmatpush1.bf16.msra.mxu0 %v134
  %156 = vmatprep.subr.bf16.mxu0 0
  %157 = vmatpush1.bf16.msra.mxu0 %v135
  %158 = vmatprep.subr.bf16.mxu0 0
  %159 = vmatpush1.bf16.msra.mxu0 %v136
  %160 = vmatprep.subr.bf16.mxu0 0
  %161 = vmatpush1.bf16.msra.mxu0 %v137
  %162 = vmatprep.subr.bf16.mxu0 0
  %163 = vmatpush1.bf16.msra.mxu0 0
  %164 = vmatprep.subr.bf16.mxu0 0
  %165 = vmatpush1.bf16.msra.mxu0 0
  %166 = vmatprep.subr.bf16.mxu0 0
  %167 = vmatpush1.bf16.msra.mxu0 0
  %168 = vmatprep.subr.bf16.mxu0 0
  %169 = vmatpush1.bf16.msra.mxu0 0
  %170 = vmatprep.subr.bf16.mxu0 0
  %171 = vmatpush1.bf16.msra.mxu0 0
  %172 = vmatprep.subr.bf16.mxu0 0
  %173 = vmatpush1.bf16.msra.mxu0 0
  %174 = vmatprep.subr.bf16.mxu0 0
  %175 = vmatpush1.bf16.msra.mxu0 0
  %176 = vmatprep.subr.bf16.mxu0 0
  %177 = vmatpush1.bf16.msra.mxu0 0
  %178 = vmatprep.mubr.bf16.mxu0 0
  %179 = vmatmul.mubr.bf16.gmra.mrb[0].mxu0 %v82
  %v180 = vpop.f32.mrb[0].mxu0
  %v181 = vadd.f32 0.0, %v180
  %v182 = vpop.f32.mrb[0].mxu0
  %v183 = vpop.f32.mrb[0].mxu0
  %v184 = vadd.f32 0.0, %v183
  %v185 = vpop.f32.mrb[0].mxu0
  %186 = vmatprep.mubr.bf16.mxu0 0
  %187 = vmatmul.mubr.bf16.gmra.mrb[0].mxu0 %v83
  %v188 = vpop.f32.mrb[0].mxu0
  %v189 = vadd.f32 0.0, %v188
  %v190 = vpop.f32.mrb[0].mxu0
  %v191 = vpop.f32.mrb[0].mxu0
  %v192 = vadd.f32 0.0, %v191
  %v193 = vpop.f32.mrb[0].mxu0
  %194 = vmatprep.mubr.bf16.mxu0 0
  %195 = vmatmul.mubr.bf16.gmra.mrb[0].mxu0 %v84
  %v196 = vpop.f32.mrb[0].mxu0
  %v197 = vadd.f32 0.0, %v196
  %v198 = vpop.f32.mrb[0].mxu0
  %v199 = vpop.f32.mrb[0].mxu0
  %v200 = vadd.f32 0.0, %v199
  %v201 = vpop.f32.mrb[0].mxu0
  %202 = vmatprep.mubr.bf16.mxu0 0
  %203 = vmatmul.mubr.bf16.gmra.mrb[0].mxu0 %v85
  %v204 = vpop.f32.mrb[0].mxu0
  %v205 = vadd.f32 0.0, %v204
  %v206 = vpop.f32.mrb[0].mxu0
  %v207 = vpop.f32.mrb[0].mxu0
  %v208 = vadd.f32 0.0, %v207
  %v209 = vpop.f32.mrb[0].mxu0
  %210 = vmatprep.mubr.bf16.mxu0 0
  %211 = vmatmul.mubr.bf16.gmra.mrb[0].mxu0 %v86
  %v212 = vpop.f32.mrb[0].mxu0
  %v213 = vadd.f32 0.0, %v212
  %v214 = vpop.f32.mrb[0].mxu0
  %v215 = vpop.f32.mrb[0].mxu0
  %v216 = vadd.f32 0.0, %v215
  %v217 = vpop.f32.mrb[0].mxu0
  %218 = vmatprep.mubr.bf16.mxu0 0
  %219 = vmatmul.mubr.bf16.gmra.mrb[0].mxu0 %v87
  %v220 = vpop.f32.mrb[0].mxu0
  %v221 = vadd.f32 0.0, %v220
  %v222 = vpop.f32.mrb[0].mxu0
  %v223 = vpop.f32.mrb[0].mxu0
  %v224 = vadd.f32 0.0, %v223
  %v225 = vpop.f32.mrb[0].mxu0
  %226 = vmatprep.mubr.bf16.mxu0 0
  %227 = vmatmul.mubr.bf16.gmra.mrb[0].mxu0 %v88
  %v228 = vpop.f32.mrb[0].mxu0
  %v229 = vadd.f32 0.0, %v228
  %v230 = vpop.f32.mrb[0].mxu0
  %v231 = vpop.f32.mrb[0].mxu0
  %v232 = vadd.f32 0.0, %v231
  %v233 = vpop.f32.mrb[0].mxu0
  %234 = vmatprep.mubr.bf16.mxu0 0
  %235 = vmatmul.mubr.bf16.gmra.mrb[0].mxu0 %v89
  %v236 = vpop.f32.mrb[0].mxu0
  %v237 = vadd.f32 0.0, %v236
  %v238 = vpop.f32.mrb[0].mxu0
  %v239 = vpop.f32.mrb[0].mxu0
  %v240 = vadd.f32 0.0, %v239
  %v241 = vpop.f32.mrb[0].mxu0
  %242 = vdwg.mxu0
  %v243 = vld [vmem:[%s2] sm:$0x1]
  %v244 = vld [vmem:[%s3] sm:$0x1]
  %245 = vadd.xlane.f32.xlu0 %v181
  %v246 = vpop.xlane.xlu0 %245
  %247 = vadd.xlane.f32.xlu0 %v184
  %v248 = vpop.xlane.xlu0 %247
  %249 = vadd.xlane.f32.xlu0 %v189
  %v250 = vpop.xlane.xlu0 %249
  %251 = vadd.xlane.f32.xlu0 %v192
  %v252 = vpop.xlane.xlu0 %251
  %253 = vadd.xlane.f32.xlu0 %v197
  %v254 = vpop.xlane.xlu0 %253
  %255 = vadd.xlane.f32.xlu0 %v200
  %v256 = vpop.xlane.xlu0 %255
  %257 = vadd.xlane.f32.xlu0 %v205
  %v258 = vpop.xlane.xlu0 %257
  %259 = vadd.xlane.f32.xlu0 %v208
  %v260 = vpop.xlane.xlu0 %259
  %261 = vadd.xlane.f32.xlu0 %v213
  %v262 = vpop.xlane.xlu0 %261
  %263 = vadd.xlane.f32.xlu0 %v216
  %v264 = vpop.xlane.xlu0 %263
  %265 = vadd.xlane.f32.xlu0 %v221
  %v266 = vpop.xlane.xlu0 %265
  %267 = vadd.xlane.f32.xlu0 %v224
  %v268 = vpop.xlane.xlu0 %267
  %269 = vadd.xlane.f32.xlu0 %v229
  %v270 = vpop.xlane.xlu0 %269
  %271 = vadd.xlane.f32.xlu0 %v232
  %v272 = vpop.xlane.xlu0 %271
  %273 = vadd.xlane.f32.xlu0 %v237
  %v274 = vpop.xlane.xlu0 %273
  %275 = vadd.xlane.f32.xlu0 %v240
  %v276 = vpop.xlane.xlu0 %275
  %v277 = vmul.f32 %v181, %v181
  %v278 = vmul.f32 %v184, %v184
  %v279 = vmul.f32 %v189, %v189
  %v280 = vmul.f32 %v192, %v192
  %v281 = vmul.f32 %v197, %v197
  %v282 = vmul.f32 %v200, %v200
  %v283 = vmul.f32 %v205, %v205
  %v284 = vmul.f32 %v208, %v208
  %v285 = vmul.f32 %v213, %v213
  %v286 = vmul.f32 %v216, %v216
  %v287 = vmul.f32 %v221, %v221
  %v288 = vmul.f32 %v224, %v224
  %v289 = vmul.f32 %v229, %v229
  %v290 = vmul.f32 %v232, %v232
  %v291 = vmul.f32 %v237, %v237
  %v292 = vmul.f32 %v240, %v240
  %293 = vadd.xlane.f32.xlu0 %v277
  %v294 = vpop.xlane.xlu0 %293
  %295 = vadd.xlane.f32.xlu0 %v278
  %v296 = vpop.xlane.xlu0 %295
  %297 = vadd.xlane.f32.xlu0 %v279
  %v298 = vpop.xlane.xlu0 %297
  %299 = vadd.xlane.f32.xlu0 %v280
  %v300 = vpop.xlane.xlu0 %299
  %301 = vadd.xlane.f32.xlu0 %v281
  %v302 = vpop.xlane.xlu0 %301
  %303 = vadd.xlane.f32.xlu0 %v282
  %v304 = vpop.xlane.xlu0 %303
  %305 = vadd.xlane.f32.xlu0 %v283
  %v306 = vpop.xlane.xlu0 %305
  %307 = vadd.xlane.f32.xlu0 %v284
  %v308 = vpop.xlane.xlu0 %307
  %309 = vadd.xlane.f32.xlu0 %v285
  %v310 = vpop.xlane.xlu0 %309
  %311 = vadd.xlane.f32.xlu0 %v286
  %v312 = vpop.xlane.xlu0 %311
  %313 = vadd.xlane.f32.xlu0 %v287
  %v314 = vpop.xlane.xlu0 %313
  %315 = vadd.xlane.f32.xlu0 %v288
  %v316 = vpop.xlane.xlu0 %315
  %317 = vadd.xlane.f32.xlu0 %v289
  %v318 = vpop.xlane.xlu0 %317
  %319 = vadd.xlane.f32.xlu0 %v290
  %v320 = vpop.xlane.xlu0 %319
  %321 = vadd.xlane.f32.xlu0 %v291
  %v322 = vpop.xlane.xlu0 %321
  %323 = vadd.xlane.f32.xlu0 %v292
  %v324 = vpop.xlane.xlu0 %323
  %v325 = vmul.f32 %v246, 0.03125
  %v326 = vmul.f32 %v248, 0.03125
  %v327 = vmul.f32 %v250, 0.03125
  %v328 = vmul.f32 %v252, 0.03125
  %v329 = vmul.f32 %v254, 0.03125
  %v330 = vmul.f32 %v256, 0.03125
  %v331 = vmul.f32 %v258, 0.03125
  %v332 = vmul.f32 %v260, 0.03125
  %v333 = vmul.f32 %v262, 0.03125
  %v334 = vmul.f32 %v264, 0.03125
  %v335 = vmul.f32 %v266, 0.03125
  %v336 = vmul.f32 %v268, 0.03125
  %v337 = vmul.f32 %v270, 0.03125
  %v338 = vmul.f32 %v272, 0.03125
  %v339 = vmul.f32 %v274, 0.03125
  %v340 = vmul.f32 %v276, 0.03125
  %v341 = vmul.f32 %v294, 0.03125
  %v342 = vmul.f32 %v296, 0.03125
  %v343 = vmul.f32 %v298, 0.03125
  %v344 = vmul.f32 %v300, 0.03125
  %v345 = vmul.f32 %v302, 0.03125
  %v346 = vmul.f32 %v304, 0.03125
  %v347 = vmul.f32 %v306, 0.03125
  %v348 = vmul.f32 %v308, 0.03125
  %v349 = vmul.f32 %v310, 0.03125
  %v350 = vmul.f32 %v312, 0.03125
  %v351 = vmul.f32 %v314, 0.03125
  %v352 = vmul.f32 %v316, 0.03125
  %v353 = vmul.f32 %v318, 0.03125
  %v354 = vmul.f32 %v320, 0.03125
  %v355 = vmul.f32 %v322, 0.03125
  %v356 = vmul.f32 %v324, 0.03125
  %v357 = vmul.f32 %v325, %v325
  %v358 = vmul.f32 %v326, %v326
  %v359 = vmul.f32 %v327, %v327
  %v360 = vmul.f32 %v328, %v328
  %v361 = vmul.f32 %v329, %v329
  %v362 = vmul.f32 %v330, %v330
  %v363 = vmul.f32 %v331, %v331
  %v364 = vmul.f32 %v332, %v332
  %v365 = vmul.f32 %v333, %v333
  %v366 = vmul.f32 %v334, %v334
  %v367 = vmul.f32 %v335, %v335
  %v368 = vmul.f32 %v336, %v336
  %v369 = vmul.f32 %v337, %v337
  %v370 = vmul.f32 %v338, %v338
  %v371 = vmul.f32 %v339, %v339
  %v372 = vmul.f32 %v340, %v340
  %v373 = vsub.f32 %v341, %v357
  %v374 = vsub.f32 %v342, %v358
  %v375 = vsub.f32 %v343, %v359
  %v376 = vsub.f32 %v344, %v360
  %v377 = vsub.f32 %v345, %v361
  %v378 = vsub.f32 %v346, %v362
  %v379 = vsub.f32 %v347, %v363
  %v380 = vsub.f32 %v348, %v364
  %v381 = vsub.f32 %v349, %v365
  %v382 = vsub.f32 %v350, %v366
  %v383 = vsub.f32 %v351, %v367
  %v384 = vsub.f32 %v352, %v368
  %v385 = vsub.f32 %v353, %v369
  %v386 = vsub.f32 %v354, %v370
  %v387 = vsub.f32 %v355, %v371
  %v388 = vsub.f32 %v356, %v372
  %v389 = vsub.f32 %v181, %v325
  %v390 = vsub.f32 %v184, %v326
  %v391 = vsub.f32 %v189, %v327
  %v392 = vsub.f32 %v192, %v328
  %v393 = vsub.f32 %v197, %v329
  %v394 = vsub.f32 %v200, %v330
  %v395 = vsub.f32 %v205, %v331
  %v396 = vsub.f32 %v208, %v332
  %v397 = vsub.f32 %v213, %v333
  %v398 = vsub.f32 %v216, %v334
  %v399 = vsub.f32 %v221, %v335
  %v400 = vsub.f32 %v224, %v336
  %v401 = vsub.f32 %v229, %v337
  %v402 = vsub.f32 %v232, %v338
  %v403 = vsub.f32 %v237, %v339
  %v404 = vsub.f32 %v240, %v340
  %v405 = vadd.f32 %v373, 1e-05
  %v406 = vadd.f32 %v374, 1e-05
  %v407 = vadd.f32 %v375, 1e-05
  %v408 = vadd.f32 %v376, 1e-05
  %v409 = vadd.f32 %v377, 1e-05
  %v410 = vadd.f32 %v378, 1e-05
  %v411 = vadd.f32 %v379, 1e-05
  %v412 = vadd.f32 %v380, 1e-05
  %v413 = vadd.f32 %v381, 1e-05
  %v414 = vadd.f32 %v382, 1e-05
  %v415 = vadd.f32 %v383, 1e-05
  %v416 = vadd.f32 %v384, 1e-05
  %v417 = vadd.f32 %v385, 1e-05
  %v418 = vadd.f32 %v386, 1e-05
  %v419 = vadd.f32 %v387, 1e-05
  %v420 = vadd.f32 %v388, 1e-05
  %v421 = vrsqrt.pop %v405
  %v422 = vrsqrt.pop %v406
  %v423 = vrsqrt.pop %v407
  %v424 = vrsqrt.pop %v408
  %v425 = vrsqrt.pop %v409
  %v426 = vrsqrt.pop %v410
  %v427 = vrsqrt.pop %v411
  %v428 = vrsqrt.pop %v412
  %v429 = vrsqrt.pop %v413
  %v430 = vrsqrt.pop %v414
  %v431 = vrsqrt.pop %v415
  %v432 = vrsqrt.pop %v416
  %v433 = vrsqrt.pop %v417
  %v434 = vrsqrt.pop %v418
  %v435 = vrsqrt.pop %v419
  %v436 = vrsqrt.pop %v420
  %v437 = vmul.f32 %v389, %v421
  %v438 = vmul.f32 %v390, %v422
  %v439 = vmul.f32 %v391, %v423
  %v440 = vmul.f32 %v392, %v424
  %v441 = vmul.f32 %v393, %v425
  %v442 = vmul.f32 %v394, %v426
  %v443 = vmul.f32 %v395, %v427
  %v444 = vmul.f32 %v396, %v428
  %v445 = vmul.f32 %v397, %v429
  %v446 = vmul.f32 %v398, %v430
  %v447 = vmul.f32 %v399, %v431
  %v448 = vmul.f32 %v400, %v432
  %v449 = vmul.f32 %v401, %v433
  %v450 = vmul.f32 %v402, %v434
  %v451 = vmul.f32 %v403, %v435
  %v452 = vmul.f32 %v404, %v436
  %v454 = vlaneseq
  %v455 = vshrl.u32 %v454, 7
  %v456 = vsub.s32 0, %v455
  %v457 = vrot.slane %v243, %v456
  %v459 = vmul.f32 %v437, %v457
  %v460 = vmul.f32 %v438, %v457
  %v461 = vmul.f32 %v439, %v457
  %v462 = vmul.f32 %v440, %v457
  %v463 = vmul.f32 %v441, %v457
  %v464 = vmul.f32 %v442, %v457
  %v465 = vmul.f32 %v443, %v457
  %v466 = vmul.f32 %v444, %v457
  %v467 = vmul.f32 %v445, %v457
  %v468 = vmul.f32 %v446, %v457
  %v469 = vmul.f32 %v447, %v457
  %v470 = vmul.f32 %v448, %v457
  %v471 = vmul.f32 %v449, %v457
  %v472 = vmul.f32 %v450, %v457
  %v473 = vmul.f32 %v451, %v457
  %v474 = vmul.f32 %v452, %v457
  %v476 = vlaneseq
  %v477 = vshrl.u32 %v476, 7
  %v478 = vsub.s32 0, %v477
  %v479 = vrot.slane %v244, %v478
  %v481 = vadd.f32 %v459, %v479
  %v482 = vadd.f32 %v460, %v479
  %v483 = vadd.f32 %v461, %v479
  %v484 = vadd.f32 %v462, %v479
  %v485 = vadd.f32 %v463, %v479
  %v486 = vadd.f32 %v464, %v479
  %v487 = vadd.f32 %v465, %v479
  %v488 = vadd.f32 %v466, %v479
  %v489 = vadd.f32 %v467, %v479
  %v490 = vadd.f32 %v468, %v479
  %v491 = vadd.f32 %v469, %v479
  %v492 = vadd.f32 %v470, %v479
  %v493 = vadd.f32 %v471, %v479
  %v494 = vadd.f32 %v472, %v479
  %v495 = vadd.f32 %v473, %v479
  %v496 = vadd.f32 %v474, %v479
  %v497 = vpack.c.bf16 %v482, %v481
  %v498 = vpack.c.bf16 %v484, %v483
  %v499 = vpack.c.bf16 %v486, %v485
  %v500 = vpack.c.bf16 %v488, %v487
  %v501 = vpack.c.bf16 %v490, %v489
  %v502 = vpack.c.bf16 %v492, %v491
  %v503 = vpack.c.bf16 %v494, %v493
  %v504 = vpack.c.bf16 %v496, %v495
  %v513 = vunpack.c.l.b16 %v497
  %v514 = vunpack.c.h.b16 %v497
  %v515 = vunpack.c.l.b16 %v498
  %v516 = vunpack.c.h.b16 %v498
  %v517 = vunpack.c.l.b16 %v499
  %v518 = vunpack.c.h.b16 %v499
  %v519 = vunpack.c.l.b16 %v500
  %v520 = vunpack.c.h.b16 %v500
  %v521 = vunpack.c.l.b16 %v501
  %v522 = vunpack.c.h.b16 %v501
  %v523 = vunpack.c.l.b16 %v502
  %v524 = vunpack.c.h.b16 %v502
  %v525 = vunpack.c.l.b16 %v503
  %v526 = vunpack.c.h.b16 %v503
  %v527 = vunpack.c.l.b16 %v504
  %v528 = vunpack.c.h.b16 %v504
  %v529 = vpack.c.b16 %v513, %v513
  %v530 = vpack.c.b16 %v514, %v514
  %v531 = vpack.c.b16 %v515, %v515
  %v532 = vpack.c.b16 %v516, %v516
  %v533 = vpack.c.b16 %v517, %v517
  %v534 = vpack.c.b16 %v518, %v518
  %v535 = vpack.c.b16 %v519, %v519
  %v536 = vpack.c.b16 %v520, %v520
  %v537 = vpack.c.b16 %v521, %v521
  %v538 = vpack.c.b16 %v522, %v522
  %v539 = vpack.c.b16 %v523, %v523
  %v540 = vpack.c.b16 %v524, %v524
  %v541 = vpack.c.b16 %v525, %v525
  %v542 = vpack.c.b16 %v526, %v526
  %v543 = vpack.c.b16 %v527, %v527
  %v544 = vpack.c.b16 %v528, %v528
  %561 = vst [vmem:[%s4] sm:$0xf] %v529
  %562 = vst [vmem:[%s4 + $0x4] sm:$0xf] %v530
  %563 = vst [vmem:[%s4 + $0x8] sm:$0xf] %v531
  %564 = vst [vmem:[%s4 + $0xc] sm:$0xf] %v532
  %565 = vst [vmem:[%s4 + $0x10] sm:$0xf] %v533
  %566 = vst [vmem:[%s4 + $0x14] sm:$0xf] %v534
  %567 = vst [vmem:[%s4 + $0x18] sm:$0xf] %v535
  %568 = vst [vmem:[%s4 + $0x1c] sm:$0xf] %v536
  %569 = vst [vmem:[%s4 + $0x20] sm:$0xf] %v537
  %570 = vst [vmem:[%s4 + $0x24] sm:$0xf] %v538
  %571 = vst [vmem:[%s4 + $0x28] sm:$0xf] %v539
  %572 = vst [vmem:[%s4 + $0x2c] sm:$0xf] %v540
  %573 = vst [vmem:[%s4 + $0x30] sm:$0xf] %v541
  %574 = vst [vmem:[%s4 + $0x34] sm:$0xf] %v542
  %575 = vst [vmem:[%s4 + $0x38] sm:$0xf] %v543
  %576 = vst [vmem:[%s4 + $0x3c] sm:$0xf] %v544
  // Predicated region
  $region18: #{forward.8} parent=0 // pred_check
    _
  $region19: #{forward.8} parent=0 // pred_check_branch
    %578 = sbr.rel (0) target = $region21
  $region20: #{forward.8} parent=0 // pred_region
    _
  $region21: #{forward.8} parent=0 // pred_fallthru
    _
  // Predicated region
  $region22: #{forward.8} parent=0 // pred_check
    _
  $region23: #{forward.8} parent=0 // pred_check_branch
    %580 = sbr.rel (0) target = $region25
  $region24: #{forward.8} parent=0 // pred_region
    _
  $region25: #{forward.8} parent=0 // pred_fallthru
    _

// kernel: forward.13
$region0: #{forward.13}
  #allocation0 [shape = 'u32[]', space=smem, size = 0x4, offset = 0x4, fixed_abs, tag = 'smem constant byte address 0x4 - core index']
  #allocation1 [shape = 'u32[144,128]{1,0:T(1,128)}', space=vmem, size = 0x12000, scoped, tag = 'internal scratch']
  #allocation2 [shape = 'f32[1,1]{1,0:T(1,128)S(1)}', space=vmem, size = 0x200, scoped, tag = 'scoped memory for forward.13']
  %s0 = inlined_call_operand.vmem [shape: bf16[128,128], index: 0, kind: input, shape index: {}]
  %s1 = inlined_call_operand.vmem [shape: s32[1,128], index: 1, kind: input, shape index: {}]
  %s2 = inlined_call_operand.vmem [shape: f32[1,128], index: 2, kind: input, shape index: {}]
  %s3 = inlined_call_operand.vmem [shape: f32[128,128], index: 3, kind: input, shape index: {}]
  %s4 = inlined_call_operand.vmem [shape: f32[1,128], index: 4, kind: input, shape index: {}]
  %s5 = inlined_call_operand.vmem [shape: f32[128,1], index: 5, kind: input, shape index: {}]
  %s6 = inlined_call_operand.<no memory space> [shape: f32[1,1], index: 6, kind: input, shape index: {}]
  %s7 = inlined_call_operand.vmem [shape: f32[8,1], index: 7, kind: output, shape index: {}]
  %s8 = sld [smem:[#allocation0]]
  $region38: #{forward.13} parent=0
    _
  %s10 = ssub.s32 1, %s8
  %s11 = scalar_select 0, %s10, %s8
  %v12 = vstv %s6
  %13 = vst [vmem:[#allocation2] sm:$0x1] %v12
  // Predicated region
  $region2: #{forward.13} parent=0 // pred_check
    _
  $region3: #{forward.13} parent=0 // pred_check_branch
    %15 = sbr.rel (0) target = $region5
  $region4: #{forward.13} parent=0 // pred_region
    _
  $region5: #{forward.13} parent=0 // pred_fallthru
    _
  // Predicated region
  $region6: #{forward.13} parent=0 // pred_check
    _
  $region7: #{forward.13} parent=0 // pred_check_branch
    %17 = sbr.rel (0) target = $region9
  $region8: #{forward.13} parent=0 // pred_region
    _
  $region9: #{forward.13} parent=0 // pred_fallthru
    _
  // Predicated region
  $region10: #{forward.13} parent=0 // pred_check
    _
  $region11: #{forward.13} parent=0 // pred_check_branch
    %19 = sbr.rel (0) target = $region13
  $region12: #{forward.13} parent=0 // pred_region
    _
  $region13: #{forward.13} parent=0 // pred_fallthru
    _
  // Predicated region
  $region14: #{forward.13} parent=0 // pred_check
    _
  $region15: #{forward.13} parent=0 // pred_check_branch
    %21 = sbr.rel (0) target = $region17
  $region16: #{forward.13} parent=0 // pred_region
    _
  $region17: #{forward.13} parent=0 // pred_fallthru
    _
  // Predicated region
  $region18: #{forward.13} parent=0 // pred_check
    _
  $region19: #{forward.13} parent=0 // pred_check_branch
    %23 = sbr.rel (0) target = $region21
  $region20: #{forward.13} parent=0 // pred_region
    _
  $region21: #{forward.13} parent=0 // pred_fallthru
    _
  // Predicated region
  $region22: #{forward.13} parent=0 // pred_check
    _
  $region23: #{forward.13} parent=0 // pred_check_branch
    %25 = sbr.rel (0) target = $region25
  $region24: #{forward.13} parent=0 // pred_region
    _
  $region25: #{forward.13} parent=0 // pred_fallthru
    _
  // Predicated region
  $region26: #{forward.13} parent=0 // pred_check
    _
  $region27: #{forward.13} parent=0 // pred_check_branch
    %27 = sbr.rel (0) target = $region29
  $region28: #{forward.13} parent=0 // pred_region
    _
  $region29: #{forward.13} parent=0 // pred_fallthru
    _
  %v28 = vld [vmem:[%s0] sm:$0xf]
  %v29 = vld [vmem:[%s0 + $0x4] sm:$0xf]
  %v30 = vld [vmem:[%s0 + $0x8] sm:$0xf]
  %v31 = vld [vmem:[%s0 + $0xc] sm:$0xf]
  %v32 = vld [vmem:[%s0 + $0x10] sm:$0xf]
  %v33 = vld [vmem:[%s0 + $0x14] sm:$0xf]
  %v34 = vld [vmem:[%s0 + $0x18] sm:$0xf]
  %v35 = vld [vmem:[%s0 + $0x1c] sm:$0xf]
  %v36 = vld [vmem:[%s0 + $0x20] sm:$0xf]
  %v37 = vld [vmem:[%s0 + $0x24] sm:$0xf]
  %v38 = vld [vmem:[%s0 + $0x28] sm:$0xf]
  %v39 = vld [vmem:[%s0 + $0x2c] sm:$0xf]
  %v40 = vld [vmem:[%s0 + $0x30] sm:$0xf]
  %v41 = vld [vmem:[%s0 + $0x34] sm:$0xf]
  %v42 = vld [vmem:[%s0 + $0x38] sm:$0xf]
  %v43 = vld [vmem:[%s0 + $0x3c] sm:$0xf]
  %v44 = vunpack.c.l.bf16 %v28
  %v45 = vunpack.c.l.bf16 %v29
  %v46 = vunpack.c.l.bf16 %v30
  %v47 = vunpack.c.l.bf16 %v31
  %v48 = vunpack.c.l.bf16 %v32
  %v49 = vunpack.c.l.bf16 %v33
  %v50 = vunpack.c.l.bf16 %v34
  %v51 = vunpack.c.l.bf16 %v35
  %v52 = vunpack.c.l.bf16 %v36
  %v53 = vunpack.c.l.bf16 %v37
  %v54 = vunpack.c.l.bf16 %v38
  %v55 = vunpack.c.l.bf16 %v39
  %v56 = vunpack.c.l.bf16 %v40
  %v57 = vunpack.c.l.bf16 %v41
  %v58 = vunpack.c.l.bf16 %v42
  %v59 = vunpack.c.l.bf16 %v43
  %v60 = vld [vmem:[%s2] sm:$0x1]
  %61 = vmatprep.subr.mxu0 0.0
  %62 = vmatpush1.xpose.msra.mxu0 %v44
  %63 = vmatprep.subr.mxu0 0.0
  %64 = vmatpush1.xpose.msra.mxu0 %v45
  %65 = vmatprep.subr.mxu0 0.0
  %66 = vmatpush1.xpose.msra.mxu0 %v46
  %67 = vmatprep.subr.mxu0 0.0
  %68 = vmatpush1.xpose.msra.mxu0 %v47
  %69 = vmatprep.subr.mxu0 0.0
  %70 = vmatpush1.xpose.msra.mxu0 %v48
  %71 = vmatprep.subr.mxu0 0.0
  %72 = vmatpush1.xpose.msra.mxu0 %v49
  %73 = vmatprep.subr.mxu0 0.0
  %74 = vmatpush1.xpose.msra.mxu0 %v50
  %75 = vmatprep.subr.mxu0 0.0
  %76 = vmatpush1.xpose.msra.mxu0 %v51
  %77 = vmatprep.subr.mxu0 0.0
  %78 = vmatpush1.xpose.msra.mxu0 %v52
  %79 = vmatprep.subr.mxu0 0.0
  %80 = vmatpush1.xpose.msra.mxu0 %v53
  %81 = vmatprep.subr.mxu0 0.0
  %82 = vmatpush1.xpose.msra.mxu0 %v54
  %83 = vmatprep.subr.mxu0 0.0
  %84 = vmatpush1.xpose.msra.mxu0 %v55
  %85 = vmatprep.subr.mxu0 0.0
  %86 = vmatpush1.xpose.msra.mxu0 %v56
  %87 = vmatprep.subr.mxu0 0.0
  %88 = vmatpush1.xpose.msra.mxu0 %v57
  %89 = vmatprep.subr.mxu0 0.0
  %90 = vmatpush1.xpose.msra.mxu0 %v58
  %91 = vmatprep.subr.mxu0 0.0
  %92 = vmatpush1.xpose.msra.mxu0 %v59
  %93 = vmatprep.subr.mxu0 0.0
  %94 = vmatpush1.xpose.msra.mxu0 0.0
  %95 = vmatprep.subr.mxu0 0.0
  %96 = vmatpush1.xpose.msra.mxu0 0.0
  %97 = vmatprep.subr.mxu0 0.0
  %98 = vmatpush1.xpose.msra.mxu0 0.0
  %99 = vmatprep.subr.mxu0 0.0
  %100 = vmatpush1.xpose.msra.mxu0 0.0
  %101 = vmatprep.subr.mxu0 0.0
  %102 = vmatpush1.xpose.msra.mxu0 0.0
  %103 = vmatprep.subr.mxu0 0.0
  %104 = vmatpush1.xpose.msra.mxu0 0.0
  %105 = vmatprep.subr.mxu0 0.0
  %106 = vmatpush1.xpose.msra.mxu0 0.0
  %107 = vmatprep.subr.mxu0 0.0
  %108 = vmatpush1.xpose.msra.mxu0 0.0
  %109 = vmatprep.subr.mxu0 0.0
  %110 = vmatpush1.xpose.msra.mxu0 0.0
  %111 = vmatprep.subr.mxu0 0.0
  %112 = vmatpush1.xpose.msra.mxu0 0.0
  %113 = vmatprep.subr.mxu0 0.0
  %114 = vmatpush1.xpose.msra.mxu0 0.0
  %115 = vmatprep.subr.mxu0 0.0
  %116 = vmatpush1.xpose.msra.mxu0 0.0
  %117 = vmatprep.subr.mxu0 0.0
  %118 = vmatpush1.xpose.msra.mxu0 0.0
  %119 = vmatprep.subr.mxu0 0.0
  %120 = vmatpush1.xpose.msra.mxu0 0.0
  %121 = vmatprep.subr.mxu0 0.0
  %122 = vmatpush1.xpose.msra.mxu0 0.0
  %123 = vmatprep.subr.mxu0 0.0
  %124 = vmatpush1.xpose.msra.mxu0 0.0
  %125 = vmatprep.mubr.f32.mxu0 0.0
  %126 = vmatmul.mubr.f32.gmra.mrb[0].mxu0 %v60
  %v127 = vpop.f32.mrb[0].mxu0
  %v128 = vadd.f32 0.0, %v127
  %v129 = vpop.f32.mrb[0].mxu0
  %130 = vdwg.mxu0
  %v131 = vlaneseq
  %v132 = vshrl.u32 %v131, 7
  %v133 = vld [vmem:[%s1] sm:$0x1]
  %v134 = vlaneseq
  %v135 = vshrl.u32 %v134, 7
  %v136 = vsub.s32 0, %v135
  %v137 = vrot.slane %v133, %v136
  %vm138 = vcmp.eq.s32.totalorder %v137, %v132
  %v139 = vsel %vm138, 1, 0
  %v140 = vcvt.s32.f32 %v139
  %vm141 = vcmp.gt.f32.partialorder %v140, 0.0
  %v142 = vlaneseq
  %v143 = vshrl.u32 %v142, 7
  %v144 = vsub.s32 0, %v143
  %v145 = vrot.slane %v128, %v144
  %v146 = vsel %vm141, %v145, -1e+30
  %147 = vmax.xlane.f32.xlu0 %v146
  %v148 = vpop.xlane.xlu0 %147
  %v149 = vsub.f32 %v146, %v148
  %v150 = vmul.f32 %v149, 1.442695
  %v151 = vpow.pop %v150
  %v152 = vmul.f32 %v151, %v140
  %153 = vadd.xlane.f32.xlu0 %v152
  %v154 = vpop.xlane.xlu0 %153
  %v155 = vadd.f32 %v154, 1e-20
  %v156 = vrcp.pop %v155
  %v157 = vmul.f32 %v152, %v156
  %158 = vmatprep.subr.mxu0 0.0
  %159 = vmatpush1.msra.mxu0 %v44
  %160 = vmatprep.subr.mxu0 0.0
  %161 = vmatpush1.msra.mxu0 %v45
  %162 = vmatprep.subr.mxu0 0.0
  %163 = vmatpush1.msra.mxu0 %v46
  %164 = vmatprep.subr.mxu0 0.0
  %165 = vmatpush1.msra.mxu0 %v47
  %166 = vmatprep.subr.mxu0 0.0
  %167 = vmatpush1.msra.mxu0 %v48
  %168 = vmatprep.subr.mxu0 0.0
  %169 = vmatpush1.msra.mxu0 %v49
  %170 = vmatprep.subr.mxu0 0.0
  %171 = vmatpush1.msra.mxu0 %v50
  %172 = vmatprep.subr.mxu0 0.0
  %173 = vmatpush1.msra.mxu0 %v51
  %174 = vmatprep.subr.mxu0 0.0
  %175 = vmatpush1.msra.mxu0 %v52
  %176 = vmatprep.subr.mxu0 0.0
  %177 = vmatpush1.msra.mxu0 %v53
  %178 = vmatprep.subr.mxu0 0.0
  %179 = vmatpush1.msra.mxu0 %v54
  %180 = vmatprep.subr.mxu0 0.0
  %181 = vmatpush1.msra.mxu0 %v55
  %182 = vmatprep.subr.mxu0 0.0
  %183 = vmatpush1.msra.mxu0 %v56
  %184 = vmatprep.subr.mxu0 0.0
  %185 = vmatpush1.msra.mxu0 %v57
  %186 = vmatprep.subr.mxu0 0.0
  %187 = vmatpush1.msra.mxu0 %v58
  %188 = vmatprep.subr.mxu0 0.0
  %189 = vmatpush1.msra.mxu0 %v59
  %190 = vmatprep.subr.mxu0 0.0
  %191 = vmatpush1.msra.mxu0 0.0
  %192 = vmatprep.subr.mxu0 0.0
  %193 = vmatpush1.msra.mxu0 0.0
  %194 = vmatprep.subr.mxu0 0.0
  %195 = vmatpush1.msra.mxu0 0.0
  %196 = vmatprep.subr.mxu0 0.0
  %197 = vmatpush1.msra.mxu0 0.0
  %198 = vmatprep.subr.mxu0 0.0
  %199 = vmatpush1.msra.mxu0 0.0
  %200 = vmatprep.subr.mxu0 0.0
  %201 = vmatpush1.msra.mxu0 0.0
  %202 = vmatprep.subr.mxu0 0.0
  %203 = vmatpush1.msra.mxu0 0.0
  %204 = vmatprep.subr.mxu0 0.0
  %205 = vmatpush1.msra.mxu0 0.0
  %206 = vmatprep.subr.mxu0 0.0
  %207 = vmatpush1.msra.mxu0 0.0
  %208 = vmatprep.subr.mxu0 0.0
  %209 = vmatpush1.msra.mxu0 0.0
  %210 = vmatprep.subr.mxu0 0.0
  %211 = vmatpush1.msra.mxu0 0.0
  %212 = vmatprep.subr.mxu0 0.0
  %213 = vmatpush1.msra.mxu0 0.0
  %214 = vmatprep.subr.mxu0 0.0
  %215 = vmatpush1.msra.mxu0 0.0
  %216 = vmatprep.subr.mxu0 0.0
  %217 = vmatpush1.msra.mxu0 0.0
  %218 = vmatprep.subr.mxu0 0.0
  %219 = vmatpush1.msra.mxu0 0.0
  %220 = vmatprep.subr.mxu0 0.0
  %221 = vmatpush1.msra.mxu0 0.0
  %222 = vmatprep.mubr.f32.mxu0 0.0
  %223 = vmatmul.mubr.f32.gmra.mrb[0].mxu0 %v157
  %v224 = vpop.f32.mrb[0].mxu0
  %v225 = vadd.f32 0.0, %v224
  %v226 = vpop.f32.mrb[0].mxu0
  %227 = vdwg.mxu0
  %v228 = vld [vmem:[%s3] sm:$0xff]
  %v229 = vld [vmem:[%s3 + $0x8] sm:$0xff]
  %v230 = vld [vmem:[%s3 + $0x10] sm:$0xff]
  %v231 = vld [vmem:[%s3 + $0x18] sm:$0xff]
  %v232 = vld [vmem:[%s3 + $0x20] sm:$0xff]
  %v233 = vld [vmem:[%s3 + $0x28] sm:$0xff]
  %v234 = vld [vmem:[%s3 + $0x30] sm:$0xff]
  %v235 = vld [vmem:[%s3 + $0x38] sm:$0xff]
  %v236 = vld [vmem:[%s3 + $0x40] sm:$0xff]
  %v237 = vld [vmem:[%s3 + $0x48] sm:$0xff]
  %v238 = vld [vmem:[%s3 + $0x50] sm:$0xff]
  %v239 = vld [vmem:[%s3 + $0x58] sm:$0xff]
  %v240 = vld [vmem:[%s3 + $0x60] sm:$0xff]
  %v241 = vld [vmem:[%s3 + $0x68] sm:$0xff]
  %v242 = vld [vmem:[%s3 + $0x70] sm:$0xff]
  %v243 = vld [vmem:[%s3 + $0x78] sm:$0xff]
  %v244 = vld [vmem:[%s4] sm:$0x1]
  %v246 = vlaneseq
  %v247 = vshrl.u32 %v246, 7
  %v248 = vsub.s32 0, %v247
  %v249 = vrot.slane %v244, %v248
  %251 = vmatprep.subr.mxu0 0.0
  %252 = vmatpush1.msra.mxu0 %v228
  %253 = vmatprep.subr.mxu0 0.0
  %254 = vmatpush1.msra.mxu0 %v229
  %255 = vmatprep.subr.mxu0 0.0
  %256 = vmatpush1.msra.mxu0 %v230
  %257 = vmatprep.subr.mxu0 0.0
  %258 = vmatpush1.msra.mxu0 %v231
  %259 = vmatprep.subr.mxu0 0.0
  %260 = vmatpush1.msra.mxu0 %v232
  %261 = vmatprep.subr.mxu0 0.0
  %262 = vmatpush1.msra.mxu0 %v233
  %263 = vmatprep.subr.mxu0 0.0
  %264 = vmatpush1.msra.mxu0 %v234
  %265 = vmatprep.subr.mxu0 0.0
  %266 = vmatpush1.msra.mxu0 %v235
  %267 = vmatprep.subr.mxu0 0.0
  %268 = vmatpush1.msra.mxu0 %v236
  %269 = vmatprep.subr.mxu0 0.0
  %270 = vmatpush1.msra.mxu0 %v237
  %271 = vmatprep.subr.mxu0 0.0
  %272 = vmatpush1.msra.mxu0 %v238
  %273 = vmatprep.subr.mxu0 0.0
  %274 = vmatpush1.msra.mxu0 %v239
  %275 = vmatprep.subr.mxu0 0.0
  %276 = vmatpush1.msra.mxu0 %v240
  %277 = vmatprep.subr.mxu0 0.0
  %278 = vmatpush1.msra.mxu0 %v241
  %279 = vmatprep.subr.mxu0 0.0
  %280 = vmatpush1.msra.mxu0 %v242
  %281 = vmatprep.subr.mxu0 0.0
  %282 = vmatpush1.msra.mxu0 %v243
  %283 = vmatprep.subr.mxu0 0.0
  %284 = vmatpush1.msra.mxu0 0.0
  %285 = vmatprep.subr.mxu0 0.0
  %286 = vmatpush1.msra.mxu0 0.0
  %287 = vmatprep.subr.mxu0 0.0
  %288 = vmatpush1.msra.mxu0 0.0
  %289 = vmatprep.subr.mxu0 0.0
  %290 = vmatpush1.msra.mxu0 0.0
  %291 = vmatprep.subr.mxu0 0.0
  %292 = vmatpush1.msra.mxu0 0.0
  %293 = vmatprep.subr.mxu0 0.0
  %294 = vmatpush1.msra.mxu0 0.0
  %295 = vmatprep.subr.mxu0 0.0
  %296 = vmatpush1.msra.mxu0 0.0
  %297 = vmatprep.subr.mxu0 0.0
  %298 = vmatpush1.msra.mxu0 0.0
  %299 = vmatprep.subr.mxu0 0.0
  %300 = vmatpush1.msra.mxu0 0.0
  %301 = vmatprep.subr.mxu0 0.0
  %302 = vmatpush1.msra.mxu0 0.0
  %303 = vmatprep.subr.mxu0 0.0
  %304 = vmatpush1.msra.mxu0 0.0
  %305 = vmatprep.subr.mxu0 0.0
  %306 = vmatpush1.msra.mxu0 0.0
  %307 = vmatprep.subr.mxu0 0.0
  %308 = vmatpush1.msra.mxu0 0.0
  %309 = vmatprep.subr.mxu0 0.0
  %310 = vmatpush1.msra.mxu0 0.0
  %311 = vmatprep.subr.mxu0 0.0
  %312 = vmatpush1.msra.mxu0 0.0
  %313 = vmatprep.subr.mxu0 0.0
  %314 = vmatpush1.msra.mxu0 0.0
  %315 = vmatprep.mubr.f32.mxu0 0.0
  %316 = vmatmul.mubr.f32.gmra.mrb[0].mxu0 %v225
  %v317 = vpop.f32.mrb[0].mxu0
  %v318 = vadd.f32 %v249, %v317
  %v319 = vpop.f32.mrb[0].mxu0
  %320 = vdwg.mxu0
  %v321 = vtanh.pop %v318
  %v322 = vld [vmem:[%s5] sm:$0xff]
  %v323 = vld [vmem:[%s5 + $0x8] sm:$0xff]
  %v324 = vld [vmem:[%s5 + $0x10] sm:$0xff]
  %v325 = vld [vmem:[%s5 + $0x18] sm:$0xff]
  %v326 = vld [vmem:[%s5 + $0x20] sm:$0xff]
  %v327 = vld [vmem:[%s5 + $0x28] sm:$0xff]
  %v328 = vld [vmem:[%s5 + $0x30] sm:$0xff]
  %v329 = vld [vmem:[%s5 + $0x38] sm:$0xff]
  %v330 = vld [vmem:[%s5 + $0x40] sm:$0xff]
  %v331 = vld [vmem:[%s5 + $0x48] sm:$0xff]
  %v332 = vld [vmem:[%s5 + $0x50] sm:$0xff]
  %v333 = vld [vmem:[%s5 + $0x58] sm:$0xff]
  %v334 = vld [vmem:[%s5 + $0x60] sm:$0xff]
  %v335 = vld [vmem:[%s5 + $0x68] sm:$0xff]
  %v336 = vld [vmem:[%s5 + $0x70] sm:$0xff]
  %v337 = vld [vmem:[%s5 + $0x78] sm:$0xff]
  %v338 = vld [vmem:[#allocation2] sm:$0x1]
  %v340 = vlaneseq
  %v341 = vshrl.u32 %v340, 7
  %v342 = vsub.s32 0, %v341
  %v343 = vrot.slane %v338, %v342
  %345 = vmatprep.subr.mxu0 0.0
  %346 = vmatpush1.msra.mxu0 %v322
  %347 = vmatprep.subr.mxu0 0.0
  %348 = vmatpush1.msra.mxu0 %v323
  %349 = vmatprep.subr.mxu0 0.0
  %350 = vmatpush1.msra.mxu0 %v324
  %351 = vmatprep.subr.mxu0 0.0
  %352 = vmatpush1.msra.mxu0 %v325
  %353 = vmatprep.subr.mxu0 0.0
  %354 = vmatpush1.msra.mxu0 %v326
  %355 = vmatprep.subr.mxu0 0.0
  %356 = vmatpush1.msra.mxu0 %v327
  %357 = vmatprep.subr.mxu0 0.0
  %358 = vmatpush1.msra.mxu0 %v328
  %359 = vmatprep.subr.mxu0 0.0
  %360 = vmatpush1.msra.mxu0 %v329
  %361 = vmatprep.subr.mxu0 0.0
  %362 = vmatpush1.msra.mxu0 %v330
  %363 = vmatprep.subr.mxu0 0.0
  %364 = vmatpush1.msra.mxu0 %v331
  %365 = vmatprep.subr.mxu0 0.0
  %366 = vmatpush1.msra.mxu0 %v332
  %367 = vmatprep.subr.mxu0 0.0
  %368 = vmatpush1.msra.mxu0 %v333
  %369 = vmatprep.subr.mxu0 0.0
  %370 = vmatpush1.msra.mxu0 %v334
  %371 = vmatprep.subr.mxu0 0.0
  %372 = vmatpush1.msra.mxu0 %v335
  %373 = vmatprep.subr.mxu0 0.0
  %374 = vmatpush1.msra.mxu0 %v336
  %375 = vmatprep.subr.mxu0 0.0
  %376 = vmatpush1.msra.mxu0 %v337
  %377 = vmatprep.subr.mxu0 0.0
  %378 = vmatpush1.msra.mxu0 0.0
  %379 = vmatprep.subr.mxu0 0.0
  %380 = vmatpush1.msra.mxu0 0.0
  %381 = vmatprep.subr.mxu0 0.0
  %382 = vmatpush1.msra.mxu0 0.0
  %383 = vmatprep.subr.mxu0 0.0
  %384 = vmatpush1.msra.mxu0 0.0
  %385 = vmatprep.subr.mxu0 0.0
  %386 = vmatpush1.msra.mxu0 0.0
  %387 = vmatprep.subr.mxu0 0.0
  %388 = vmatpush1.msra.mxu0 0.0
  %389 = vmatprep.subr.mxu0 0.0
  %390 = vmatpush1.msra.mxu0 0.0
  %391 = vmatprep.subr.mxu0 0.0
  %392 = vmatpush1.msra.mxu0 0.0
  %393 = vmatprep.subr.mxu0 0.0
  %394 = vmatpush1.msra.mxu0 0.0
  %395 = vmatprep.subr.mxu0 0.0
  %396 = vmatpush1.msra.mxu0 0.0
  %397 = vmatprep.subr.mxu0 0.0
  %398 = vmatpush1.msra.mxu0 0.0
  %399 = vmatprep.subr.mxu0 0.0
  %400 = vmatpush1.msra.mxu0 0.0
  %401 = vmatprep.subr.mxu0 0.0
  %402 = vmatpush1.msra.mxu0 0.0
  %403 = vmatprep.subr.mxu0 0.0
  %404 = vmatpush1.msra.mxu0 0.0
  %405 = vmatprep.subr.mxu0 0.0
  %406 = vmatpush1.msra.mxu0 0.0
  %407 = vmatprep.subr.mxu0 0.0
  %408 = vmatpush1.msra.mxu0 0.0
  %409 = vmatprep.mubr.f32.mxu0 0.0
  %410 = vmatmul.mubr.f32.gmra.mrb[0].mxu0 %v321
  %v411 = vpop.f32.mrb[0].mxu0
  %v412 = vadd.f32 %v343, %v411
  %v413 = vpop.f32.mrb[0].mxu0
  %414 = vdwg.mxu0
  %v415 = vxor.u32 %v412, 2147483648
  %v416 = vmul.f32 %v415, 1.442695
  %v417 = vpow.pop %v416
  %v418 = vadd.f32 %v417, 1.0
  %v419 = vrcp.pop %v418
  %v420 = vmul.f32 1.0, %v419
  %vm421 = vcmask 7168
  %422 = vst.msk [vmem:[%s7] sm:$0xff] %vm421, %v420
  // Predicated region
  $region30: #{forward.13} parent=0 // pred_check
    _
  $region31: #{forward.13} parent=0 // pred_check_branch
    %424 = sbr.rel (0) target = $region33
  $region32: #{forward.13} parent=0 // pred_region
    _
  $region33: #{forward.13} parent=0 // pred_fallthru
    _
  // Predicated region
  $region34: #{forward.13} parent=0 // pred_check
    _
  $region35: #{forward.13} parent=0 // pred_check_branch
    %426 = sbr.rel (0) target = $region37
  $region36: #{forward.13} parent=0 // pred_region
    _
  $region37: #{forward.13} parent=0 // pred_fallthru
    _

// kernel: forward.9
$region0: #{forward.9}
  #allocation0 [shape = 'u32[]', space=smem, size = 0x4, offset = 0x4, fixed_abs, tag = 'smem constant byte address 0x4 - core index']
  #allocation1 [shape = 'u32[144,128]{1,0:T(1,128)}', space=vmem, size = 0x12000, scoped, tag = 'internal scratch']
  #allocation2 [shape = 'f32[128,128]{1,0:T(8,128)}', space=vmem, size = 0x10000, scoped, tag = 'scratch operand']
  %s0 = inlined_call_operand.vmem [shape: bf16[128,128], index: 0, kind: input, shape index: {}]
  %s1 = inlined_call_operand.vmem [shape: bf16[128,128], index: 1, kind: input, shape index: {}]
  %s2 = inlined_call_operand.vmem [shape: bf16[128,128], index: 2, kind: input, shape index: {}]
  %s3 = inlined_call_operand.vmem [shape: bf16[128,128], index: 3, kind: input, shape index: {}]
  %s4 = inlined_call_operand.vmem [shape: f32[128,1], index: 4, kind: input, shape index: {}]
  %s5 = inlined_call_operand.vmem [shape: f32[1,128], index: 5, kind: input, shape index: {}]
  %s6 = inlined_call_operand.vmem [shape: f32[1,128], index: 6, kind: input, shape index: {}]
  %s7 = inlined_call_operand.vmem [shape: f32[1,128], index: 7, kind: input, shape index: {}]
  %s8 = inlined_call_operand.vmem [shape: f32[1,128], index: 8, kind: input, shape index: {}]
  %s9 = inlined_call_operand.vmem [shape: bf16[128,128], index: 9, kind: output, shape index: {}]
  %s10 = sld [smem:[#allocation0]]
  $region85: #{forward.9} parent=0
    _
  %s12 = ssub.s32 1, %s10
  %s13 = scalar_select 0, %s12, %s10
  loop: start=0, step=1, limit=4
  $region2: #{forward.9} parent=0 // loop_pre_header
    _
  $region3: #{forward.9} parent=0 // loop_header
    %s15 = sphi 0, %s19
    %p16 = scmp.ge.s32.totalorder %s15, 4
    %s22 = sphi 0, %s34
    %s23 = sphi 0, %s30
    %s24 = sphi 0, %s22
    %s25 = sphi 0, %s23
    %s26 = sphi 0, %s24
    %s27 = sphi 0, %s25
    %s43 = sphi 0, %s45
    %s46 = sphi 0, %s43
    %s47 = sphi 0, %s46
    %s63 = sphi 0, %s47
    %s77 = sphi 0, %s79
    %s80 = sphi 0, %s77
    %s81 = sphi 0, %s80
    %s97 = sphi 0, %s81
    %s107 = sphi 0, %s109
    %s110 = sphi 0, %s107
    %s111 = sphi 0, %s110
    %s127 = sphi 0, %s111
    %s139 = sphi 0, %s141
    %s142 = sphi 0, %s139
    %s143 = sphi 0, %s142
    %s159 = sphi 0, %s143
    %s165 = sphi 0, %s167
    %s168 = sphi 0, %s165
    %s169 = sphi 0, %s168
    %s185 = sphi 0, %s169
    %s189 = sphi 0, %s189
    %s191 = sphi 0, %s189
    %s192 = sphi 0, %s191
    %s206 = sphi 0, %s192
    %s210 = sphi 0, %s210
    %s212 = sphi 0, %s210
    %s213 = sphi 0, %s212
    %s227 = sphi 0, %s213
    %s231 = sphi 0, %s231
    %s233 = sphi 0, %s231
    %s234 = sphi 0, %s233
    %s248 = sphi 0, %s234
    %s252 = sphi 0, %s252
    %s254 = sphi 0, %s252
    %s255 = sphi 0, %s254
    %s269 = sphi 0, %s255
    %s275 = sphi 0, %s277
    %s278 = sphi 0, %s275
    %s279 = sphi 0, %s278
    %s295 = sphi 0, %s279
  $region4: #{forward.9} parent=0 // loop_header_branch
    %18 = sbr.rel (%p16) target = $region8
  $region5: #{forward.9} parent=0 // loop_body
    %s20 = ssub.s32 %s15, 1
    %s21 = ssub.s32 %s15, 2
    %s28 = sadd.s32 1, %s23
    %p29 = scmp.ge.s32.totalorder %s28, 2
    %s30 = scalar_select %p29, 0, %s28
    %s31 = sadd.s32 1, %s22
    %s32 = scalar_select %p29, %s31, %s22
    %p33 = scmp.ge.s32.totalorder %s32, 1
    %s34 = scalar_select %p33, 0, %s32
    %p35 = scmp.lt.s32.totalorder %s23, 0
    %s36 = scalar_select %p35, %s23, 0
    %p37 = scmp.lt.s32.totalorder %s30, 0
    %s38 = scalar_select %p37, %s30, 0
    %s39 = ssub.s32 %s22, %s34
    %s40 = ssub.s32 %s36, %s38
    %s41 = sor.u32 %s39, %s40
    %p42 = scmp.eq.s32.totalorder %s41, 0
    %s44 = sadd.s32 %s43, 1
    %s45 = scalar_select %p42, %s43, %s44
    %p48 = pneg %p42
    %p49 = scmp.eq.s32.totalorder %s15, 1
    %p50 = por %p48, %p49
    %p51 = scmp.ne.s32.totalorder %s43, %s46
    %p52 = scmp.eq.s32.totalorder %s15, 0
    %p53 = por %p51, %p52
    %p54 = scmp.ne.s32.totalorder %s43, %s46
    %p55 = scmp.eq.s32.totalorder %s20, 1
    %p56 = por %p54, %p55
    %p57 = scmp.ne.s32.totalorder %s46, %s47
    %p58 = scmp.eq.s32.totalorder %s20, 0
    %p59 = por %p57, %p58
    %p60 = scmp.ne.s32.totalorder %s46, %s47
    %p61 = scmp.eq.s32.totalorder %s21, 1
    %p62 = por %p60, %p61
    %p64 = scmp.ne.s32.totalorder %s47, %s63
    %p65 = scmp.eq.s32.totalorder %s21, 0
    %p66 = por %p64, %p65
    %s67 = ssub.s32 %s23, 1
    %p68 = scmp.gt.s32.totalorder %s67, 0
    %s69 = scalar_select %p68, %s67, 0
    %s70 = ssub.s32 %s30, 1
    %p71 = scmp.gt.s32.totalorder %s70, 0
    %s72 = scalar_select %p71, %s70, 0
    %s73 = ssub.s32 %s22, %s34
    %s74 = ssub.s32 %s69, %s72
    %s75 = sor.u32 %s73, %s74
    %p76 = scmp.eq.s32.totalorder %s75, 0
    %s78 = sadd.s32 %s77, 1
    %s79 = scalar_select %p76, %s77, %s78
    %p82 = pneg %p76
    %p83 = scmp.eq.s32.totalorder %s15, 1
    %p84 = por %p82, %p83
    %p85 = scmp.ne.s32.totalorder %s77, %s80
    %p86 = scmp.eq.s32.totalorder %s15, 0
    %p87 = por %p85, %p86
    %p88 = scmp.ne.s32.totalorder %s77, %s80
    %p89 = scmp.eq.s32.totalorder %s20, 1
    %p90 = por %p88, %p89
    %p91 = scmp.ne.s32.totalorder %s80, %s81
    %p92 = scmp.eq.s32.totalorder %s20, 0
    %p93 = por %p91, %p92
    %p94 = scmp.ne.s32.totalorder %s80, %s81
    %p95 = scmp.eq.s32.totalorder %s21, 1
    %p96 = por %p94, %p95
    %p98 = scmp.ne.s32.totalorder %s81, %s97
    %p99 = scmp.eq.s32.totalorder %s21, 0
    %p100 = por %p98, %p99
    %p101 = scmp.lt.s32.totalorder %s23, 0
    %s102 = scalar_select %p101, %s23, 0
    %p103 = scmp.lt.s32.totalorder %s30, 0
    %s104 = scalar_select %p103, %s30, 0
    %s105 = ssub.s32 %s102, %s104
    %p106 = scmp.eq.s32.totalorder %s105, 0
    %s108 = sadd.s32 %s107, 1
    %s109 = scalar_select %p106, %s107, %s108
    %p112 = pneg %p106
    %p113 = scmp.eq.s32.totalorder %s15, 1
    %p114 = por %p112, %p113
    %p115 = scmp.ne.s32.totalorder %s107, %s110
    %p116 = scmp.eq.s32.totalorder %s15, 0
    %p117 = por %p115, %p116
    %p118 = scmp.ne.s32.totalorder %s107, %s110
    %p119 = scmp.eq.s32.totalorder %s20, 1
    %p120 = por %p118, %p119
    %p121 = scmp.ne.s32.totalorder %s110, %s111
    %p122 = scmp.eq.s32.totalorder %s20, 0
    %p123 = por %p121, %p122
    %p124 = scmp.ne.s32.totalorder %s110, %s111
    %p125 = scmp.eq.s32.totalorder %s21, 1
    %p126 = por %p124, %p125
    %p128 = scmp.ne.s32.totalorder %s111, %s127
    %p129 = scmp.eq.s32.totalorder %s21, 0
    %p130 = por %p128, %p129
    %s131 = ssub.s32 %s23, 1
    %p132 = scmp.gt.s32.totalorder %s131, 0
    %s133 = scalar_select %p132, %s131, 0
    %s134 = ssub.s32 %s30, 1
    %p135 = scmp.gt.s32.totalorder %s134, 0
    %s136 = scalar_select %p135, %s134, 0
    %s137 = ssub.s32 %s133, %s136
    %p138 = scmp.eq.s32.totalorder %s137, 0
    %s140 = sadd.s32 %s139, 1
    %s141 = scalar_select %p138, %s139, %s140
    %p144 = pneg %p138
    %p145 = scmp.eq.s32.totalorder %s15, 1
    %p146 = por %p144, %p145
    %p147 = scmp.ne.s32.totalorder %s139, %s142
    %p148 = scmp.eq.s32.totalorder %s15, 0
    %p149 = por %p147, %p148
    %p150 = scmp.ne.s32.totalorder %s139, %s142
    %p151 = scmp.eq.s32.totalorder %s20, 1
    %p152 = por %p150, %p151
    %p153 = scmp.ne.s32.totalorder %s142, %s143
    %p154 = scmp.eq.s32.totalorder %s20, 0
    %p155 = por %p153, %p154
    %p156 = scmp.ne.s32.totalorder %s142, %s143
    %p157 = scmp.eq.s32.totalorder %s21, 1
    %p158 = por %p156, %p157
    %p160 = scmp.ne.s32.totalorder %s143, %s159
    %p161 = scmp.eq.s32.totalorder %s21, 0
    %p162 = por %p160, %p161
    %s163 = ssub.s32 %s22, %s34
    %p164 = scmp.eq.s32.totalorder %s163, 0
    %s166 = sadd.s32 %s165, 1
    %s167 = scalar_select %p164, %s165, %s166
    %p170 = pneg %p164
    %p171 = scmp.eq.s32.totalorder %s15, 1
    %p172 = por %p170, %p171
    %p173 = scmp.ne.s32.totalorder %s165, %s168
    %p174 = scmp.eq.s32.totalorder %s15, 0
    %p175 = por %p173, %p174
    %p176 = scmp.ne.s32.totalorder %s165, %s168
    %p177 = scmp.eq.s32.totalorder %s20, 1
    %p178 = por %p176, %p177
    %p179 = scmp.ne.s32.totalorder %s168, %s169
    %p180 = scmp.eq.s32.totalorder %s20, 0
    %p181 = por %p179, %p180
    %p182 = scmp.ne.s32.totalorder %s168, %s169
    %p183 = scmp.eq.s32.totalorder %s21, 1
    %p184 = por %p182, %p183
    %p186 = scmp.ne.s32.totalorder %s169, %s185
    %p187 = scmp.eq.s32.totalorder %s21, 0
    %p188 = por %p186, %p187
    %s190 = sadd.s32 %s189, 1
    %p193 = scmp.eq.s32.totalorder %s15, 1
    %p194 = scmp.ne.s32.totalorder %s189, %s191
    %p195 = scmp.eq.s32.totalorder %s15, 0
    %p196 = por %p194, %p195
    %p197 = scmp.ne.s32.totalorder %s189, %s191
    %p198 = scmp.eq.s32.totalorder %s20, 1
    %p199 = por %p197, %p198
    %p200 = scmp.ne.s32.totalorder %s191, %s192
    %p201 = scmp.eq.s32.totalorder %s20, 0
    %p202 = por %p200, %p201
    %p203 = scmp.ne.s32.totalorder %s191, %s192
    %p204 = scmp.eq.s32.totalorder %s21, 1
    %p205 = por %p203, %p204
    %p207 = scmp.ne.s32.totalorder %s192, %s206
    %p208 = scmp.eq.s32.totalorder %s21, 0
    %p209 = por %p207, %p208
    %s211 = sadd.s32 %s210, 1
    %p214 = scmp.eq.s32.totalorder %s15, 1
    %p215 = scmp.ne.s32.totalorder %s210, %s212
    %p216 = scmp.eq.s32.totalorder %s15, 0
    %p217 = por %p215, %p216
    %p218 = scmp.ne.s32.totalorder %s210, %s212
    %p219 = scmp.eq.s32.totalorder %s20, 1
    %p220 = por %p218, %p219
    %p221 = scmp.ne.s32.totalorder %s212, %s213
    %p222 = scmp.eq.s32.totalorder %s20, 0
    %p223 = por %p221, %p222
    %p224 = scmp.ne.s32.totalorder %s212, %s213
    %p225 = scmp.eq.s32.totalorder %s21, 1
    %p226 = por %p224, %p225
    %p228 = scmp.ne.s32.totalorder %s213, %s227
    %p229 = scmp.eq.s32.totalorder %s21, 0
    %p230 = por %p228, %p229
    %s232 = sadd.s32 %s231, 1
    %p235 = scmp.eq.s32.totalorder %s15, 1
    %p236 = scmp.ne.s32.totalorder %s231, %s233
    %p237 = scmp.eq.s32.totalorder %s15, 0
    %p238 = por %p236, %p237
    %p239 = scmp.ne.s32.totalorder %s231, %s233
    %p240 = scmp.eq.s32.totalorder %s20, 1
    %p241 = por %p239, %p240
    %p242 = scmp.ne.s32.totalorder %s233, %s234
    %p243 = scmp.eq.s32.totalorder %s20, 0
    %p244 = por %p242, %p243
    %p245 = scmp.ne.s32.totalorder %s233, %s234
    %p246 = scmp.eq.s32.totalorder %s21, 1
    %p247 = por %p245, %p246
    %p249 = scmp.ne.s32.totalorder %s234, %s248
    %p250 = scmp.eq.s32.totalorder %s21, 0
    %p251 = por %p249, %p250
    %s253 = sadd.s32 %s252, 1
    %p256 = scmp.eq.s32.totalorder %s15, 1
    %p257 = scmp.ne.s32.totalorder %s252, %s254
    %p258 = scmp.eq.s32.totalorder %s15, 0
    %p259 = por %p257, %p258
    %p260 = scmp.ne.s32.totalorder %s252, %s254
    %p261 = scmp.eq.s32.totalorder %s20, 1
    %p262 = por %p260, %p261
    %p263 = scmp.ne.s32.totalorder %s254, %s255
    %p264 = scmp.eq.s32.totalorder %s20, 0
    %p265 = por %p263, %p264
    %p266 = scmp.ne.s32.totalorder %s254, %s255
    %p267 = scmp.eq.s32.totalorder %s21, 1
    %p268 = por %p266, %p267
    %p270 = scmp.ne.s32.totalorder %s255, %s269
    %p271 = scmp.eq.s32.totalorder %s21, 0
    %p272 = por %p270, %p271
    %s273 = ssub.s32 %s22, %s34
    %p274 = scmp.eq.s32.totalorder %s273, 0
    %s276 = sadd.s32 %s275, 1
    %s277 = scalar_select %p274, %s275, %s276
    %p280 = pneg %p274
    %p281 = scmp.eq.s32.totalorder %s15, 1
    %p282 = por %p280, %p281
    %p283 = scmp.ne.s32.totalorder %s275, %s278
    %p284 = scmp.eq.s32.totalorder %s15, 0
    %p285 = por %p283, %p284
    %p286 = scmp.ne.s32.totalorder %s275, %s278
    %p287 = scmp.eq.s32.totalorder %s20, 1
    %p288 = por %p286, %p287
    %p289 = scmp.ne.s32.totalorder %s278, %s279
    %p290 = scmp.eq.s32.totalorder %s20, 0
    %p291 = por %p289, %p290
    %p292 = scmp.ne.s32.totalorder %s278, %s279
    %p293 = scmp.eq.s32.totalorder %s21, 1
    %p294 = por %p292, %p293
    %p296 = scmp.ne.s32.totalorder %s279, %s295
    %p297 = scmp.eq.s32.totalorder %s21, 0
    %p298 = por %p296, %p297
    %p299 = scmp.le.s32.totalorder 1, %s15
    %p300 = scmp.lt.s32.totalorder %s15, 3
    %p301 = pnand %p299, %p300
    %p302 = pneg %p301
    // Predicated region
    $region9: #{forward.9} parent=5 // pred_check
      _
    $region10: #{forward.9} parent=5 // pred_check_branch
      %304 = sbr.rel (%p301) target = $region12
    $region11: #{forward.9} parent=5 // pred_region
      %s305 = ssub.s32 %s15, 1
      // Predicated region
      $region13: #{forward.9} parent=11 // pred_check
        %p306 = pneg %p181
      $region14: #{forward.9} parent=11 // pred_check_branch
        %308 = sbr.rel (%p306) target = $region16
      $region15: #{forward.9} parent=11 // pred_region
        %s309 = smul.u32 16, %s24
        %p310 = scmp.lt.s32.totalorder %s309, 15
        %s311 = scalar_select %p310, %s309, 15
        %s312 = smul.addr %s311, 8
        %s313 = scalar_lea.vmem %s4, %s312
        %s314 = smul.u32 16, %s24
      $region16: #{forward.9} parent=11 // pred_fallthru
        _
      // Predicated region
      $region17: #{forward.9} parent=11 // pred_check
        %p315 = pneg %p202
      $region18: #{forward.9} parent=11 // pred_check_branch
        %317 = sbr.rel (%p315) target = $region20
      $region19: #{forward.9} parent=11 // pred_region
        _
      $region20: #{forward.9} parent=11 // pred_fallthru
        _
      // Predicated region
      $region21: #{forward.9} parent=11 // pred_check
        %p318 = pneg %p223
      $region22: #{forward.9} parent=11 // pred_check_branch
        %320 = sbr.rel (%p318) target = $region24
      $region23: #{forward.9} parent=11 // pred_region
        _
      $region24: #{forward.9} parent=11 // pred_fallthru
        _
      // Predicated region
      $region25: #{forward.9} parent=11 // pred_check
        %p321 = pneg %p244
      $region26: #{forward.9} parent=11 // pred_check_branch
        %323 = sbr.rel (%p321) target = $region28
      $region27: #{forward.9} parent=11 // pred_region
        _
      $region28: #{forward.9} parent=11 // pred_fallthru
        _
      // Predicated region
      $region29: #{forward.9} parent=11 // pred_check
        %p324 = pneg %p265
      $region30: #{forward.9} parent=11 // pred_check_branch
        %326 = sbr.rel (%p324) target = $region32
      $region31: #{forward.9} parent=11 // pred_region
        _
      $region32: #{forward.9} parent=11 // pred_fallthru
        _
    $region12: #{forward.9} parent=5 // pred_fallthru
      _
    %p327 = scmp.lt.s32.totalorder %s15, 2
    // Predicated region
    $region33: #{forward.9} parent=5 // pred_check
      %p328 = pneg %p327
    $region34: #{forward.9} parent=5 // pred_check_branch
      %330 = sbr.rel (%p328) target = $region36
    $region35: #{forward.9} parent=5 // pred_region
      // Predicated region
      $region37: #{forward.9} parent=35 // pred_check
        %p331 = pneg %p53
      $region38: #{forward.9} parent=35 // pred_check_branch
        %333 = sbr.rel (%p331) target = $region40
      $region39: #{forward.9} parent=35 // pred_region
        %p334 = scmp.lt.s32.totalorder %s23, 0
        %s335 = scalar_select %p334, %s23, 0
        %s336 = smul.u32 16, %s22
        %p337 = scmp.lt.s32.totalorder %s336, 15
        %s338 = scalar_select %p337, %s336, 15
        %p339 = scmp.lt.s32.totalorder %s335, 0
        %s340 = scalar_select %p339, %s335, 0
        %s341 = sadd.s32 %s340, %s338
        %s342 = smul.addr %s341, 4
        %s343 = scalar_lea.vmem %s0, %s342
        %p344 = scmp.lt.s32.totalorder %s23, 0
        %s345 = scalar_select %p344, %s23, 0
        %s346 = smul.u32 16, %s22
      $region40: #{forward.9} parent=35 // pred_fallthru
        _
      // Predicated region
      $region41: #{forward.9} parent=35 // pred_check
        %p347 = pneg %p87
      $region42: #{forward.9} parent=35 // pred_check_branch
        %349 = sbr.rel (%p347) target = $region44
      $region43: #{forward.9} parent=35 // pred_region
        %s350 = ssub.s32 %s23, 1
        %p351 = scmp.gt.s32.totalorder %s350, 0
        %s352 = scalar_select %p351, %s350, 0
        %s353 = smul.u32 16, %s22
        %p354 = scmp.lt.s32.totalorder %s353, 15
        %s355 = scalar_select %p354, %s353, 15
        %p356 = scmp.lt.s32.totalorder %s352, 0
        %s357 = scalar_select %p356, %s352, 0
        %s358 = sadd.s32 %s357, %s355
        %s359 = smul.addr %s358, 4
        %s360 = scalar_lea.vmem %s1, %s359
        %s361 = ssub.s32 %s23, 1
        %p362 = scmp.gt.s32.totalorder %s361, 0
        %s363 = scalar_select %p362, %s361, 0
        %s364 = smul.u32 16, %s22
      $region44: #{forward.9} parent=35 // pred_fallthru
        _
      // Predicated region
      $region45: #{forward.9} parent=35 // pred_check
        %p365 = pneg %p117
      $region46: #{forward.9} parent=35 // pred_check_branch
        %367 = sbr.rel (%p365) target = $region48
      $region47: #{forward.9} parent=35 // pred_region
        %p368 = scmp.lt.s32.totalorder %s23, 0
        %s369 = scalar_select %p368, %s23, 0
        %s370 = smul.u32 16, %s369
        %p371 = scmp.lt.s32.totalorder %s370, 15
        %s372 = scalar_select %p371, %s370, 15
        %s373 = smul.addr %s372, 4
        %s374 = scalar_lea.vmem %s2, %s373
        %p375 = scmp.lt.s32.totalorder %s23, 0
        %s376 = scalar_select %p375, %s23, 0
        %s377 = smul.u32 16, %s376
      $region48: #{forward.9} parent=35 // pred_fallthru
        _
      // Predicated region
      $region49: #{forward.9} parent=35 // pred_check
        %p378 = pneg %p149
      $region50: #{forward.9} parent=35 // pred_check_branch
        %380 = sbr.rel (%p378) target = $region52
      $region51: #{forward.9} parent=35 // pred_region
        %s381 = ssub.s32 %s23, 1
        %p382 = scmp.gt.s32.totalorder %s381, 0
        %s383 = scalar_select %p382, %s381, 0
        %s384 = smul.u32 16, %s383
        %p385 = scmp.lt.s32.totalorder %s384, 15
        %s386 = scalar_select %p385, %s384, 15
        %s387 = smul.addr %s386, 4
        %s388 = scalar_lea.vmem %s3, %s387
        %s389 = ssub.s32 %s23, 1
        %p390 = scmp.gt.s32.totalorder %s389, 0
        %s391 = scalar_select %p390, %s389, 0
        %s392 = smul.u32 16, %s391
      $region52: #{forward.9} parent=35 // pred_fallthru
        _
    $region36: #{forward.9} parent=5 // pred_fallthru
      _
    %p393 = scmp.le.s32.totalorder 1, %s15
    %p394 = scmp.lt.s32.totalorder %s15, 3
    %p395 = pnand %p393, %p394
    %p396 = pneg %p395
    // Predicated region
    $region53: #{forward.9} parent=5 // pred_check
      _
    $region54: #{forward.9} parent=5 // pred_check_branch
      %398 = sbr.rel (%p395) target = $region56
    $region55: #{forward.9} parent=5 // pred_region
      %s399 = ssub.s32 %s15, 1
      %p400 = scmp.lt.s32.totalorder %s25, 0
      %s401 = scalar_select %p400, %s25, 0
      %s402 = smul.u32 16, %s24
      %p403 = scmp.lt.s32.totalorder %s402, 15
      %s404 = scalar_select %p403, %s402, 15
      %p405 = scmp.lt.s32.totalorder %s401, 0
      %s406 = scalar_select %p405, %s401, 0
      %s407 = sadd.s32 %s406, %s404
      %s408 = smul.addr %s407, 4
      %s409 = scalar_lea.vmem %s0, %s408
      %p410 = pneg %p59
      %p411 = pneg %p56
      %s412 = ssub.s32 %s25, 1
      %p413 = scmp.gt.s32.totalorder %s412, 0
      %s414 = scalar_select %p413, %s412, 0
      %s415 = smul.u32 16, %s24
      %p416 = scmp.lt.s32.totalorder %s415, 15
      %s417 = scalar_select %p416, %s415, 15
      %p418 = scmp.lt.s32.totalorder %s414, 0
      %s419 = scalar_select %p418, %s414, 0
      %s420 = sadd.s32 %s419, %s417
      %s421 = smul.addr %s420, 4
      %s422 = scalar_lea.vmem %s1, %s421
      %p423 = pneg %p93
      %p424 = pneg %p90
      %p425 = scmp.lt.s32.totalorder %s25, 0
      %s426 = scalar_select %p425, %s25, 0
      %s427 = smul.u32 16, %s426
      %p428 = scmp.lt.s32.totalorder %s427, 15
      %s429 = scalar_select %p428, %s427, 15
      %s430 = smul.addr %s429, 4
      %s431 = scalar_lea.vmem %s2, %s430
      %p432 = pneg %p123
      %p433 = pneg %p120
      %s434 = ssub.s32 %s25, 1
      %p435 = scmp.gt.s32.totalorder %s434, 0
      %s436 = scalar_select %p435, %s434, 0
      %s437 = smul.u32 16, %s436
      %p438 = scmp.lt.s32.totalorder %s437, 15
      %s439 = scalar_select %p438, %s437, 15
      %s440 = smul.addr %s439, 4
      %s441 = scalar_lea.vmem %s3, %s440
      %p442 = pneg %p155
      %p443 = pneg %p152
      %s444 = smul.u32 16, %s24
      %p445 = scmp.lt.s32.totalorder %s444, 15
      %s446 = scalar_select %p445, %s444, 15
      %s447 = smul.addr %s446, 8
      %s448 = scalar_lea.vmem %s4, %s447
      %p449 = pneg %p181
      %p450 = pneg %p178
      %p451 = pneg %p202
      %p452 = pneg %p199
      %p453 = pneg %p223
      %p454 = pneg %p220
      %p455 = pneg %p244
      %p456 = pneg %p241
      %p457 = pneg %p265
      %p458 = pneg %p262
      %p459 = pneg %p291
      %p460 = pneg %p288
      %s461 = smul.u32 16, %s24
      %p462 = scmp.lt.s32.totalorder %s461, 15
      %s463 = scalar_select %p462, %s461, 15
      %s464 = smul.addr %s463, 4
      %s465 = scalar_lea.vmem %s9, %s464
      %p466 = scmp.lt.s32.totalorder %s25, 0
      %s467 = scalar_select %p466, %s25, 0
      %s468 = smul.u32 16, %s24
      %p469 = scmp.lt.s32.totalorder %s468, 15
      %s470 = scalar_select %p469, %s468, 15
      %p471 = scmp.lt.s32.totalorder %s467, 0
      %s472 = scalar_select %p471, %s467, 0
      %s473 = sadd.s32 %s472, %s470
      %s474 = smul.addr %s473, 4
      %s475 = scalar_lea.vmem %s0, %s474
      %p476 = scmp.lt.s32.totalorder %s25, 0
      %s477 = scalar_select %p476, %s25, 0
      %s478 = smul.u32 16, %s24
      %s479 = ssub.s32 %s25, 1
      %p480 = scmp.gt.s32.totalorder %s479, 0
      %s481 = scalar_select %p480, %s479, 0
      %s482 = smul.u32 16, %s24
      %p483 = scmp.lt.s32.totalorder %s482, 15
      %s484 = scalar_select %p483, %s482, 15
      %p485 = scmp.lt.s32.totalorder %s481, 0
      %s486 = scalar_select %p485, %s481, 0
      %s487 = sadd.s32 %s486, %s484
      %s488 = smul.addr %s487, 4
      %s489 = scalar_lea.vmem %s1, %s488
      %s490 = ssub.s32 %s25, 1
      %p491 = scmp.gt.s32.totalorder %s490, 0
      %s492 = scalar_select %p491, %s490, 0
      %s493 = smul.u32 16, %s24
      %p494 = scmp.lt.s32.totalorder %s25, 0
      %s495 = scalar_select %p494, %s25, 0
      %s496 = smul.u32 16, %s495
      %p497 = scmp.lt.s32.totalorder %s496, 15
      %s498 = scalar_select %p497, %s496, 15
      %s499 = smul.addr %s498, 4
      %s500 = scalar_lea.vmem %s2, %s499
      %p501 = scmp.lt.s32.totalorder %s25, 0
      %s502 = scalar_select %p501, %s25, 0
      %s503 = smul.u32 16, %s502
      %s504 = ssub.s32 %s25, 1
      %p505 = scmp.gt.s32.totalorder %s504, 0
      %s506 = scalar_select %p505, %s504, 0
      %s507 = smul.u32 16, %s506
      %p508 = scmp.lt.s32.totalorder %s507, 15
      %s509 = scalar_select %p508, %s507, 15
      %s510 = smul.addr %s509, 4
      %s511 = scalar_lea.vmem %s3, %s510
      %s512 = ssub.s32 %s25, 1
      %p513 = scmp.gt.s32.totalorder %s512, 0
      %s514 = scalar_select %p513, %s512, 0
      %s515 = smul.u32 16, %s514
      %s516 = smul.u32 16, %s24
      %p517 = scmp.lt.s32.totalorder %s516, 15
      %s518 = scalar_select %p517, %s516, 15
      %s519 = smul.addr %s518, 8
      %s520 = scalar_lea.vmem %s4, %s519
      %s521 = smul.u32 16, %s24
      %s522 = smul.u32 16, %s24
      %p523 = scmp.lt.s32.totalorder %s522, 15
      %s524 = scalar_select %p523, %s522, 15
      %s525 = smul.addr %s524, 4
      %s526 = scalar_lea.vmem %s9, %s525
      %s527 = smul.u32 16, %s24
      %p529 = scmp.eq.s32.totalorder %s25, 0
      // Predicated region
      $region57: #{forward.9} parent=55 // pred_check
        %p530 = pneg %p529
      $region58: #{forward.9} parent=55 // pred_check_branch
        %532 = sbr.rel (%p530) target = $region60
      $region59: #{forward.9} parent=55 // pred_region
        %533 = vst [vmem:[#allocation2] sm:$0xff] 0.0
        %534 = vst [vmem:[#allocation2 + $0x8] sm:$0xff] 0.0
        %535 = vst [vmem:[#allocation2 + $0x10] sm:$0xff] 0.0
        %536 = vst [vmem:[#allocation2 + $0x18] sm:$0xff] 0.0
        %537 = vst [vmem:[#allocation2 + $0x20] sm:$0xff] 0.0
        %538 = vst [vmem:[#allocation2 + $0x28] sm:$0xff] 0.0
        %539 = vst [vmem:[#allocation2 + $0x30] sm:$0xff] 0.0
        %540 = vst [vmem:[#allocation2 + $0x38] sm:$0xff] 0.0
        %541 = vst [vmem:[#allocation2 + $0x40] sm:$0xff] 0.0
        %542 = vst [vmem:[#allocation2 + $0x48] sm:$0xff] 0.0
        %543 = vst [vmem:[#allocation2 + $0x50] sm:$0xff] 0.0
        %544 = vst [vmem:[#allocation2 + $0x58] sm:$0xff] 0.0
        %545 = vst [vmem:[#allocation2 + $0x60] sm:$0xff] 0.0
        %546 = vst [vmem:[#allocation2 + $0x68] sm:$0xff] 0.0
        %547 = vst [vmem:[#allocation2 + $0x70] sm:$0xff] 0.0
        %548 = vst [vmem:[#allocation2 + $0x78] sm:$0xff] 0.0
      $region60: #{forward.9} parent=55 // pred_fallthru
        _
      %p549 = scmp.lt.s32.totalorder %s25, 1
      // Predicated region
      $region61: #{forward.9} parent=55 // pred_check
        %p550 = pneg %p549
      $region62: #{forward.9} parent=55 // pred_check_branch
        %552 = sbr.rel (%p550) target = $region64
      $region63: #{forward.9} parent=55 // pred_region
        %v553 = vld [vmem:[#allocation2] sm:$0xff]
        %v554 = vld [vmem:[#allocation2 + $0x8] sm:$0xff]
        %v555 = vld [vmem:[#allocation2 + $0x10] sm:$0xff]
        %v556 = vld [vmem:[#allocation2 + $0x18] sm:$0xff]
        %v557 = vld [vmem:[#allocation2 + $0x20] sm:$0xff]
        %v558 = vld [vmem:[#allocation2 + $0x28] sm:$0xff]
        %v559 = vld [vmem:[#allocation2 + $0x30] sm:$0xff]
        %v560 = vld [vmem:[#allocation2 + $0x38] sm:$0xff]
        %v561 = vld [vmem:[#allocation2 + $0x40] sm:$0xff]
        %v562 = vld [vmem:[#allocation2 + $0x48] sm:$0xff]
        %v563 = vld [vmem:[#allocation2 + $0x50] sm:$0xff]
        %v564 = vld [vmem:[#allocation2 + $0x58] sm:$0xff]
        %v565 = vld [vmem:[#allocation2 + $0x60] sm:$0xff]
        %v566 = vld [vmem:[#allocation2 + $0x68] sm:$0xff]
        %v567 = vld [vmem:[#allocation2 + $0x70] sm:$0xff]
        %v568 = vld [vmem:[#allocation2 + $0x78] sm:$0xff]
        %v569 = vld [vmem:[%s475] sm:$0xf]
        %v570 = vld [vmem:[%s475 + $0x4] sm:$0xf]
        %v571 = vld [vmem:[%s475 + $0x8] sm:$0xf]
        %v572 = vld [vmem:[%s475 + $0xc] sm:$0xf]
        %v573 = vld [vmem:[%s475 + $0x10] sm:$0xf]
        %v574 = vld [vmem:[%s475 + $0x14] sm:$0xf]
        %v575 = vld [vmem:[%s475 + $0x18] sm:$0xf]
        %v576 = vld [vmem:[%s475 + $0x1c] sm:$0xf]
        %v577 = vld [vmem:[%s475 + $0x20] sm:$0xf]
        %v578 = vld [vmem:[%s475 + $0x24] sm:$0xf]
        %v579 = vld [vmem:[%s475 + $0x28] sm:$0xf]
        %v580 = vld [vmem:[%s475 + $0x2c] sm:$0xf]
        %v581 = vld [vmem:[%s475 + $0x30] sm:$0xf]
        %v582 = vld [vmem:[%s475 + $0x34] sm:$0xf]
        %v583 = vld [vmem:[%s475 + $0x38] sm:$0xf]
        %v584 = vld [vmem:[%s475 + $0x3c] sm:$0xf]
        %v585 = vld [vmem:[%s500] sm:$0xf]
        %v586 = vld [vmem:[%s500 + $0x4] sm:$0xf]
        %v587 = vld [vmem:[%s500 + $0x8] sm:$0xf]
        %v588 = vld [vmem:[%s500 + $0xc] sm:$0xf]
        %v589 = vld [vmem:[%s500 + $0x10] sm:$0xf]
        %v590 = vld [vmem:[%s500 + $0x14] sm:$0xf]
        %v591 = vld [vmem:[%s500 + $0x18] sm:$0xf]
        %v592 = vld [vmem:[%s500 + $0x1c] sm:$0xf]
        %v593 = vld [vmem:[%s500 + $0x20] sm:$0xf]
        %v594 = vld [vmem:[%s500 + $0x24] sm:$0xf]
        %v595 = vld [vmem:[%s500 + $0x28] sm:$0xf]
        %v596 = vld [vmem:[%s500 + $0x2c] sm:$0xf]
        %v597 = vld [vmem:[%s500 + $0x30] sm:$0xf]
        %v598 = vld [vmem:[%s500 + $0x34] sm:$0xf]
        %v599 = vld [vmem:[%s500 + $0x38] sm:$0xf]
        %v600 = vld [vmem:[%s500 + $0x3c] sm:$0xf]
        %v617 = vunpack.c.l.b16 %v569
        %v618 = vunpack.c.l.b16 %v570
        %v619 = vunpack.c.l.b16 %v571
        %v620 = vunpack.c.l.b16 %v572
        %v621 = vunpack.c.l.b16 %v573
        %v622 = vunpack.c.l.b16 %v574
        %v623 = vunpack.c.l.b16 %v575
        %v624 = vunpack.c.l.b16 %v576
        %v625 = vunpack.c.l.b16 %v577
        %v626 = vunpack.c.l.b16 %v578
        %v627 = vunpack.c.l.b16 %v579
        %v628 = vunpack.c.l.b16 %v580
        %v629 = vunpack.c.l.b16 %v581
        %v630 = vunpack.c.l.b16 %v582
        %v631 = vunpack.c.l.b16 %v583
        %v632 = vunpack.c.l.b16 %v584
        %v633 = vpack.c.b16 %v618, %v617
        %v634 = vpack.c.b16 %v620, %v619
        %v635 = vpack.c.b16 %v622, %v621
        %v636 = vpack.c.b16 %v624, %v623
        %v637 = vpack.c.b16 %v626, %v625
        %v638 = vpack.c.b16 %v628, %v627
        %v639 = vpack.c.b16 %v630, %v629
        %v640 = vpack.c.b16 %v632, %v631
        %v665 = vunpack.c.l.b16 %v585
        %v666 = vunpack.c.l.b16 %v586
        %v667 = vunpack.c.l.b16 %v587
        %v668 = vunpack.c.l.b16 %v588
        %v669 = vunpack.c.l.b16 %v589
        %v670 = vunpack.c.l.b16 %v590
        %v671 = vunpack.c.l.b16 %v591
        %v672 = vunpack.c.l.b16 %v592
        %v673 = vunpack.c.l.b16 %v593
        %v674 = vunpack.c.l.b16 %v594
        %v675 = vunpack.c.l.b16 %v595
        %v676 = vunpack.c.l.b16 %v596
        %v677 = vunpack.c.l.b16 %v597
        %v678 = vunpack.c.l.b16 %v598
        %v679 = vunpack.c.l.b16 %v599
        %v680 = vunpack.c.l.b16 %v600
        %v681 = vpack.c.b16 %v666, %v665
        %v682 = vpack.c.b16 %v668, %v667
        %v683 = vpack.c.b16 %v670, %v669
        %v684 = vpack.c.b16 %v672, %v671
        %v685 = vpack.c.b16 %v674, %v673
        %v686 = vpack.c.b16 %v676, %v675
        %v687 = vpack.c.b16 %v678, %v677
        %v688 = vpack.c.b16 %v680, %v679
        %697 = vmatprep.subr.bf16.mxu0 0
        %698 = vmatpush1.bf16.msra.mxu0 %v681
        %699 = vmatprep.subr.bf16.mxu0 0
        %700 = vmatpush1.bf16.msra.mxu0 %v682
        %701 = vmatprep.subr.bf16.mxu0 0
        %702 = vmatpush1.bf16.msra.mxu0 %v683
        %703 = vmatprep.subr.bf16.mxu0 0
        %704 = vmatpush1.bf16.msra.mxu0 %v684
        %705 = vmatprep.subr.bf16.mxu0 0
        %706 = vmatpush1.bf16.msra.mxu0 %v685
        %707 = vmatprep.subr.bf16.mxu0 0
        %708 = vmatpush1.bf16.msra.mxu0 %v686
        %709 = vmatprep.subr.bf16.mxu0 0
        %710 = vmatpush1.bf16.msra.mxu0 %v687
        %711 = vmatprep.subr.bf16.mxu0 0
        %712 = vmatpush1.bf16.msra.mxu0 %v688
        %713 = vmatprep.subr.bf16.mxu0 0
        %714 = vmatpush1.bf16.msra.mxu0 0
        %715 = vmatprep.subr.bf16.mxu0 0
        %716 = vmatpush1.bf16.msra.mxu0 0
        %717 = vmatprep.subr.bf16.mxu0 0
        %718 = vmatpush1.bf16.msra.mxu0 0
        %719 = vmatprep.subr.bf16.mxu0 0
        %720 = vmatpush1.bf16.msra.mxu0 0
        %721 = vmatprep.subr.bf16.mxu0 0
        %722 = vmatpush1.bf16.msra.mxu0 0
        %723 = vmatprep.subr.bf16.mxu0 0
        %724 = vmatpush1.bf16.msra.mxu0 0
        %725 = vmatprep.subr.bf16.mxu0 0
        %726 = vmatpush1.bf16.msra.mxu0 0
        %727 = vmatprep.subr.bf16.mxu0 0
        %728 = vmatpush1.bf16.msra.mxu0 0
        %729 = vmatprep.mubr.bf16.mxu0 0
        %730 = vmatmul.mubr.bf16.gmra.mrb[0].mxu0 %v633
        %v731 = vpop.f32.mrb[0].mxu0
        %v732 = vadd.f32 0.0, %v731
        %v733 = vpop.f32.mrb[0].mxu0
        %v734 = vpop.f32.mrb[0].mxu0
        %v735 = vadd.f32 0.0, %v734
        %v736 = vpop.f32.mrb[0].mxu0
        %737 = vmatprep.mubr.bf16.mxu0 0
        %738 = vmatmul.mubr.bf16.gmra.mrb[0].mxu0 %v634
        %v739 = vpop.f32.mrb[0].mxu0
        %v740 = vadd.f32 0.0, %v739
        %v741 = vpop.f32.mrb[0].mxu0
        %v742 = vpop.f32.mrb[0].mxu0
        %v743 = vadd.f32 0.0, %v742
        %v744 = vpop.f32.mrb[0].mxu0
        %745 = vmatprep.mubr.bf16.mxu0 0
        %746 = vmatmul.mubr.bf16.gmra.mrb[0].mxu0 %v635
        %v747 = vpop.f32.mrb[0].mxu0
        %v748 = vadd.f32 0.0, %v747
        %v749 = vpop.f32.mrb[0].mxu0
        %v750 = vpop.f32.mrb[0].mxu0
        %v751 = vadd.f32 0.0, %v750
        %v752 = vpop.f32.mrb[0].mxu0
        %753 = vmatprep.mubr.bf16.mxu0 0
        %754 = vmatmul.mubr.bf16.gmra.mrb[0].mxu0 %v636
        %v755 = vpop.f32.mrb[0].mxu0
        %v756 = vadd.f32 0.0, %v755
        %v757 = vpop.f32.mrb[0].mxu0
        %v758 = vpop.f32.mrb[0].mxu0
        %v759 = vadd.f32 0.0, %v758
        %v760 = vpop.f32.mrb[0].mxu0
        %761 = vmatprep.mubr.bf16.mxu0 0
        %762 = vmatmul.mubr.bf16.gmra.mrb[0].mxu0 %v637
        %v763 = vpop.f32.mrb[0].mxu0
        %v764 = vadd.f32 0.0, %v763
        %v765 = vpop.f32.mrb[0].mxu0
        %v766 = vpop.f32.mrb[0].mxu0
        %v767 = vadd.f32 0.0, %v766
        %v768 = vpop.f32.mrb[0].mxu0
        %769 = vmatprep.mubr.bf16.mxu0 0
        %770 = vmatmul.mubr.bf16.gmra.mrb[0].mxu0 %v638
        %v771 = vpop.f32.mrb[0].mxu0
        %v772 = vadd.f32 0.0, %v771
        %v773 = vpop.f32.mrb[0].mxu0
        %v774 = vpop.f32.mrb[0].mxu0
        %v775 = vadd.f32 0.0, %v774
        %v776 = vpop.f32.mrb[0].mxu0
        %777 = vmatprep.mubr.bf16.mxu0 0
        %778 = vmatmul.mubr.bf16.gmra.mrb[0].mxu0 %v639
        %v779 = vpop.f32.mrb[0].mxu0
        %v780 = vadd.f32 0.0, %v779
        %v781 = vpop.f32.mrb[0].mxu0
        %v782 = vpop.f32.mrb[0].mxu0
        %v783 = vadd.f32 0.0, %v782
        %v784 = vpop.f32.mrb[0].mxu0
        %785 = vmatprep.mubr.bf16.mxu0 0
        %786 = vmatmul.mubr.bf16.gmra.mrb[0].mxu0 %v640
        %v787 = vpop.f32.mrb[0].mxu0
        %v788 = vadd.f32 0.0, %v787
        %v789 = vpop.f32.mrb[0].mxu0
        %v790 = vpop.f32.mrb[0].mxu0
        %v791 = vadd.f32 0.0, %v790
        %v792 = vpop.f32.mrb[0].mxu0
        %793 = vdwg.mxu0
        %v794 = vadd.f32 %v553, %v732
        %v795 = vadd.f32 %v554, %v735
        %v796 = vadd.f32 %v555, %v740
        %v797 = vadd.f32 %v556, %v743
        %v798 = vadd.f32 %v557, %v748
        %v799 = vadd.f32 %v558, %v751
        %v800 = vadd.f32 %v559, %v756
        %v801 = vadd.f32 %v560, %v759
        %v802 = vadd.f32 %v561, %v764
        %v803 = vadd.f32 %v562, %v767
        %v804 = vadd.f32 %v563, %v772
        %v805 = vadd.f32 %v564, %v775
        %v806 = vadd.f32 %v565, %v780
        %v807 = vadd.f32 %v566, %v783
        %v808 = vadd.f32 %v567, %v788
        %v809 = vadd.f32 %v568, %v791
        %810 = vst [vmem:[#allocation2] sm:$0xff] %v794
        %811 = vst [vmem:[#allocation2 + $0x8] sm:$0xff] %v795
        %812 = vst [vmem:[#allocation2 + $0x10] sm:$0xff] %v796
        %813 = vst [vmem:[#allocation2 + $0x18] sm:$0xff] %v797
        %814 = vst [vmem:[#allocation2 + $0x20] sm:$0xff] %v798
        %815 = vst [vmem:[#allocation2 + $0x28] sm:$0xff] %v799
        %816 = vst [vmem:[#allocation2 + $0x30] sm:$0xff] %v800
        %817 = vst [vmem:[#allocation2 + $0x38] sm:$0xff] %v801
        %818 = vst [vmem:[#allocation2 + $0x40] sm:$0xff] %v802
        %819 = vst [vmem:[#allocation2 + $0x48] sm:$0xff] %v803
        %820 = vst [vmem:[#allocation2 + $0x50] sm:$0xff] %v804
        %821 = vst [vmem:[#allocation2 + $0x58] sm:$0xff] %v805
        %822 = vst [vmem:[#allocation2 + $0x60] sm:$0xff] %v806
        %823 = vst [vmem:[#allocation2 + $0x68] sm:$0xff] %v807
        %824 = vst [vmem:[#allocation2 + $0x70] sm:$0xff] %v808
        %825 = vst [vmem:[#allocation2 + $0x78] sm:$0xff] %v809
      $region64: #{forward.9} parent=55 // pred_fallthru
        _
      %p826 = scmp.ge.s32.totalorder %s25, 1
      // Predicated region
      $region65: #{forward.9} parent=55 // pred_check
        %p827 = pneg %p826
      $region66: #{forward.9} parent=55 // pred_check_branch
        %829 = sbr.rel (%p827) target = $region68
      $region67: #{forward.9} parent=55 // pred_region
        %v830 = vld [vmem:[#allocation2] sm:$0xff]
        %v831 = vld [vmem:[#allocation2 + $0x8] sm:$0xff]
        %v832 = vld [vmem:[#allocation2 + $0x10] sm:$0xff]
        %v833 = vld [vmem:[#allocation2 + $0x18] sm:$0xff]
        %v834 = vld [vmem:[#allocation2 + $0x20] sm:$0xff]
        %v835 = vld [vmem:[#allocation2 + $0x28] sm:$0xff]
        %v836 = vld [vmem:[#allocation2 + $0x30] sm:$0xff]
        %v837 = vld [vmem:[#allocation2 + $0x38] sm:$0xff]
        %v838 = vld [vmem:[#allocation2 + $0x40] sm:$0xff]
        %v839 = vld [vmem:[#allocation2 + $0x48] sm:$0xff]
        %v840 = vld [vmem:[#allocation2 + $0x50] sm:$0xff]
        %v841 = vld [vmem:[#allocation2 + $0x58] sm:$0xff]
        %v842 = vld [vmem:[#allocation2 + $0x60] sm:$0xff]
        %v843 = vld [vmem:[#allocation2 + $0x68] sm:$0xff]
        %v844 = vld [vmem:[#allocation2 + $0x70] sm:$0xff]
        %v845 = vld [vmem:[#allocation2 + $0x78] sm:$0xff]
        %v846 = vld [vmem:[%s489] sm:$0xf]
        %v847 = vld [vmem:[%s489 + $0x4] sm:$0xf]
        %v848 = vld [vmem:[%s489 + $0x8] sm:$0xf]
        %v849 = vld [vmem:[%s489 + $0xc] sm:$0xf]
        %v850 = vld [vmem:[%s489 + $0x10] sm:$0xf]
        %v851 = vld [vmem:[%s489 + $0x14] sm:$0xf]
        %v852 = vld [vmem:[%s489 + $0x18] sm:$0xf]
        %v853 = vld [vmem:[%s489 + $0x1c] sm:$0xf]
        %v854 = vld [vmem:[%s489 + $0x20] sm:$0xf]
        %v855 = vld [vmem:[%s489 + $0x24] sm:$0xf]
        %v856 = vld [vmem:[%s489 + $0x28] sm:$0xf]
        %v857 = vld [vmem:[%s489 + $0x2c] sm:$0xf]
        %v858 = vld [vmem:[%s489 + $0x30] sm:$0xf]
        %v859 = vld [vmem:[%s489 + $0x34] sm:$0xf]
        %v860 = vld [vmem:[%s489 + $0x38] sm:$0xf]
        %v861 = vld [vmem:[%s489 + $0x3c] sm:$0xf]
        %v862 = vld [vmem:[%s511] sm:$0xf]
        %v863 = vld [vmem:[%s511 + $0x4] sm:$0xf]
        %v864 = vld [vmem:[%s511 + $0x8] sm:$0xf]
        %v865 = vld [vmem:[%s511 + $0xc] sm:$0xf]
        %v866 = vld [vmem:[%s511 + $0x10] sm:$0xf]
        %v867 = vld [vmem:[%s511 + $0x14] sm:$0xf]
        %v868 = vld [vmem:[%s511 + $0x18] sm:$0xf]
        %v869 = vld [vmem:[%s511 + $0x1c] sm:$0xf]
        %v870 = vld [vmem:[%s511 + $0x20] sm:$0xf]
        %v871 = vld [vmem:[%s511 + $0x24] sm:$0xf]
        %v872 = vld [vmem:[%s511 + $0x28] sm:$0xf]
        %v873 = vld [vmem:[%s511 + $0x2c] sm:$0xf]
        %v874 = vld [vmem:[%s511 + $0x30] sm:$0xf]
        %v875 = vld [vmem:[%s511 + $0x34] sm:$0xf]
        %v876 = vld [vmem:[%s511 + $0x38] sm:$0xf]
        %v877 = vld [vmem:[%s511 + $0x3c] sm:$0xf]
        %v894 = vunpack.c.l.b16 %v846
        %v895 = vunpack.c.l.b16 %v847
        %v896 = vunpack.c.l.b16 %v848
        %v897 = vunpack.c.l.b16 %v849
        %v898 = vunpack.c.l.b16 %v850
        %v899 = vunpack.c.l.b16 %v851
        %v900 = vunpack.c.l.b16 %v852
        %v901 = vunpack.c.l.b16 %v853
        %v902 = vunpack.c.l.b16 %v854
        %v903 = vunpack.c.l.b16 %v855
        %v904 = vunpack.c.l.b16 %v856
        %v905 = vunpack.c.l.b16 %v857
        %v906 = vunpack.c.l.b16 %v858
        %v907 = vunpack.c.l.b16 %v859
        %v908 = vunpack.c.l.b16 %v860
        %v909 = vunpack.c.l.b16 %v861
        %v910 = vpack.c.b16 %v895, %v894
        %v911 = vpack.c.b16 %v897, %v896
        %v912 = vpack.c.b16 %v899, %v898
        %v913 = vpack.c.b16 %v901, %v900
        %v914 = vpack.c.b16 %v903, %v902
        %v915 = vpack.c.b16 %v905, %v904
        %v916 = vpack.c.b16 %v907, %v906
        %v917 = vpack.c.b16 %v909, %v908
        %v942 = vunpack.c.l.b16 %v862
        %v943 = vunpack.c.l.b16 %v863
        %v944 = vunpack.c.l.b16 %v864
        %v945 = vunpack.c.l.b16 %v865
        %v946 = vunpack.c.l.b16 %v866
        %v947 = vunpack.c.l.b16 %v867
        %v948 = vunpack.c.l.b16 %v868
        %v949 = vunpack.c.l.b16 %v869
        %v950 = vunpack.c.l.b16 %v870
        %v951 = vunpack.c.l.b16 %v871
        %v952 = vunpack.c.l.b16 %v872
        %v953 = vunpack.c.l.b16 %v873
        %v954 = vunpack.c.l.b16 %v874
        %v955 = vunpack.c.l.b16 %v875
        %v956 = vunpack.c.l.b16 %v876
        %v957 = vunpack.c.l.b16 %v877
        %v958 = vpack.c.b16 %v943, %v942
        %v959 = vpack.c.b16 %v945, %v944
        %v960 = vpack.c.b16 %v947, %v946
        %v961 = vpack.c.b16 %v949, %v948
        %v962 = vpack.c.b16 %v951, %v950
        %v963 = vpack.c.b16 %v953, %v952
        %v964 = vpack.c.b16 %v955, %v954
        %v965 = vpack.c.b16 %v957, %v956
        %974 = vmatprep.subr.bf16.mxu0 0
        %975 = vmatpush1.bf16.msra.mxu0 %v958
        %976 = vmatprep.subr.bf16.mxu0 0
        %977 = vmatpush1.bf16.msra.mxu0 %v959
        %978 = vmatprep.subr.bf16.mxu0 0
        %979 = vmatpush1.bf16.msra.mxu0 %v960
        %980 = vmatprep.subr.bf16.mxu0 0
        %981 = vmatpush1.bf16.msra.mxu0 %v961
        %982 = vmatprep.subr.bf16.mxu0 0
        %983 = vmatpush1.bf16.msra.mxu0 %v962
        %984 = vmatprep.subr.bf16.mxu0 0
        %985 = vmatpush1.bf16.msra.mxu0 %v963
        %986 = vmatprep.subr.bf16.mxu0 0
        %987 = vmatpush1.bf16.msra.mxu0 %v964
        %988 = vmatprep.subr.bf16.mxu0 0
        %989 = vmatpush1.bf16.msra.mxu0 %v965
        %990 = vmatprep.subr.bf16.mxu0 0
        %991 = vmatpush1.bf16.msra.mxu0 0
        %992 = vmatprep.subr.bf16.mxu0 0
        %993 = vmatpush1.bf16.msra.mxu0 0
        %994 = vmatprep.subr.bf16.mxu0 0
        %995 = vmatpush1.bf16.msra.mxu0 0
        %996 = vmatprep.subr.bf16.mxu0 0
        %997 = vmatpush1.bf16.msra.mxu0 0
        %998 = vmatprep.subr.bf16.mxu0 0
        %999 = vmatpush1.bf16.msra.mxu0 0
        %1000 = vmatprep.subr.bf16.mxu0 0
        %1001 = vmatpush1.bf16.msra.mxu0 0
        %1002 = vmatprep.subr.bf16.mxu0 0
        %1003 = vmatpush1.bf16.msra.mxu0 0
        %1004 = vmatprep.subr.bf16.mxu0 0
        %1005 = vmatpush1.bf16.msra.mxu0 0
        %1006 = vmatprep.mubr.bf16.mxu0 0
        %1007 = vmatmul.mubr.bf16.gmra.mrb[0].mxu0 %v910
        %v1008 = vpop.f32.mrb[0].mxu0
        %v1009 = vadd.f32 0.0, %v1008
        %v1010 = vpop.f32.mrb[0].mxu0
        %v1011 = vpop.f32.mrb[0].mxu0
        %v1012 = vadd.f32 0.0, %v1011
        %v1013 = vpop.f32.mrb[0].mxu0
        %1014 = vmatprep.mubr.bf16.mxu0 0
        %1015 = vmatmul.mubr.bf16.gmra.mrb[0].mxu0 %v911
        %v1016 = vpop.f32.mrb[0].mxu0
        %v1017 = vadd.f32 0.0, %v1016
        %v1018 = vpop.f32.mrb[0].mxu0
        %v1019 = vpop.f32.mrb[0].mxu0
        %v1020 = vadd.f32 0.0, %v1019
        %v1021 = vpop.f32.mrb[0].mxu0
        %1022 = vmatprep.mubr.bf16.mxu0 0
        %1023 = vmatmul.mubr.bf16.gmra.mrb[0].mxu0 %v912
        %v1024 = vpop.f32.mrb[0].mxu0
        %v1025 = vadd.f32 0.0, %v1024
        %v1026 = vpop.f32.mrb[0].mxu0
        %v1027 = vpop.f32.mrb[0].mxu0
        %v1028 = vadd.f32 0.0, %v1027
        %v1029 = vpop.f32.mrb[0].mxu0
        %1030 = vmatprep.mubr.bf16.mxu0 0
        %1031 = vmatmul.mubr.bf16.gmra.mrb[0].mxu0 %v913
        %v1032 = vpop.f32.mrb[0].mxu0
        %v1033 = vadd.f32 0.0, %v1032
        %v1034 = vpop.f32.mrb[0].mxu0
        %v1035 = vpop.f32.mrb[0].mxu0
        %v1036 = vadd.f32 0.0, %v1035
        %v1037 = vpop.f32.mrb[0].mxu0
        %1038 = vmatprep.mubr.bf16.mxu0 0
        %1039 = vmatmul.mubr.bf16.gmra.mrb[0].mxu0 %v914
        %v1040 = vpop.f32.mrb[0].mxu0
        %v1041 = vadd.f32 0.0, %v1040
        %v1042 = vpop.f32.mrb[0].mxu0
        %v1043 = vpop.f32.mrb[0].mxu0
        %v1044 = vadd.f32 0.0, %v1043
        %v1045 = vpop.f32.mrb[0].mxu0
        %1046 = vmatprep.mubr.bf16.mxu0 0
        %1047 = vmatmul.mubr.bf16.gmra.mrb[0].mxu0 %v915
        %v1048 = vpop.f32.mrb[0].mxu0
        %v1049 = vadd.f32 0.0, %v1048
        %v1050 = vpop.f32.mrb[0].mxu0
        %v1051 = vpop.f32.mrb[0].mxu0
        %v1052 = vadd.f32 0.0, %v1051
        %v1053 = vpop.f32.mrb[0].mxu0
        %1054 = vmatprep.mubr.bf16.mxu0 0
        %1055 = vmatmul.mubr.bf16.gmra.mrb[0].mxu0 %v916
        %v1056 = vpop.f32.mrb[0].mxu0
        %v1057 = vadd.f32 0.0, %v1056
        %v1058 = vpop.f32.mrb[0].mxu0
        %v1059 = vpop.f32.mrb[0].mxu0
        %v1060 = vadd.f32 0.0, %v1059
        %v1061 = vpop.f32.mrb[0].mxu0
        %1062 = vmatprep.mubr.bf16.mxu0 0
        %1063 = vmatmul.mubr.bf16.gmra.mrb[0].mxu0 %v917
        %v1064 = vpop.f32.mrb[0].mxu0
        %v1065 = vadd.f32 0.0, %v1064
        %v1066 = vpop.f32.mrb[0].mxu0
        %v1067 = vpop.f32.mrb[0].mxu0
        %v1068 = vadd.f32 0.0, %v1067
        %v1069 = vpop.f32.mrb[0].mxu0
        %1070 = vdwg.mxu0
        %v1071 = vadd.f32 %v830, %v1009
        %v1072 = vadd.f32 %v831, %v1012
        %v1073 = vadd.f32 %v832, %v1017
        %v1074 = vadd.f32 %v833, %v1020
        %v1075 = vadd.f32 %v834, %v1025
        %v1076 = vadd.f32 %v835, %v1028
        %v1077 = vadd.f32 %v836, %v1033
        %v1078 = vadd.f32 %v837, %v1036
        %v1079 = vadd.f32 %v838, %v1041
        %v1080 = vadd.f32 %v839, %v1044
        %v1081 = vadd.f32 %v840, %v1049
        %v1082 = vadd.f32 %v841, %v1052
        %v1083 = vadd.f32 %v842, %v1057
        %v1084 = vadd.f32 %v843, %v1060
        %v1085 = vadd.f32 %v844, %v1065
        %v1086 = vadd.f32 %v845, %v1068
        %1087 = vst [vmem:[#allocation2] sm:$0xff] %v1071
        %1088 = vst [vmem:[#allocation2 + $0x8] sm:$0xff] %v1072
        %1089 = vst [vmem:[#allocation2 + $0x10] sm:$0xff] %v1073
        %1090 = vst [vmem:[#allocation2 + $0x18] sm:$0xff] %v1074
        %1091 = vst [vmem:[#allocation2 + $0x20] sm:$0xff] %v1075
        %1092 = vst [vmem:[#allocation2 + $0x28] sm:$0xff] %v1076
        %1093 = vst [vmem:[#allocation2 + $0x30] sm:$0xff] %v1077
        %1094 = vst [vmem:[#allocation2 + $0x38] sm:$0xff] %v1078
        %1095 = vst [vmem:[#allocation2 + $0x40] sm:$0xff] %v1079
        %1096 = vst [vmem:[#allocation2 + $0x48] sm:$0xff] %v1080
        %1097 = vst [vmem:[#allocation2 + $0x50] sm:$0xff] %v1081
        %1098 = vst [vmem:[#allocation2 + $0x58] sm:$0xff] %v1082
        %1099 = vst [vmem:[#allocation2 + $0x60] sm:$0xff] %v1083
        %1100 = vst [vmem:[#allocation2 + $0x68] sm:$0xff] %v1084
        %1101 = vst [vmem:[#allocation2 + $0x70] sm:$0xff] %v1085
        %1102 = vst [vmem:[#allocation2 + $0x78] sm:$0xff] %v1086
      $region68: #{forward.9} parent=55 // pred_fallthru
        _
      %p1103 = scmp.eq.s32.totalorder %s25, 1
      // Predicated region
      $region69: #{forward.9} parent=55 // pred_check
        %p1104 = pneg %p1103
      $region70: #{forward.9} parent=55 // pred_check_branch
        %1106 = sbr.rel (%p1104) target = $region72
      $region71: #{forward.9} parent=55 // pred_region
        %v1107 = vld [vmem:[#allocation2] sm:$0xff]
        %v1108 = vld [vmem:[#allocation2 + $0x8] sm:$0xff]
        %v1109 = vld [vmem:[#allocation2 + $0x10] sm:$0xff]
        %v1110 = vld [vmem:[#allocation2 + $0x18] sm:$0xff]
        %v1111 = vld [vmem:[#allocation2 + $0x20] sm:$0xff]
        %v1112 = vld [vmem:[#allocation2 + $0x28] sm:$0xff]
        %v1113 = vld [vmem:[#allocation2 + $0x30] sm:$0xff]
        %v1114 = vld [vmem:[#allocation2 + $0x38] sm:$0xff]
        %v1115 = vld [vmem:[#allocation2 + $0x40] sm:$0xff]
        %v1116 = vld [vmem:[#allocation2 + $0x48] sm:$0xff]
        %v1117 = vld [vmem:[#allocation2 + $0x50] sm:$0xff]
        %v1118 = vld [vmem:[#allocation2 + $0x58] sm:$0xff]
        %v1119 = vld [vmem:[#allocation2 + $0x60] sm:$0xff]
        %v1120 = vld [vmem:[#allocation2 + $0x68] sm:$0xff]
        %v1121 = vld [vmem:[#allocation2 + $0x70] sm:$0xff]
        %v1122 = vld [vmem:[#allocation2 + $0x78] sm:$0xff]
        %v1123 = vld [vmem:[%s520] sm:$0xff]
        %v1124 = vld [vmem:[%s520 + $0x8] sm:$0xff]
        %v1125 = vld [vmem:[%s520 + $0x10] sm:$0xff]
        %v1126 = vld [vmem:[%s520 + $0x18] sm:$0xff]
        %v1127 = vld [vmem:[%s520 + $0x20] sm:$0xff]
        %v1128 = vld [vmem:[%s520 + $0x28] sm:$0xff]
        %v1129 = vld [vmem:[%s520 + $0x30] sm:$0xff]
        %v1130 = vld [vmem:[%s520 + $0x38] sm:$0xff]
        %v1131 = vld [vmem:[%s520 + $0x40] sm:$0xff]
        %v1132 = vld [vmem:[%s520 + $0x48] sm:$0xff]
        %v1133 = vld [vmem:[%s520 + $0x50] sm:$0xff]
        %v1134 = vld [vmem:[%s520 + $0x58] sm:$0xff]
        %v1135 = vld [vmem:[%s520 + $0x60] sm:$0xff]
        %v1136 = vld [vmem:[%s520 + $0x68] sm:$0xff]
        %v1137 = vld [vmem:[%s520 + $0x70] sm:$0xff]
        %v1138 = vld [vmem:[%s520 + $0x78] sm:$0xff]
        %v1139 = vld [vmem:[%s5] sm:$0x1]
        %1141 = vset.pattern.permute.xlu0 0
        %1142 = vperm.xlu0 %1141, %v1123
        %v1143 = vpop.permute.xlu0 %1142
        %1146 = vset.pattern.permute.xlu0 0
        %1147 = vperm.xlu0 %1146, %v1124
        %v1148 = vpop.permute.xlu0 %1147
        %1151 = vset.pattern.permute.xlu0 0
        %1152 = vperm.xlu0 %1151, %v1125
        %v1153 = vpop.permute.xlu0 %1152
        %1156 = vset.pattern.permute.xlu0 0
        %1157 = vperm.xlu0 %1156, %v1126
        %v1158 = vpop.permute.xlu0 %1157
        %1161 = vset.pattern.permute.xlu0 0
        %1162 = vperm.xlu0 %1161, %v1127
        %v1163 = vpop.permute.xlu0 %1162
        %1166 = vset.pattern.permute.xlu0 0
        %1167 = vperm.xlu0 %1166, %v1128
        %v1168 = vpop.permute.xlu0 %1167
        %1171 = vset.pattern.permute.xlu0 0
        %1172 = vperm.xlu0 %1171, %v1129
        %v1173 = vpop.permute.xlu0 %1172
        %1176 = vset.pattern.permute.xlu0 0
        %1177 = vperm.xlu0 %1176, %v1130
        %v1178 = vpop.permute.xlu0 %1177
        %1181 = vset.pattern.permute.xlu0 0
        %1182 = vperm.xlu0 %1181, %v1131
        %v1183 = vpop.permute.xlu0 %1182
        %1186 = vset.pattern.permute.xlu0 0
        %1187 = vperm.xlu0 %1186, %v1132
        %v1188 = vpop.permute.xlu0 %1187
        %1191 = vset.pattern.permute.xlu0 0
        %1192 = vperm.xlu0 %1191, %v1133
        %v1193 = vpop.permute.xlu0 %1192
        %1196 = vset.pattern.permute.xlu0 0
        %1197 = vperm.xlu0 %1196, %v1134
        %v1198 = vpop.permute.xlu0 %1197
        %1201 = vset.pattern.permute.xlu0 0
        %1202 = vperm.xlu0 %1201, %v1135
        %v1203 = vpop.permute.xlu0 %1202
        %1206 = vset.pattern.permute.xlu0 0
        %1207 = vperm.xlu0 %1206, %v1136
        %v1208 = vpop.permute.xlu0 %1207
        %1211 = vset.pattern.permute.xlu0 0
        %1212 = vperm.xlu0 %1211, %v1137
        %v1213 = vpop.permute.xlu0 %1212
        %1216 = vset.pattern.permute.xlu0 0
        %1217 = vperm.xlu0 %1216, %v1138
        %v1218 = vpop.permute.xlu0 %1217
        %v1221 = vlaneseq
        %v1222 = vshrl.u32 %v1221, 7
        %v1223 = vsub.s32 0, %v1222
        %v1224 = vrot.slane %v1139, %v1223
        %v1226 = vmul.f32 %v1143, %v1224
        %v1227 = vmul.f32 %v1148, %v1224
        %v1228 = vmul.f32 %v1153, %v1224
        %v1229 = vmul.f32 %v1158, %v1224
        %v1230 = vmul.f32 %v1163, %v1224
        %v1231 = vmul.f32 %v1168, %v1224
        %v1232 = vmul.f32 %v1173, %v1224
        %v1233 = vmul.f32 %v1178, %v1224
        %v1234 = vmul.f32 %v1183, %v1224
        %v1235 = vmul.f32 %v1188, %v1224
        %v1236 = vmul.f32 %v1193, %v1224
        %v1237 = vmul.f32 %v1198, %v1224
        %v1238 = vmul.f32 %v1203, %v1224
        %v1239 = vmul.f32 %v1208, %v1224
        %v1240 = vmul.f32 %v1213, %v1224
        %v1241 = vmul.f32 %v1218, %v1224
        %v1242 = vadd.f32 %v1107, %v1226
        %v1243 = vadd.f32 %v1108, %v1227
        %v1244 = vadd.f32 %v1109, %v1228
        %v1245 = vadd.f32 %v1110, %v1229
        %v1246 = vadd.f32 %v1111, %v1230
        %v1247 = vadd.f32 %v1112, %v1231
        %v1248 = vadd.f32 %v1113, %v1232
        %v1249 = vadd.f32 %v1114, %v1233
        %v1250 = vadd.f32 %v1115, %v1234
        %v1251 = vadd.f32 %v1116, %v1235
        %v1252 = vadd.f32 %v1117, %v1236
        %v1253 = vadd.f32 %v1118, %v1237
        %v1254 = vadd.f32 %v1119, %v1238
        %v1255 = vadd.f32 %v1120, %v1239
        %v1256 = vadd.f32 %v1121, %v1240
        %v1257 = vadd.f32 %v1122, %v1241
        %v1258 = vld [vmem:[%s6] sm:$0x1]
        %v1260 = vlaneseq
        %v1261 = vshrl.u32 %v1260, 7
        %v1262 = vsub.s32 0, %v1261
        %v1263 = vrot.slane %v1258, %v1262
        %v1265 = vadd.f32 %v1242, %v1263
        %v1266 = vadd.f32 %v1243, %v1263
        %v1267 = vadd.f32 %v1244, %v1263
        %v1268 = vadd.f32 %v1245, %v1263
        %v1269 = vadd.f32 %v1246, %v1263
        %v1270 = vadd.f32 %v1247, %v1263
        %v1271 = vadd.f32 %v1248, %v1263
        %v1272 = vadd.f32 %v1249, %v1263
        %v1273 = vadd.f32 %v1250, %v1263
        %v1274 = vadd.f32 %v1251, %v1263
        %v1275 = vadd.f32 %v1252, %v1263
        %v1276 = vadd.f32 %v1253, %v1263
        %v1277 = vadd.f32 %v1254, %v1263
        %v1278 = vadd.f32 %v1255, %v1263
        %v1279 = vadd.f32 %v1256, %v1263
        %v1280 = vadd.f32 %v1257, %v1263
        %v1281 = vld [vmem:[%s7] sm:$0x1]
        %v1282 = vld [vmem:[%s8] sm:$0x1]
        %1283 = vadd.xlane.f32.xlu0 %v1265
        %v1284 = vpop.xlane.xlu0 %1283
        %1285 = vadd.xlane.f32.xlu0 %v1266
        %v1286 = vpop.xlane.xlu0 %1285
        %1287 = vadd.xlane.f32.xlu0 %v1267
        %v1288 = vpop.xlane.xlu0 %1287
        %1289 = vadd.xlane.f32.xlu0 %v1268
        %v1290 = vpop.xlane.xlu0 %1289
        %1291 = vadd.xlane.f32.xlu0 %v1269
        %v1292 = vpop.xlane.xlu0 %1291
        %1293 = vadd.xlane.f32.xlu0 %v1270
        %v1294 = vpop.xlane.xlu0 %1293
        %1295 = vadd.xlane.f32.xlu0 %v1271
        %v1296 = vpop.xlane.xlu0 %1295
        %1297 = vadd.xlane.f32.xlu0 %v1272
        %v1298 = vpop.xlane.xlu0 %1297
        %1299 = vadd.xlane.f32.xlu0 %v1273
        %v1300 = vpop.xlane.xlu0 %1299
        %1301 = vadd.xlane.f32.xlu0 %v1274
        %v1302 = vpop.xlane.xlu0 %1301
        %1303 = vadd.xlane.f32.xlu0 %v1275
        %v1304 = vpop.xlane.xlu0 %1303
        %1305 = vadd.xlane.f32.xlu0 %v1276
        %v1306 = vpop.xlane.xlu0 %1305
        %1307 = vadd.xlane.f32.xlu0 %v1277
        %v1308 = vpop.xlane.xlu0 %1307
        %1309 = vadd.xlane.f32.xlu0 %v1278
        %v1310 = vpop.xlane.xlu0 %1309
        %1311 = vadd.xlane.f32.xlu0 %v1279
        %v1312 = vpop.xlane.xlu0 %1311
        %1313 = vadd.xlane.f32.xlu0 %v1280
        %v1314 = vpop.xlane.xlu0 %1313
        %v1315 = vmul.f32 %v1265, %v1265
        %v1316 = vmul.f32 %v1266, %v1266
        %v1317 = vmul.f32 %v1267, %v1267
        %v1318 = vmul.f32 %v1268, %v1268
        %v1319 = vmul.f32 %v1269, %v1269
        %v1320 = vmul.f32 %v1270, %v1270
        %v1321 = vmul.f32 %v1271, %v1271
        %v1322 = vmul.f32 %v1272, %v1272
        %v1323 = vmul.f32 %v1273, %v1273
        %v1324 = vmul.f32 %v1274, %v1274
        %v1325 = vmul.f32 %v1275, %v1275
        %v1326 = vmul.f32 %v1276, %v1276
        %v1327 = vmul.f32 %v1277, %v1277
        %v1328 = vmul.f32 %v1278, %v1278
        %v1329 = vmul.f32 %v1279, %v1279
        %v1330 = vmul.f32 %v1280, %v1280
        %1331 = vadd.xlane.f32.xlu0 %v1315
        %v1332 = vpop.xlane.xlu0 %1331
        %1333 = vadd.xlane.f32.xlu0 %v1316
        %v1334 = vpop.xlane.xlu0 %1333
        %1335 = vadd.xlane.f32.xlu0 %v1317
        %v1336 = vpop.xlane.xlu0 %1335
        %1337 = vadd.xlane.f32.xlu0 %v1318
        %v1338 = vpop.xlane.xlu0 %1337
        %1339 = vadd.xlane.f32.xlu0 %v1319
        %v1340 = vpop.xlane.xlu0 %1339
        %1341 = vadd.xlane.f32.xlu0 %v1320
        %v1342 = vpop.xlane.xlu0 %1341
        %1343 = vadd.xlane.f32.xlu0 %v1321
        %v1344 = vpop.xlane.xlu0 %1343
        %1345 = vadd.xlane.f32.xlu0 %v1322
        %v1346 = vpop.xlane.xlu0 %1345
        %1347 = vadd.xlane.f32.xlu0 %v1323
        %v1348 = vpop.xlane.xlu0 %1347
        %1349 = vadd.xlane.f32.xlu0 %v1324
        %v1350 = vpop.xlane.xlu0 %1349
        %1351 = vadd.xlane.f32.xlu0 %v1325
        %v1352 = vpop.xlane.xlu0 %1351
        %1353 = vadd.xlane.f32.xlu0 %v1326
        %v1354 = vpop.xlane.xlu0 %1353
        %1355 = vadd.xlane.f32.xlu0 %v1327
        %v1356 = vpop.xlane.xlu0 %1355
        %1357 = vadd.xlane.f32.xlu0 %v1328
        %v1358 = vpop.xlane.xlu0 %1357
        %1359 = vadd.xlane.f32.xlu0 %v1329
        %v1360 = vpop.xlane.xlu0 %1359
        %1361 = vadd.xlane.f32.xlu0 %v1330
        %v1362 = vpop.xlane.xlu0 %1361
        %v1363 = vmul.f32 %v1284, 0.03125
        %v1364 = vmul.f32 %v1286, 0.03125
        %v1365 = vmul.f32 %v1288, 0.03125
        %v1366 = vmul.f32 %v1290, 0.03125
        %v1367 = vmul.f32 %v1292, 0.03125
        %v1368 = vmul.f32 %v1294, 0.03125
        %v1369 = vmul.f32 %v1296, 0.03125
        %v1370 = vmul.f32 %v1298, 0.03125
        %v1371 = vmul.f32 %v1300, 0.03125
        %v1372 = vmul.f32 %v1302, 0.03125
        %v1373 = vmul.f32 %v1304, 0.03125
        %v1374 = vmul.f32 %v1306, 0.03125
        %v1375 = vmul.f32 %v1308, 0.03125
        %v1376 = vmul.f32 %v1310, 0.03125
        %v1377 = vmul.f32 %v1312, 0.03125
        %v1378 = vmul.f32 %v1314, 0.03125
        %v1379 = vmul.f32 %v1332, 0.03125
        %v1380 = vmul.f32 %v1334, 0.03125
        %v1381 = vmul.f32 %v1336, 0.03125
        %v1382 = vmul.f32 %v1338, 0.03125
        %v1383 = vmul.f32 %v1340, 0.03125
        %v1384 = vmul.f32 %v1342, 0.03125
        %v1385 = vmul.f32 %v1344, 0.03125
        %v1386 = vmul.f32 %v1346, 0.03125
        %v1387 = vmul.f32 %v1348, 0.03125
        %v1388 = vmul.f32 %v1350, 0.03125
        %v1389 = vmul.f32 %v1352, 0.03125
        %v1390 = vmul.f32 %v1354, 0.03125
        %v1391 = vmul.f32 %v1356, 0.03125
        %v1392 = vmul.f32 %v1358, 0.03125
        %v1393 = vmul.f32 %v1360, 0.03125
        %v1394 = vmul.f32 %v1362, 0.03125
        %v1395 = vmul.f32 %v1363, %v1363
        %v1396 = vmul.f32 %v1364, %v1364
        %v1397 = vmul.f32 %v1365, %v1365
        %v1398 = vmul.f32 %v1366, %v1366
        %v1399 = vmul.f32 %v1367, %v1367
        %v1400 = vmul.f32 %v1368, %v1368
        %v1401 = vmul.f32 %v1369, %v1369
        %v1402 = vmul.f32 %v1370, %v1370
        %v1403 = vmul.f32 %v1371, %v1371
        %v1404 = vmul.f32 %v1372, %v1372
        %v1405 = vmul.f32 %v1373, %v1373
        %v1406 = vmul.f32 %v1374, %v1374
        %v1407 = vmul.f32 %v1375, %v1375
        %v1408 = vmul.f32 %v1376, %v1376
        %v1409 = vmul.f32 %v1377, %v1377
        %v1410 = vmul.f32 %v1378, %v1378
        %v1411 = vsub.f32 %v1379, %v1395
        %v1412 = vsub.f32 %v1380, %v1396
        %v1413 = vsub.f32 %v1381, %v1397
        %v1414 = vsub.f32 %v1382, %v1398
        %v1415 = vsub.f32 %v1383, %v1399
        %v1416 = vsub.f32 %v1384, %v1400
        %v1417 = vsub.f32 %v1385, %v1401
        %v1418 = vsub.f32 %v1386, %v1402
        %v1419 = vsub.f32 %v1387, %v1403
        %v1420 = vsub.f32 %v1388, %v1404
        %v1421 = vsub.f32 %v1389, %v1405
        %v1422 = vsub.f32 %v1390, %v1406
        %v1423 = vsub.f32 %v1391, %v1407
        %v1424 = vsub.f32 %v1392, %v1408
        %v1425 = vsub.f32 %v1393, %v1409
        %v1426 = vsub.f32 %v1394, %v1410
        %v1427 = vsub.f32 %v1265, %v1363
        %v1428 = vsub.f32 %v1266, %v1364
        %v1429 = vsub.f32 %v1267, %v1365
        %v1430 = vsub.f32 %v1268, %v1366
        %v1431 = vsub.f32 %v1269, %v1367
        %v1432 = vsub.f32 %v1270, %v1368
        %v1433 = vsub.f32 %v1271, %v1369
        %v1434 = vsub.f32 %v1272, %v1370
        %v1435 = vsub.f32 %v1273, %v1371
        %v1436 = vsub.f32 %v1274, %v1372
        %v1437 = vsub.f32 %v1275, %v1373
        %v1438 = vsub.f32 %v1276, %v1374
        %v1439 = vsub.f32 %v1277, %v1375
        %v1440 = vsub.f32 %v1278, %v1376
        %v1441 = vsub.f32 %v1279, %v1377
        %v1442 = vsub.f32 %v1280, %v1378
        %v1443 = vadd.f32 %v1411, 1e-05
        %v1444 = vadd.f32 %v1412, 1e-05
        %v1445 = vadd.f32 %v1413, 1e-05
        %v1446 = vadd.f32 %v1414, 1e-05
        %v1447 = vadd.f32 %v1415, 1e-05
        %v1448 = vadd.f32 %v1416, 1e-05
        %v1449 = vadd.f32 %v1417, 1e-05
        %v1450 = vadd.f32 %v1418, 1e-05
        %v1451 = vadd.f32 %v1419, 1e-05
        %v1452 = vadd.f32 %v1420, 1e-05
        %v1453 = vadd.f32 %v1421, 1e-05
        %v1454 = vadd.f32 %v1422, 1e-05
        %v1455 = vadd.f32 %v1423, 1e-05
        %v1456 = vadd.f32 %v1424, 1e-05
        %v1457 = vadd.f32 %v1425, 1e-05
        %v1458 = vadd.f32 %v1426, 1e-05
        %v1459 = vrsqrt.pop %v1443
        %v1460 = vrsqrt.pop %v1444
        %v1461 = vrsqrt.pop %v1445
        %v1462 = vrsqrt.pop %v1446
        %v1463 = vrsqrt.pop %v1447
        %v1464 = vrsqrt.pop %v1448
        %v1465 = vrsqrt.pop %v1449
        %v1466 = vrsqrt.pop %v1450
        %v1467 = vrsqrt.pop %v1451
        %v1468 = vrsqrt.pop %v1452
        %v1469 = vrsqrt.pop %v1453
        %v1470 = vrsqrt.pop %v1454
        %v1471 = vrsqrt.pop %v1455
        %v1472 = vrsqrt.pop %v1456
        %v1473 = vrsqrt.pop %v1457
        %v1474 = vrsqrt.pop %v1458
        %v1475 = vmul.f32 %v1427, %v1459
        %v1476 = vmul.f32 %v1428, %v1460
        %v1477 = vmul.f32 %v1429, %v1461
        %v1478 = vmul.f32 %v1430, %v1462
        %v1479 = vmul.f32 %v1431, %v1463
        %v1480 = vmul.f32 %v1432, %v1464
        %v1481 = vmul.f32 %v1433, %v1465
        %v1482 = vmul.f32 %v1434, %v1466
        %v1483 = vmul.f32 %v1435, %v1467
        %v1484 = vmul.f32 %v1436, %v1468
        %v1485 = vmul.f32 %v1437, %v1469
        %v1486 = vmul.f32 %v1438, %v1470
        %v1487 = vmul.f32 %v1439, %v1471
        %v1488 = vmul.f32 %v1440, %v1472
        %v1489 = vmul.f32 %v1441, %v1473
        %v1490 = vmul.f32 %v1442, %v1474
        %v1492 = vlaneseq
        %v1493 = vshrl.u32 %v1492, 7
        %v1494 = vsub.s32 0, %v1493
        %v1495 = vrot.slane %v1281, %v1494
        %v1497 = vmul.f32 %v1475, %v1495
        %v1498 = vmul.f32 %v1476, %v1495
        %v1499 = vmul.f32 %v1477, %v1495
        %v1500 = vmul.f32 %v1478, %v1495
        %v1501 = vmul.f32 %v1479, %v1495
        %v1502 = vmul.f32 %v1480, %v1495
        %v1503 = vmul.f32 %v1481, %v1495
        %v1504 = vmul.f32 %v1482, %v1495
        %v1505 = vmul.f32 %v1483, %v1495
        %v1506 = vmul.f32 %v1484, %v1495
        %v1507 = vmul.f32 %v1485, %v1495
        %v1508 = vmul.f32 %v1486, %v1495
        %v1509 = vmul.f32 %v1487, %v1495
        %v1510 = vmul.f32 %v1488, %v1495
        %v1511 = vmul.f32 %v1489, %v1495
        %v1512 = vmul.f32 %v1490, %v1495
        %v1514 = vlaneseq
        %v1515 = vshrl.u32 %v1514, 7
        %v1516 = vsub.s32 0, %v1515
        %v1517 = vrot.slane %v1282, %v1516
        %v1519 = vadd.f32 %v1497, %v1517
        %v1520 = vadd.f32 %v1498, %v1517
        %v1521 = vadd.f32 %v1499, %v1517
        %v1522 = vadd.f32 %v1500, %v1517
        %v1523 = vadd.f32 %v1501, %v1517
        %v1524 = vadd.f32 %v1502, %v1517
        %v1525 = vadd.f32 %v1503, %v1517
        %v1526 = vadd.f32 %v1504, %v1517
        %v1527 = vadd.f32 %v1505, %v1517
        %v1528 = vadd.f32 %v1506, %v1517
        %v1529 = vadd.f32 %v1507, %v1517
        %v1530 = vadd.f32 %v1508, %v1517
        %v1531 = vadd.f32 %v1509, %v1517
        %v1532 = vadd.f32 %v1510, %v1517
        %v1533 = vadd.f32 %v1511, %v1517
        %v1534 = vadd.f32 %v1512, %v1517
        %v1535 = vtanh.pop %v1519
        %v1536 = vtanh.pop %v1520
        %v1537 = vtanh.pop %v1521
        %v1538 = vtanh.pop %v1522
        %v1539 = vtanh.pop %v1523
        %v1540 = vtanh.pop %v1524
        %v1541 = vtanh.pop %v1525
        %v1542 = vtanh.pop %v1526
        %v1543 = vtanh.pop %v1527
        %v1544 = vtanh.pop %v1528
        %v1545 = vtanh.pop %v1529
        %v1546 = vtanh.pop %v1530
        %v1547 = vtanh.pop %v1531
        %v1548 = vtanh.pop %v1532
        %v1549 = vtanh.pop %v1533
        %v1550 = vtanh.pop %v1534
        %v1551 = vpack.c.bf16 %v1536, %v1535
        %v1552 = vpack.c.bf16 %v1538, %v1537
        %v1553 = vpack.c.bf16 %v1540, %v1539
        %v1554 = vpack.c.bf16 %v1542, %v1541
        %v1555 = vpack.c.bf16 %v1544, %v1543
        %v1556 = vpack.c.bf16 %v1546, %v1545
        %v1557 = vpack.c.bf16 %v1548, %v1547
        %v1558 = vpack.c.bf16 %v1550, %v1549
        %v1567 = vunpack.c.l.b16 %v1551
        %v1568 = vunpack.c.h.b16 %v1551
        %v1569 = vunpack.c.l.b16 %v1552
        %v1570 = vunpack.c.h.b16 %v1552
        %v1571 = vunpack.c.l.b16 %v1553
        %v1572 = vunpack.c.h.b16 %v1553
        %v1573 = vunpack.c.l.b16 %v1554
        %v1574 = vunpack.c.h.b16 %v1554
        %v1575 = vunpack.c.l.b16 %v1555
        %v1576 = vunpack.c.h.b16 %v1555
        %v1577 = vunpack.c.l.b16 %v1556
        %v1578 = vunpack.c.h.b16 %v1556
        %v1579 = vunpack.c.l.b16 %v1557
        %v1580 = vunpack.c.h.b16 %v1557
        %v1581 = vunpack.c.l.b16 %v1558
        %v1582 = vunpack.c.h.b16 %v1558
        %v1583 = vpack.c.b16 %v1567, %v1567
        %v1584 = vpack.c.b16 %v1568, %v1568
        %v1585 = vpack.c.b16 %v1569, %v1569
        %v1586 = vpack.c.b16 %v1570, %v1570
        %v1587 = vpack.c.b16 %v1571, %v1571
        %v1588 = vpack.c.b16 %v1572, %v1572
        %v1589 = vpack.c.b16 %v1573, %v1573
        %v1590 = vpack.c.b16 %v1574, %v1574
        %v1591 = vpack.c.b16 %v1575, %v1575
        %v1592 = vpack.c.b16 %v1576, %v1576
        %v1593 = vpack.c.b16 %v1577, %v1577
        %v1594 = vpack.c.b16 %v1578, %v1578
        %v1595 = vpack.c.b16 %v1579, %v1579
        %v1596 = vpack.c.b16 %v1580, %v1580
        %v1597 = vpack.c.b16 %v1581, %v1581
        %v1598 = vpack.c.b16 %v1582, %v1582
        %1615 = vst [vmem:[%s526] sm:$0xf] %v1583
        %1616 = vst [vmem:[%s526 + $0x4] sm:$0xf] %v1584
        %1617 = vst [vmem:[%s526 + $0x8] sm:$0xf] %v1585
        %1618 = vst [vmem:[%s526 + $0xc] sm:$0xf] %v1586
        %1619 = vst [vmem:[%s526 + $0x10] sm:$0xf] %v1587
        %1620 = vst [vmem:[%s526 + $0x14] sm:$0xf] %v1588
        %1621 = vst [vmem:[%s526 + $0x18] sm:$0xf] %v1589
        %1622 = vst [vmem:[%s526 + $0x1c] sm:$0xf] %v1590
        %1623 = vst [vmem:[%s526 + $0x20] sm:$0xf] %v1591
        %1624 = vst [vmem:[%s526 + $0x24] sm:$0xf] %v1592
        %1625 = vst [vmem:[%s526 + $0x28] sm:$0xf] %v1593
        %1626 = vst [vmem:[%s526 + $0x2c] sm:$0xf] %v1594
        %1627 = vst [vmem:[%s526 + $0x30] sm:$0xf] %v1595
        %1628 = vst [vmem:[%s526 + $0x34] sm:$0xf] %v1596
        %1629 = vst [vmem:[%s526 + $0x38] sm:$0xf] %v1597
        %1630 = vst [vmem:[%s526 + $0x3c] sm:$0xf] %v1598
      $region72: #{forward.9} parent=55 // pred_fallthru
        _
      %s1631 = smul.u32 16, %s24
      %p1632 = scmp.lt.s32.totalorder %s1631, 15
      %s1633 = scalar_select %p1632, %s1631, 15
      %s1634 = smul.addr %s1633, 4
      %s1635 = scalar_lea.vmem %s9, %s1634
      // Predicated region
      $region73: #{forward.9} parent=55 // pred_check
        %p1636 = pneg %p288
      $region74: #{forward.9} parent=55 // pred_check_branch
        %1638 = sbr.rel (%p1636) target = $region76
      $region75: #{forward.9} parent=55 // pred_region
        %s1639 = smul.u32 16, %s24
      $region76: #{forward.9} parent=55 // pred_fallthru
        _
      // Predicated region
      $region77: #{forward.9} parent=55 // pred_check
        %p1640 = pneg %p288
      $region78: #{forward.9} parent=55 // pred_check_branch
        %1642 = sbr.rel (%p1640) target = $region80
      $region79: #{forward.9} parent=55 // pred_region
        %s1643 = smul.u32 16, %s24
        %p1644 = scmp.lt.s32.totalorder %s1643, 15
        %s1645 = scalar_select %p1644, %s1643, 15
        %s1646 = smul.addr %s1645, 4
        %s1647 = scalar_lea.vmem %s9, %s1646
      $region80: #{forward.9} parent=55 // pred_fallthru
        _
    $region56: #{forward.9} parent=5 // pred_fallthru
      _
    %p1648 = scmp.le.s32.totalorder 2, %s15
    // Predicated region
    $region81: #{forward.9} parent=5 // pred_check
      %p1649 = pneg %p1648
    $region82: #{forward.9} parent=5 // pred_check_branch
      %1651 = sbr.rel (%p1649) target = $region84
    $region83: #{forward.9} parent=5 // pred_region
      %s1652 = ssub.s32 %s15, 2
    $region84: #{forward.9} parent=5 // pred_fallthru
      _
  $region6: #{forward.9} parent=0 // loop_footer
    %s19 = sadd.s32 1, %s15
  $region7: #{forward.9} parent=0 // loop_footer_branch
    %14 = sbr.rel target = $region3
  $region8: #{forward.9} parent=0 // loop_exit
    _

</llo_original>
